<compile_context>
chip_gen: v7x
topology: tpu7x:2x2x1
jax: 0.10.0
libtpu: 0.0.40
codegen_flags: <defaults>
</compile_context>

<pallas_src>
import functools

import jax
import jax.numpy as jnp
from jax.experimental import pallas as pl
from jax.experimental.pallas import tpu as pltpu

EXPANSION = 4
BN_EPS = 1e-5
LANE = 128


def _round_up(x, m):
    return (x + m - 1) // m * m


# ------------------------------ Pallas kernel ------------------------------ #

def _bottleneck_kernel(x_ref, w1_ref, b1_ref, w2_ref, b2_ref, w3_ref, b3_ref,
                       *rest, H, W, stride, has_sc_conv):
    """Fused BottleNeck forward for one image (all channels padded to 128)."""
    if has_sc_conv:
        wsc_ref, bsc_ref, o_ref, h1p_ref = rest
    else:
        o_ref, h1p_ref = rest

    Ho = (H - 1) // stride + 1
    Wo = (W - 1) // stride + 1
    cin = x_ref.shape[-1]
    cmid = b2_ref.shape[-1]
    cexp = w3_ref.shape[-1]
    Wp = h1p_ref.shape[1]                 # padded slab width (multiple of 8)
    cdt = h1p_ref.dtype

    x = x_ref[0]                          # (H, W, cin)  bf16
    x2d = x.reshape(H * W, cin)

    # ---- shortcut branch first: ends x's live range before conv2 temps ----
    if has_sc_conv:
        if stride == 1:
            xs2d = x2d
        else:
            # TODO(synk): 2-axis strided gather; restructure if stride-2
            #             blocks ever dominate (they are the small layers).
            xs2d = x[::stride, ::stride, :].reshape(Ho * Wo, cin)
        sc = jnp.dot(xs2d, wsc_ref[...],
                     preferred_element_type=jnp.float32) + bsc_ref[...]
    else:
        sc = x2d.astype(jnp.float32)      # identity (stride==1, cin==cexp)

    # ---- conv1 (1x1) + folded BN + ReLU ----
    h1 = jnp.dot(x2d, w1_ref[...], preferred_element_type=jnp.float32)
    h1 = jnp.maximum(h1 + b1_ref[...], 0.0)            # (H*W, cmid)  f32

    # ---- stage h1 into the zero-padded scratch slab ----
    # Only the 1-element border (2 rows + 2 cols) is zeroed each step; the
    # interior is fully overwritten, so no full-slab zero fill.  (Border is
    # re-zeroed every step instead of once at program_id==0 so the kernel is
    # correct when the "parallel" batch axis is split across TensorCores.)
    zrow = jnp.zeros((Wp, cmid), cdt)
    h1p_ref[0] = zrow
    h1p_ref[H + 1] = zrow
    zcol = jnp.zeros((H, 1, cmid), cdt)
    h1p_ref[1:H + 1, 0:1, :] = zcol
    h1p_ref[1:H + 1, W + 1:W + 2, :] = zcol
    h1p_ref[1:H + 1, 1:W + 1, :] = h1.reshape(H, W, cmid).astype(cdt)

    # ---- conv2 (3x3, stride, pad=1) + folded BN + ReLU ----
    b2 = b2_ref[...]
    slab = h1p_ref[...]                                 # (H+2, Wp, cmid)
    if stride == 1:
        # Build the three kx-shifted slabs ONCE and lane-concatenate them so
        # each ky needs a single matmul with K = 3*cmid (3 matmuls / image
        # instead of 9; fills the 256-deep MXU on v6e/v7x).
        big = jnp.concatenate([slab[:, 0:W, :],         # input col ox-1
                               slab[:, 1:W + 1, :],     # input col ox
                               slab[:, 2:W + 2, :]],    # input col ox+1
                              axis=-1)                  # (H+2, W, 3*cmid)
        acc = None
        for ky in range(3):
            lhs = big[ky:ky + H].reshape(H * W, 3 * cmid)
            d = jnp.dot(lhs, w2_ref[ky], preferred_element_type=jnp.float32)
            acc = d + b2 if acc is None else acc + d    # b2 folded into init
    else:
        # Fallback for strided blocks: 9 shifted/strided taps.
        # TODO(synk): K-group the kx taps here too once strided-slice layout
        #             cost on the sublane axis matters for these small layers.
        acc = None
        for ky in range(3):
            for kx in range(3):
                tap = slab[ky:ky + (Ho - 1) * stride + 1:stride,
                           kx:kx + (Wo - 1) * stride + 1:stride, :]
                d = jnp.dot(tap.reshape(Ho * Wo, cmid),
                            w2_ref[ky, kx * cmid:(kx + 1) * cmid, :],
                            preferred_element_type=jnp.float32)
                acc = d + b2 if acc is None else acc + d
    h2 = jnp.maximum(acc, 0.0).astype(w3_ref.dtype)     # (Ho*Wo, cmid)  bf16

    # ---- conv3 (1x1) + folded BN, residual add, final ReLU ----
    y = jnp.dot(h2, w3_ref[...], preferred_element_type=jnp.float32) + b3_ref[...]
    out = jnp.maximum(y + sc, 0.0)
    o_ref[0] = out.reshape(Ho, Wo, cexp).astype(o_ref.dtype)


# -------------------------- parameter preparation -------------------------- #

def make_params(key, in_channels, out_channels, stride, dtype=jnp.float32):
    """Deterministic synthetic parameters mirroring the PyTorch module (eval BN)."""
    c_exp = out_channels * EXPANSION
    ks = jax.random.split(key, 8)

    def conv_w(k, kh, kw, cin, cout):
        return jax.random.normal(k, (kh, kw, cin, cout), dtype) * 0.1

    def bn(k, c):
        kg, kb, km, kv = jax.random.split(k, 4)
        return {"gamma": 0.5 + jax.random.uniform(kg, (c,), dtype),
                "beta": 0.1 * jax.random.normal(kb, (c,), dtype),
                "mean": 0.1 * jax.random.normal(km, (c,), dtype),
                "var": 0.5 + jax.random.uniform(kv, (c,), dtype)}

    p = {"w1": conv_w(ks[0], 1, 1, in_channels, out_channels),
         "bn1": bn(ks[1], out_channels),
         "w2": conv_w(ks[2], 3, 3, out_channels, out_channels),
         "bn2": bn(ks[3], out_channels),
         "w3": conv_w(ks[4], 1, 1, out_channels, c_exp),
         "bn3": bn(ks[5], c_exp)}
    if stride != 1 or in_channels != c_exp:
        p["wsc"] = conv_w(ks[6], 1, 1, in_channels, c_exp)
        p["bnsc"] = bn(ks[7], c_exp)
    return p


def _fold_bn(gamma, beta, mean, var):
    scale = gamma / jnp.sqrt(var + BN_EPS)
    bias = beta - mean * scale
    return scale, bias


def pack_params(params, compute_dtype=jnp.bfloat16):
    """Fold eval-mode BN into the conv weights, pad channels to the 128-lane
    width, and cast weights to the MXU compute dtype (biases stay fp32).
    conv2 weights are packed as (3, 3*cmid_p, cmid_p): kx taps stacked along
    the K axis so the kernel can use K-grouped matmuls."""
    def fold(w4, bn_p, cin_p, cout_p):
        scale, bias = _fold_bn(bn_p["gamma"], bn_p["beta"], bn_p["mean"], bn_p["var"])
        w = w4 * scale                                   # fold over out-channels
        kh, kw, cin, cout = w.shape
        w = jnp.pad(w, ((0, 0), (0, 0), (0, cin_p - cin), (0, cout_p - cout)))
        b = jnp.pad(bias, (0, cout_p - cout)).reshape(1, cout_p).astype(jnp.float32)
        return w.astype(compute_dtype), b

    cin = params["w1"].shape[2]
    cmid = params["w1"].shape[3]
    cexp = params["w3"].shape[3]
    cin_p, cmid_p, cexp_p = (_round_up(c, LANE) for c in (cin, cmid, cexp))

    kp = {}
    w1, kp["b1"] = fold(params["w1"], params["bn1"], cin_p, cmid_p)
    kp["w1"] = w1.reshape(cin_p, cmid_p)
    w2, kp["b2"] = fold(params["w2"], params["bn2"], cmid_p, cmid_p)
    kp["w2"] = w2.reshape(3, 3 * cmid_p, cmid_p)          # (ky, kx*cmid, cmid)
    w3, kp["b3"] = fold(params["w3"], params["bn3"], cmid_p, cexp_p)
    kp["w3"] = w3.reshape(cmid_p, cexp_p)
    if "wsc" in params:
        wsc, kp["bsc"] = fold(params["wsc"], params["bnsc"], cin_p, cexp_p)
        kp["wsc"] = wsc.reshape(cin_p, cexp_p)
    return kp


# ------------------------ footprint / cost estimation ---------------------- #

def _vmem_and_cost(n, h, w, ho, wo, wp, cin_p, cmid_p, cexp_p, has_sc, itemsize):
    """Per-step VMEM footprint (with headroom) and an HBM/FLOP cost estimate."""
    blk_x = h * w * cin_p * itemsize
    blk_out = ho * wo * cexp_p * itemsize
    wts = (cin_p * cmid_p + 3 * 3 * cmid_p * cmid_p + cmid_p * cexp_p
           + (cin_p * cexp_p if has_sc else 0)) * itemsize
    biases = (2 * cmid_p + 2 * cexp_p) * 4
    slab = (h + 2) * wp * cmid_p * itemsize
    # fp32/bf16 temporaries: h1, lane-concatenated conv2 LHS, acc, y, sc, out.
    tmps = (h * w * cmid_p * 4
            + (h + 2) * wo * 3 * cmid_p * itemsize
            + ho * wo * (cmid_p + 3 * cexp_p) * 4)
    est = 2 * (blk_x + blk_out) + 2 * (wts + biases) + slab + tmps
    vmem_limit = int(min(max(2 * est, 32 * 2**20), 64 * 2**20))

    flops = 2 * n * (h * w * cin_p * cmid_p
                     + ho * wo * 9 * cmid_p * cmid_p
                     + ho * wo * cmid_p * cexp_p
                     + (ho * wo * cin_p * cexp_p if has_sc else 0))
    bytes_accessed = n * (blk_x + blk_out) + wts + biases
    cost = pl.CostEstimate(flops=flops, transcendentals=0,
                           bytes_accessed=bytes_accessed)
    return vmem_limit, cost


# --------------------------------- wrappers -------------------------------- #

def bottleneck_forward_nhwc(x_nhwc, kp, *, stride, has_sc_conv,
                            compute_dtype=jnp.bfloat16):
    """Fused BottleNeck on channel-padded NHWC bf16 activations (bf16 out).

    Keeping activations in this layout across consecutive blocks avoids the
    NCHW<->NHWC transposes and channel pad/slice round-trips through HBM.
    """
    n, h, w, cin_p = x_nhwc.shape
    cmid_p = kp["w1"].shape[1]
    cexp_p = kp["w3"].shape[1]
    ho = (h - 1) // stride + 1
    wo = (w - 1) // stride + 1
    wp = _round_up(w + 2, 8)              # slab width, multiple of 8 sublanes

    kernel = functools.partial(_bottleneck_kernel, H=h, W=w, stride=stride,
                               has_sc_conv=has_sc_conv)

    in_specs = [
        pl.BlockSpec((1, h, w, cin_p), lambda i: (i, 0, 0, 0)),
        pl.BlockSpec((cin_p, cmid_p), lambda i: (0, 0)),
        pl.BlockSpec((1, cmid_p), lambda i: (0, 0)),
        pl.BlockSpec((3, 3 * cmid_p, cmid_p), lambda i: (0, 0, 0)),
        pl.BlockSpec((1, cmid_p), lambda i: (0, 0)),
        pl.BlockSpec((cmid_p, cexp_p), lambda i: (0, 0)),
        pl.BlockSpec((1, cexp_p), lambda i: (0, 0)),
    ]
    args = [x_nhwc, kp["w1"], kp["b1"], kp["w2"], kp["b2"], kp["w3"], kp["b3"]]
    if has_sc_conv:
        in_specs += [pl.BlockSpec((cin_p, cexp_p), lambda i: (0, 0)),
                     pl.BlockSpec((1, cexp_p), lambda i: (0, 0))]
        args += [kp["wsc"], kp["bsc"]]

    itemsize = jnp.dtype(compute_dtype).itemsize
    vmem_limit, cost = _vmem_and_cost(n, h, w, ho, wo, wp, cin_p, cmid_p,
                                      cexp_p, has_sc_conv, itemsize)

    out = pl.pallas_call(
        kernel,
        out_shape=jax.ShapeDtypeStruct((n, ho, wo, cexp_p), compute_dtype),
        grid_spec=pltpu.PrefetchScalarGridSpec(
            num_scalar_prefetch=0,
            grid=(n,),
            in_specs=in_specs,
            out_specs=pl.BlockSpec((1, ho, wo, cexp_p), lambda i: (i, 0, 0, 0)),
            scratch_shapes=[pltpu.VMEM((h + 2, wp, cmid_p), compute_dtype)],
        ),
        compiler_params=pltpu.CompilerParams(
            dimension_semantics=("parallel",),
            vmem_limit_bytes=vmem_limit),
        cost_estimate=cost,
    )(*args)
    return out


def bottleneck_forward(x_nchw, params, *, stride, compute_dtype=jnp.bfloat16):
    """PyTorch-interface wrapper: NCHW fp32 in -> NCHW fp32 out.

    `stride` is a static Python int (closed over / partial-ed before jit).
    """
    n, cin, h, w = x_nchw.shape
    c_exp = params["w3"].shape[3]
    kp = pack_params(params, compute_dtype)
    cin_p = kp["w1"].shape[0]
    has_sc_conv = "wsc" in kp

    x = jnp.transpose(x_nchw, (0, 2, 3, 1))                          # NHWC
    x = jnp.pad(x, ((0, 0), (0, 0), (0, 0), (0, cin_p - cin))).astype(compute_dtype)

    out = bottleneck_forward_nhwc(x, kp, stride=stride,
                                  has_sc_conv=has_sc_conv,
                                  compute_dtype=compute_dtype)
    out = out[..., :c_exp].astype(jnp.float32)                       # drop padding
    return jnp.transpose(out, (0, 3, 1, 2))                          # back to NCHW


# -------------------------- pure-JAX fp32 reference ------------------------ #

def reference_forward(x_nchw, params, *, stride):
    dn = ("NHWC", "HWIO", "NHWC")
    x = jnp.transpose(x_nchw, (0, 2, 3, 1))

    def conv(v, w4, s, pad):
        return jax.lax.conv_general_dilated(v, w4, (s, s), pad, dimension_numbers=dn)

    def bn(v, p):
        scale = p["gamma"] / jnp.sqrt(p["var"] + BN_EPS)
        return v * scale + (p["beta"] - p["mean"] * scale)

    h = jnp.maximum(bn(conv(x, params["w1"], 1, "VALID"), params["bn1"]), 0.0)
    h = jnp.maximum(bn(conv(h, params["w2"], stride, [(1, 1), (1, 1)]), params["bn2"]), 0.0)
    h = bn(conv(h, params["w3"], 1, "VALID"), params["bn3"])
    if "wsc" in params:
        sc = bn(conv(x, params["wsc"], stride, "VALID"), params["bnsc"])
    else:
        sc = x
    return jnp.transpose(jnp.maximum(h + sc, 0.0), (0, 3, 1, 2))


if __name__ == "__main__":
    key = jax.random.PRNGKey(0)
    k_x1, k_p1, k_x2, k_p2 = jax.random.split(key, 4)

    # Case 1: projection shortcut (in_channels != out_channels * expansion).
    in_c, out_c, stride = 4, 4, 1
    x1 = jax.random.normal(k_x1, (2, in_c, 16, 16), jnp.float32)     # NCHW
    params1 = make_params(k_p1, in_c, out_c, stride)
    fwd1 = jax.jit(functools.partial(bottleneck_forward, stride=stride))
    out1 = jax.block_until_ready(fwd1(x1, params1))
    ref1 = reference_forward(x1, params1, stride=stride)
    assert out1.shape == (2, out_c * EXPANSION, 16, 16), out1.shape
    err1 = float(jnp.max(jnp.abs(out1 - ref1)))
    # Tolerance covers bf16 activations/weights/output (fp32 accumulation)
    # versus the pure-fp32 reference.
    assert jnp.allclose(out1, ref1, rtol=4e-2, atol=4e-2), err1

    # Case 2: identity shortcut (in_channels == out_channels * expansion).
    in_c2, out_c2 = 16, 4
    x2 = jax.random.normal(k_x2, (2, in_c2, 16, 16), jnp.float32)
    params2 = make_params(k_p2, in_c2, out_c2, 1)
    fwd2 = jax.jit(functools.partial(bottleneck_forward, stride=1))
    out2 = jax.block_until_ready(fwd2(x2, params2))
    ref2 = reference_forward(x2, params2, stride=1)
    assert out2.shape == (2, out_c2 * EXPANSION, 16, 16), out2.shape
    err2 = float(jnp.max(jnp.abs(out2 - ref2)))
    assert jnp.allclose(out2, ref2, rtol=4e-2, atol=4e-2), err2

    print("KERNEL_OK")
</pallas_src>

<mosaic_0001>
module attributes {stable_mosaic.version = 11 : i64} {
  func.func @_bottleneck_kernel(%arg0: i32, %arg1: memref<1x16x16x128xbf16, #tpu.memory_space<vmem>>, %arg2: memref<128x128xbf16, #tpu.memory_space<vmem>>, %arg3: memref<1x128xf32, #tpu.memory_space<vmem>>, %arg4: memref<3x384x128xbf16, #tpu.memory_space<vmem>>, %arg5: memref<1x128xf32, #tpu.memory_space<vmem>>, %arg6: memref<128x128xbf16, #tpu.memory_space<vmem>>, %arg7: memref<1x128xf32, #tpu.memory_space<vmem>>, %arg8: memref<128x128xbf16, #tpu.memory_space<vmem>>, %arg9: memref<1x128xf32, #tpu.memory_space<vmem>>, %arg10: memref<1x16x16x128xbf16, #tpu.memory_space<vmem>>, %arg11: memref<18x24x128xbf16, #tpu.memory_space<vmem>>) attributes {dimension_semantics = [#tpu.dimension_semantics<parallel>], iteration_bounds = array<i64: 2>, scalar_prefetch = 0 : i64, scratch_operands = 1 : i64, tpu.core_type = #tpu.core_type<tc>, window_params = [{transform_indices = @transform_0, window_bounds = array<i64: 1, 16, 16, 128>}, {pipeline_mode = #tpu.pipeline_mode<synchronous>, transform_indices = @transform_1, window_bounds = array<i64: 128, 128>}, {pipeline_mode = #tpu.pipeline_mode<synchronous>, transform_indices = @transform_2, window_bounds = array<i64: 1, 128>}, {pipeline_mode = #tpu.pipeline_mode<synchronous>, transform_indices = @transform_3, window_bounds = array<i64: 3, 384, 128>}, {pipeline_mode = #tpu.pipeline_mode<synchronous>, transform_indices = @transform_4, window_bounds = array<i64: 1, 128>}, {pipeline_mode = #tpu.pipeline_mode<synchronous>, transform_indices = @transform_5, window_bounds = array<i64: 128, 128>}, {pipeline_mode = #tpu.pipeline_mode<synchronous>, transform_indices = @transform_6, window_bounds = array<i64: 1, 128>}, {pipeline_mode = #tpu.pipeline_mode<synchronous>, transform_indices = @transform_7, window_bounds = array<i64: 128, 128>}, {pipeline_mode = #tpu.pipeline_mode<synchronous>, transform_indices = @transform_8, window_bounds = array<i64: 1, 128>}, {transform_indices = @transform_9, window_bounds = array<i64: 1, 16, 16, 128>}]} {
    %c0 = arith.constant 0 : index
    %c0_0 = arith.constant 0 : index
    %c0_1 = arith.constant 0 : index
    %c0_2 = arith.constant 0 : index
    %0 = vector.load %arg1[%c0, %c0_0, %c0_1, %c0_2] : memref<1x16x16x128xbf16, #tpu.memory_space<vmem>>, vector<1x16x16x128xbf16>
    %1 = vector.shape_cast %0 : vector<1x16x16x128xbf16> to vector<16x16x128xbf16>
    %2 = vector.shape_cast %1 : vector<16x16x128xbf16> to vector<256x128xbf16>
    %c0_3 = arith.constant 0 : index
    %c0_4 = arith.constant 0 : index
    %3 = vector.load %arg8[%c0_3, %c0_4] : memref<128x128xbf16, #tpu.memory_space<vmem>>, vector<128x128xbf16>
    %cst = arith.constant dense<0.000000e+00> : vector<256x128xf32>
    %4 = tpu.matmul %2, %3, %cst {dimension_numbers = #tpu.dot_dimension_numbers<[1], [0], [0], [1], [0, 0, 1, 1], [], []>} : vector<256x128xbf16>, vector<128x128xbf16>, vector<256x128xf32> -> vector<256x128xf32>
    %c0_5 = arith.constant 0 : index
    %c0_6 = arith.constant 0 : index
    %5 = vector.load %arg9[%c0_5, %c0_6] : memref<1x128xf32, #tpu.memory_space<vmem>>, vector<1x128xf32>
    %6 = vector.broadcast %5 : vector<1x128xf32> to vector<256x128xf32>
    %7 = arith.addf %4, %6 : vector<256x128xf32>
    %c0_7 = arith.constant 0 : index
    %c0_8 = arith.constant 0 : index
    %8 = vector.load %arg2[%c0_7, %c0_8] : memref<128x128xbf16, #tpu.memory_space<vmem>>, vector<128x128xbf16>
    %cst_9 = arith.constant dense<0.000000e+00> : vector<256x128xf32>
    %9 = tpu.matmul %2, %8, %cst_9 {dimension_numbers = #tpu.dot_dimension_numbers<[1], [0], [0], [1], [0, 0, 1, 1], [], []>} : vector<256x128xbf16>, vector<128x128xbf16>, vector<256x128xf32> -> vector<256x128xf32>
    %c0_10 = arith.constant 0 : index
    %c0_11 = arith.constant 0 : index
    %10 = vector.load %arg3[%c0_10, %c0_11] : memref<1x128xf32, #tpu.memory_space<vmem>>, vector<1x128xf32>
    %11 = vector.broadcast %10 : vector<1x128xf32> to vector<256x128xf32>
    %12 = arith.addf %9, %11 : vector<256x128xf32>
    %cst_12 = arith.constant 0.000000e+00 : f32
    %13 = vector.broadcast %cst_12 : f32 to vector<256x128xf32>
    %14 = arith.maximumf %12, %13 : vector<256x128xf32>
    %cst_13 = arith.constant 0.000000e+00 : bf16
    %15 = vector.broadcast %cst_13 : bf16 to vector<24x128xbf16>
    %c0_14 = arith.constant 0 : index
    %c0_15 = arith.constant 0 : index
    %c0_16 = arith.constant 0 : index
    %16 = vector.load %arg11[%c0_14, %c0_15, %c0_16] : memref<18x24x128xbf16, #tpu.memory_space<vmem>>, vector<1x24x128xbf16>
    %17 = vector.shape_cast %16 : vector<1x24x128xbf16> to vector<24x128xbf16>
    %18 = vector.shape_cast %15 : vector<24x128xbf16> to vector<1x24x128xbf16>
    tpu.vector_store %arg11[%c0_14, %c0_15, %c0_16], %18 {strides = array<i32>} : memref<18x24x128xbf16, #tpu.memory_space<vmem>>, vector<1x24x128xbf16>,
    %c17 = arith.constant 17 : index
    %c0_17 = arith.constant 0 : index
    %c0_18 = arith.constant 0 : index
    %19 = vector.load %arg11[%c17, %c0_17, %c0_18] : memref<18x24x128xbf16, #tpu.memory_space<vmem>>, vector<1x24x128xbf16>
    %20 = vector.shape_cast %19 : vector<1x24x128xbf16> to vector<24x128xbf16>
    %21 = vector.shape_cast %15 : vector<24x128xbf16> to vector<1x24x128xbf16>
    tpu.vector_store %arg11[%c17, %c0_17, %c0_18], %21 {strides = array<i32>} : memref<18x24x128xbf16, #tpu.memory_space<vmem>>, vector<1x24x128xbf16>,
    %cst_19 = arith.constant 0.000000e+00 : bf16
    %22 = vector.broadcast %cst_19 : bf16 to vector<16x1x128xbf16>
    %c1 = arith.constant 1 : index
    %c0_20 = arith.constant 0 : index
    %c0_21 = arith.constant 0 : index
    %23 = vector.load %arg11[%c1, %c0_20, %c0_21] : memref<18x24x128xbf16, #tpu.memory_space<vmem>>, vector<16x1x128xbf16>
    tpu.vector_store %arg11[%c1, %c0_20, %c0_21], %22 {strides = array<i32>} : memref<18x24x128xbf16, #tpu.memory_space<vmem>>, vector<16x1x128xbf16>,
    %c1_22 = arith.constant 1 : index
    %c17_23 = arith.constant 17 : index
    %c0_24 = arith.constant 0 : index
    %24 = vector.load %arg11[%c1_22, %c17_23, %c0_24] : memref<18x24x128xbf16, #tpu.memory_space<vmem>>, vector<16x1x128xbf16>
    tpu.vector_store %arg11[%c1_22, %c17_23, %c0_24], %22 {strides = array<i32>} : memref<18x24x128xbf16, #tpu.memory_space<vmem>>, vector<16x1x128xbf16>,
    %25 = vector.shape_cast %14 : vector<256x128xf32> to vector<16x16x128xf32>
    %26 = arith.truncf %25 : vector<16x16x128xf32> to vector<16x16x128xbf16>
    %c1_25 = arith.constant 1 : index
    %c1_26 = arith.constant 1 : index
    %c0_27 = arith.constant 0 : index
    %27 = vector.load %arg11[%c1_25, %c1_26, %c0_27] : memref<18x24x128xbf16, #tpu.memory_space<vmem>>, vector<16x16x128xbf16>
    tpu.vector_store %arg11[%c1_25, %c1_26, %c0_27], %26 {strides = array<i32>} : memref<18x24x128xbf16, #tpu.memory_space<vmem>>, vector<16x16x128xbf16>,
    %c0_28 = arith.constant 0 : index
    %c0_29 = arith.constant 0 : index
    %28 = vector.load %arg5[%c0_28, %c0_29] : memref<1x128xf32, #tpu.memory_space<vmem>>, vector<1x128xf32>
    %c0_30 = arith.constant 0 : index
    %c0_31 = arith.constant 0 : index
    %c0_32 = arith.constant 0 : index
    %29 = vector.load %arg11[%c0_30, %c0_31, %c0_32] : memref<18x24x128xbf16, #tpu.memory_space<vmem>>, vector<18x24x128xbf16>
    %30 = vector.extract_strided_slice %29 {offsets = [0, 0, 0], sizes = [18, 16, 128], strides = [1, 1, 1]} : vector<18x24x128xbf16> to vector<18x16x128xbf16>
    %31 = vector.extract_strided_slice %29 {offsets = [0, 1, 0], sizes = [18, 16, 128], strides = [1, 1, 1]} : vector<18x24x128xbf16> to vector<18x16x128xbf16>
    %32 = vector.extract_strided_slice %29 {offsets = [0, 2, 0], sizes = [18, 16, 128], strides = [1, 1, 1]} : vector<18x24x128xbf16> to vector<18x16x128xbf16>
    %33 = tpu.concatenate %30, %31, %32 in 2 : vector<18x16x128xbf16>, vector<18x16x128xbf16>, vector<18x16x128xbf16> -> vector<18x16x384xbf16>
    %34 = vector.extract_strided_slice %33 {offsets = [0, 0, 0], sizes = [16, 16, 384], strides = [1, 1, 1]} : vector<18x16x384xbf16> to vector<16x16x384xbf16>
    %35 = vector.shape_cast %34 : vector<16x16x384xbf16> to vector<256x384xbf16>
    %c0_33 = arith.constant 0 : index
    %c0_34 = arith.constant 0 : index
    %c0_35 = arith.constant 0 : index
    %36 = vector.load %arg4[%c0_33, %c0_34, %c0_35] : memref<3x384x128xbf16, #tpu.memory_space<vmem>>, vector<1x384x128xbf16>
    %37 = vector.shape_cast %36 : vector<1x384x128xbf16> to vector<384x128xbf16>
    %cst_36 = arith.constant dense<0.000000e+00> : vector<256x128xf32>
    %38 = tpu.matmul %35, %37, %cst_36 {dimension_numbers = #tpu.dot_dimension_numbers<[1], [0], [0], [1], [0, 0, 1, 1], [], []>} : vector<256x384xbf16>, vector<384x128xbf16>, vector<256x128xf32> -> vector<256x128xf32>
    %39 = vector.broadcast %28 : vector<1x128xf32> to vector<256x128xf32>
    %40 = arith.addf %38, %39 : vector<256x128xf32>
    %41 = vector.extract_strided_slice %33 {offsets = [1, 0, 0], sizes = [16, 16, 384], strides = [1, 1, 1]} : vector<18x16x384xbf16> to vector<16x16x384xbf16>
    %42 = vector.shape_cast %41 : vector<16x16x384xbf16> to vector<256x384xbf16>
    %c1_37 = arith.constant 1 : index
    %c0_38 = arith.constant 0 : index
    %c0_39 = arith.constant 0 : index
    %43 = vector.load %arg4[%c1_37, %c0_38, %c0_39] : memref<3x384x128xbf16, #tpu.memory_space<vmem>>, vector<1x384x128xbf16>
    %44 = vector.shape_cast %43 : vector<1x384x128xbf16> to vector<384x128xbf16>
    %cst_40 = arith.constant dense<0.000000e+00> : vector<256x128xf32>
    %45 = tpu.matmul %42, %44, %cst_40 {dimension_numbers = #tpu.dot_dimension_numbers<[1], [0], [0], [1], [0, 0, 1, 1], [], []>} : vector<256x384xbf16>, vector<384x128xbf16>, vector<256x128xf32> -> vector<256x128xf32>
    %46 = arith.addf %40, %45 : vector<256x128xf32>
    %47 = vector.extract_strided_slice %33 {offsets = [2, 0, 0], sizes = [16, 16, 384], strides = [1, 1, 1]} : vector<18x16x384xbf16> to vector<16x16x384xbf16>
    %48 = vector.shape_cast %47 : vector<16x16x384xbf16> to vector<256x384xbf16>
    %c2 = arith.constant 2 : index
    %c0_41 = arith.constant 0 : index
    %c0_42 = arith.constant 0 : index
    %49 = vector.load %arg4[%c2, %c0_41, %c0_42] : memref<3x384x128xbf16, #tpu.memory_space<vmem>>, vector<1x384x128xbf16>
    %50 = vector.shape_cast %49 : vector<1x384x128xbf16> to vector<384x128xbf16>
    %cst_43 = arith.constant dense<0.000000e+00> : vector<256x128xf32>
    %51 = tpu.matmul %48, %50, %cst_43 {dimension_numbers = #tpu.dot_dimension_numbers<[1], [0], [0], [1], [0, 0, 1, 1], [], []>} : vector<256x384xbf16>, vector<384x128xbf16>, vector<256x128xf32> -> vector<256x128xf32>
    %52 = arith.addf %46, %51 : vector<256x128xf32>
    %cst_44 = arith.constant 0.000000e+00 : f32
    %53 = vector.broadcast %cst_44 : f32 to vector<256x128xf32>
    %54 = arith.maximumf %52, %53 : vector<256x128xf32>
    %55 = arith.truncf %54 : vector<256x128xf32> to vector<256x128xbf16>
    %c0_45 = arith.constant 0 : index
    %c0_46 = arith.constant 0 : index
    %56 = vector.load %arg6[%c0_45, %c0_46] : memref<128x128xbf16, #tpu.memory_space<vmem>>, vector<128x128xbf16>
    %cst_47 = arith.constant dense<0.000000e+00> : vector<256x128xf32>
    %57 = tpu.matmul %55, %56, %cst_47 {dimension_numbers = #tpu.dot_dimension_numbers<[1], [0], [0], [1], [0, 0, 1, 1], [], []>} : vector<256x128xbf16>, vector<128x128xbf16>, vector<256x128xf32> -> vector<256x128xf32>
    %c0_48 = arith.constant 0 : index
    %c0_49 = arith.constant 0 : index
    %58 = vector.load %arg7[%c0_48, %c0_49] : memref<1x128xf32, #tpu.memory_space<vmem>>, vector<1x128xf32>
    %59 = vector.broadcast %58 : vector<1x128xf32> to vector<256x128xf32>
    %60 = arith.addf %57, %59 : vector<256x128xf32>
    %61 = arith.addf %60, %7 : vector<256x128xf32>
    %cst_50 = arith.constant 0.000000e+00 : f32
    %62 = vector.broadcast %cst_50 : f32 to vector<256x128xf32>
    %63 = arith.maximumf %61, %62 : vector<256x128xf32>
    %64 = vector.shape_cast %63 : vector<256x128xf32> to vector<16x16x128xf32>
    %65 = arith.truncf %64 : vector<16x16x128xf32> to vector<16x16x128xbf16>
    %c0_51 = arith.constant 0 : index
    %c0_52 = arith.constant 0 : index
    %c0_53 = arith.constant 0 : index
    %c0_54 = arith.constant 0 : index
    %66 = vector.load %arg10[%c0_51, %c0_52, %c0_53, %c0_54] : memref<1x16x16x128xbf16, #tpu.memory_space<vmem>>, vector<1x16x16x128xbf16>
    %67 = vector.shape_cast %66 : vector<1x16x16x128xbf16> to vector<16x16x128xbf16>
    %68 = vector.shape_cast %65 : vector<16x16x128xbf16> to vector<1x16x16x128xbf16>
    tpu.vector_store %arg10[%c0_51, %c0_52, %c0_53, %c0_54], %68 {strides = array<i32>} : memref<1x16x16x128xbf16, #tpu.memory_space<vmem>>, vector<1x16x16x128xbf16>,
    return
  }
  func.func @transform_0(%arg0: i32) -> (i32, i32, i32, i32) {
    %c0_i32 = arith.constant 0 : i32
    %c0_i32_0 = arith.constant 0 : i32
    %c0_i32_1 = arith.constant 0 : i32
    %c0_i32_2 = arith.constant 0 : i32
    return %arg0, %c0_i32, %c0_i32_0, %c0_i32_1 : i32, i32, i32, i32
  }
  func.func @transform_1(%arg0: i32) -> (i32, i32) {
    %c0_i32 = arith.constant 0 : i32
    %c0_i32_0 = arith.constant 0 : i32
    %c0_i32_1 = arith.constant 0 : i32
    return %c0_i32, %c0_i32_0 : i32, i32
  }
  func.func @transform_2(%arg0: i32) -> (i32, i32) {
    %c0_i32 = arith.constant 0 : i32
    %c0_i32_0 = arith.constant 0 : i32
    %c0_i32_1 = arith.constant 0 : i32
    return %c0_i32, %c0_i32_0 : i32, i32
  }
  func.func @transform_3(%arg0: i32) -> (i32, i32, i32) {
    %c0_i32 = arith.constant 0 : i32
    %c0_i32_0 = arith.constant 0 : i32
    %c0_i32_1 = arith.constant 0 : i32
    %c0_i32_2 = arith.constant 0 : i32
    return %c0_i32, %c0_i32_0, %c0_i32_1 : i32, i32, i32
  }
  func.func @transform_4(%arg0: i32) -> (i32, i32) {
    %c0_i32 = arith.constant 0 : i32
    %c0_i32_0 = arith.constant 0 : i32
    %c0_i32_1 = arith.constant 0 : i32
    return %c0_i32, %c0_i32_0 : i32, i32
  }
  func.func @transform_5(%arg0: i32) -> (i32, i32) {
    %c0_i32 = arith.constant 0 : i32
    %c0_i32_0 = arith.constant 0 : i32
    %c0_i32_1 = arith.constant 0 : i32
    return %c0_i32, %c0_i32_0 : i32, i32
  }
  func.func @transform_6(%arg0: i32) -> (i32, i32) {
    %c0_i32 = arith.constant 0 : i32
    %c0_i32_0 = arith.constant 0 : i32
    %c0_i32_1 = arith.constant 0 : i32
    return %c0_i32, %c0_i32_0 : i32, i32
  }
  func.func @transform_7(%arg0: i32) -> (i32, i32) {
    %c0_i32 = arith.constant 0 : i32
    %c0_i32_0 = arith.constant 0 : i32
    %c0_i32_1 = arith.constant 0 : i32
    return %c0_i32, %c0_i32_0 : i32, i32
  }
  func.func @transform_8(%arg0: i32) -> (i32, i32) {
    %c0_i32 = arith.constant 0 : i32
    %c0_i32_0 = arith.constant 0 : i32
    %c0_i32_1 = arith.constant 0 : i32
    return %c0_i32, %c0_i32_0 : i32, i32
  }
  func.func @transform_9(%arg0: i32) -> (i32, i32, i32, i32) {
    %c0_i32 = arith.constant 0 : i32
    %c0_i32_0 = arith.constant 0 : i32
    %c0_i32_1 = arith.constant 0 : i32
    %c0_i32_2 = arith.constant 0 : i32
    return %arg0, %c0_i32, %c0_i32_0, %c0_i32_1 : i32, i32, i32, i32
  }
}

</mosaic_0001>

<llo_original>
// kernel: bottleneck_forward.1
$region0: #{bottleneck_forward.1}
  #allocation0 [shape = 'u32[]', space=smem, size = 0x4, offset = 0x4, fixed_abs, tag = 'smem constant byte address 0x4 - core index']
  #allocation1 [shape = 'u32[144,128]{1,0:T(1,128)}', space=vmem, size = 0x12000, scoped, tag = 'internal scratch']
  #allocation2 [shape = 'bf16[18,24,128]{2,1,0:T(8,128)(2,1)}', space=vmem, size = 0x1b000, scoped, tag = 'scratch operand']
  %s0 = inlined_call_operand.vmem [shape: bf16[2,16,16,128], index: 0, kind: input, shape index: {}]
  %s1 = inlined_call_operand.vmem [shape: bf16[128,128], index: 1, kind: input, shape index: {}]
  %s2 = inlined_call_operand.vmem [shape: f32[1,128], index: 2, kind: input, shape index: {}]
  %s3 = inlined_call_operand.vmem [shape: bf16[3,384,128], index: 3, kind: input, shape index: {}]
  %s4 = inlined_call_operand.vmem [shape: f32[1,128], index: 4, kind: input, shape index: {}]
  %s5 = inlined_call_operand.vmem [shape: bf16[128,128], index: 5, kind: input, shape index: {}]
  %s6 = inlined_call_operand.vmem [shape: f32[1,128], index: 6, kind: input, shape index: {}]
  %s7 = inlined_call_operand.vmem [shape: bf16[128,128], index: 7, kind: input, shape index: {}]
  %s8 = inlined_call_operand.vmem [shape: f32[1,128], index: 8, kind: input, shape index: {}]
  %s9 = inlined_call_operand.vmem [shape: bf16[2,16,16,128], index: 9, kind: output, shape index: {}]
  %s10 = sld [smem:[#allocation0]]
  $region69: #{bottleneck_forward.1} parent=0
    _
  %s12 = ssub.s32 1, %s10
  %s13 = scalar_select 0, %s12, %s10
  loop: start=0, step=1, limit=4
  $region2: #{bottleneck_forward.1} parent=0 // loop_pre_header
    _
  $region3: #{bottleneck_forward.1} parent=0 // loop_header
    %s15 = sphi 0, %s19
    %p16 = scmp.ge.s32.totalorder %s15, 4
    %s25 = sphi 0, %s27
    %s28 = sphi 0, %s25
    %s29 = sphi 0, %s28
    %s45 = sphi 0, %s29
    %s49 = sphi 0, %s49
    %s51 = sphi 0, %s49
    %s52 = sphi 0, %s51
    %s66 = sphi 0, %s52
    %s70 = sphi 0, %s70
    %s72 = sphi 0, %s70
    %s73 = sphi 0, %s72
    %s87 = sphi 0, %s73
    %s91 = sphi 0, %s91
    %s93 = sphi 0, %s91
    %s94 = sphi 0, %s93
    %s108 = sphi 0, %s94
    %s112 = sphi 0, %s112
    %s114 = sphi 0, %s112
    %s115 = sphi 0, %s114
    %s129 = sphi 0, %s115
    %s133 = sphi 0, %s133
    %s135 = sphi 0, %s133
    %s136 = sphi 0, %s135
    %s150 = sphi 0, %s136
    %s154 = sphi 0, %s154
    %s156 = sphi 0, %s154
    %s157 = sphi 0, %s156
    %s171 = sphi 0, %s157
    %s175 = sphi 0, %s175
    %s177 = sphi 0, %s175
    %s178 = sphi 0, %s177
    %s192 = sphi 0, %s178
    %s196 = sphi 0, %s196
    %s198 = sphi 0, %s196
    %s199 = sphi 0, %s198
    %s213 = sphi 0, %s199
    %s219 = sphi 0, %s221
    %s222 = sphi 0, %s219
    %s223 = sphi 0, %s222
    %s239 = sphi 0, %s223
  $region4: #{bottleneck_forward.1} parent=0 // loop_header_branch
    %18 = sbr.rel (%p16) target = $region8
  $region5: #{bottleneck_forward.1} parent=0 // loop_body
    %s20 = ssub.s32 %s15, 1
    %s21 = ssub.s32 %s15, 2
    %s22 = sadd.s32 %s15, 1
    %s23 = ssub.s32 %s15, %s22
    %p24 = scmp.eq.s32.totalorder %s23, 0
    %s26 = sadd.s32 %s25, 1
    %s27 = scalar_select %p24, %s25, %s26
    %p30 = pneg %p24
    %p31 = scmp.eq.s32.totalorder %s15, 1
    %p32 = por %p30, %p31
    %p33 = scmp.ne.s32.totalorder %s25, %s28
    %p34 = scmp.eq.s32.totalorder %s15, 0
    %p35 = por %p33, %p34
    %p36 = scmp.ne.s32.totalorder %s25, %s28
    %p37 = scmp.eq.s32.totalorder %s20, 1
    %p38 = por %p36, %p37
    %p39 = scmp.ne.s32.totalorder %s28, %s29
    %p40 = scmp.eq.s32.totalorder %s20, 0
    %p41 = por %p39, %p40
    %p42 = scmp.ne.s32.totalorder %s28, %s29
    %p43 = scmp.eq.s32.totalorder %s21, 1
    %p44 = por %p42, %p43
    %p46 = scmp.ne.s32.totalorder %s29, %s45
    %p47 = scmp.eq.s32.totalorder %s21, 0
    %p48 = por %p46, %p47
    %s50 = sadd.s32 %s49, 1
    %p53 = scmp.eq.s32.totalorder %s15, 1
    %p54 = scmp.ne.s32.totalorder %s49, %s51
    %p55 = scmp.eq.s32.totalorder %s15, 0
    %p56 = por %p54, %p55
    %p57 = scmp.ne.s32.totalorder %s49, %s51
    %p58 = scmp.eq.s32.totalorder %s20, 1
    %p59 = por %p57, %p58
    %p60 = scmp.ne.s32.totalorder %s51, %s52
    %p61 = scmp.eq.s32.totalorder %s20, 0
    %p62 = por %p60, %p61
    %p63 = scmp.ne.s32.totalorder %s51, %s52
    %p64 = scmp.eq.s32.totalorder %s21, 1
    %p65 = por %p63, %p64
    %p67 = scmp.ne.s32.totalorder %s52, %s66
    %p68 = scmp.eq.s32.totalorder %s21, 0
    %p69 = por %p67, %p68
    %s71 = sadd.s32 %s70, 1
    %p74 = scmp.eq.s32.totalorder %s15, 1
    %p75 = scmp.ne.s32.totalorder %s70, %s72
    %p76 = scmp.eq.s32.totalorder %s15, 0
    %p77 = por %p75, %p76
    %p78 = scmp.ne.s32.totalorder %s70, %s72
    %p79 = scmp.eq.s32.totalorder %s20, 1
    %p80 = por %p78, %p79
    %p81 = scmp.ne.s32.totalorder %s72, %s73
    %p82 = scmp.eq.s32.totalorder %s20, 0
    %p83 = por %p81, %p82
    %p84 = scmp.ne.s32.totalorder %s72, %s73
    %p85 = scmp.eq.s32.totalorder %s21, 1
    %p86 = por %p84, %p85
    %p88 = scmp.ne.s32.totalorder %s73, %s87
    %p89 = scmp.eq.s32.totalorder %s21, 0
    %p90 = por %p88, %p89
    %s92 = sadd.s32 %s91, 1
    %p95 = scmp.eq.s32.totalorder %s15, 1
    %p96 = scmp.ne.s32.totalorder %s91, %s93
    %p97 = scmp.eq.s32.totalorder %s15, 0
    %p98 = por %p96, %p97
    %p99 = scmp.ne.s32.totalorder %s91, %s93
    %p100 = scmp.eq.s32.totalorder %s20, 1
    %p101 = por %p99, %p100
    %p102 = scmp.ne.s32.totalorder %s93, %s94
    %p103 = scmp.eq.s32.totalorder %s20, 0
    %p104 = por %p102, %p103
    %p105 = scmp.ne.s32.totalorder %s93, %s94
    %p106 = scmp.eq.s32.totalorder %s21, 1
    %p107 = por %p105, %p106
    %p109 = scmp.ne.s32.totalorder %s94, %s108
    %p110 = scmp.eq.s32.totalorder %s21, 0
    %p111 = por %p109, %p110
    %s113 = sadd.s32 %s112, 1
    %p116 = scmp.eq.s32.totalorder %s15, 1
    %p117 = scmp.ne.s32.totalorder %s112, %s114
    %p118 = scmp.eq.s32.totalorder %s15, 0
    %p119 = por %p117, %p118
    %p120 = scmp.ne.s32.totalorder %s112, %s114
    %p121 = scmp.eq.s32.totalorder %s20, 1
    %p122 = por %p120, %p121
    %p123 = scmp.ne.s32.totalorder %s114, %s115
    %p124 = scmp.eq.s32.totalorder %s20, 0
    %p125 = por %p123, %p124
    %p126 = scmp.ne.s32.totalorder %s114, %s115
    %p127 = scmp.eq.s32.totalorder %s21, 1
    %p128 = por %p126, %p127
    %p130 = scmp.ne.s32.totalorder %s115, %s129
    %p131 = scmp.eq.s32.totalorder %s21, 0
    %p132 = por %p130, %p131
    %s134 = sadd.s32 %s133, 1
    %p137 = scmp.eq.s32.totalorder %s15, 1
    %p138 = scmp.ne.s32.totalorder %s133, %s135
    %p139 = scmp.eq.s32.totalorder %s15, 0
    %p140 = por %p138, %p139
    %p141 = scmp.ne.s32.totalorder %s133, %s135
    %p142 = scmp.eq.s32.totalorder %s20, 1
    %p143 = por %p141, %p142
    %p144 = scmp.ne.s32.totalorder %s135, %s136
    %p145 = scmp.eq.s32.totalorder %s20, 0
    %p146 = por %p144, %p145
    %p147 = scmp.ne.s32.totalorder %s135, %s136
    %p148 = scmp.eq.s32.totalorder %s21, 1
    %p149 = por %p147, %p148
    %p151 = scmp.ne.s32.totalorder %s136, %s150
    %p152 = scmp.eq.s32.totalorder %s21, 0
    %p153 = por %p151, %p152
    %s155 = sadd.s32 %s154, 1
    %p158 = scmp.eq.s32.totalorder %s15, 1
    %p159 = scmp.ne.s32.totalorder %s154, %s156
    %p160 = scmp.eq.s32.totalorder %s15, 0
    %p161 = por %p159, %p160
    %p162 = scmp.ne.s32.totalorder %s154, %s156
    %p163 = scmp.eq.s32.totalorder %s20, 1
    %p164 = por %p162, %p163
    %p165 = scmp.ne.s32.totalorder %s156, %s157
    %p166 = scmp.eq.s32.totalorder %s20, 0
    %p167 = por %p165, %p166
    %p168 = scmp.ne.s32.totalorder %s156, %s157
    %p169 = scmp.eq.s32.totalorder %s21, 1
    %p170 = por %p168, %p169
    %p172 = scmp.ne.s32.totalorder %s157, %s171
    %p173 = scmp.eq.s32.totalorder %s21, 0
    %p174 = por %p172, %p173
    %s176 = sadd.s32 %s175, 1
    %p179 = scmp.eq.s32.totalorder %s15, 1
    %p180 = scmp.ne.s32.totalorder %s175, %s177
    %p181 = scmp.eq.s32.totalorder %s15, 0
    %p182 = por %p180, %p181
    %p183 = scmp.ne.s32.totalorder %s175, %s177
    %p184 = scmp.eq.s32.totalorder %s20, 1
    %p185 = por %p183, %p184
    %p186 = scmp.ne.s32.totalorder %s177, %s178
    %p187 = scmp.eq.s32.totalorder %s20, 0
    %p188 = por %p186, %p187
    %p189 = scmp.ne.s32.totalorder %s177, %s178
    %p190 = scmp.eq.s32.totalorder %s21, 1
    %p191 = por %p189, %p190
    %p193 = scmp.ne.s32.totalorder %s178, %s192
    %p194 = scmp.eq.s32.totalorder %s21, 0
    %p195 = por %p193, %p194
    %s197 = sadd.s32 %s196, 1
    %p200 = scmp.eq.s32.totalorder %s15, 1
    %p201 = scmp.ne.s32.totalorder %s196, %s198
    %p202 = scmp.eq.s32.totalorder %s15, 0
    %p203 = por %p201, %p202
    %p204 = scmp.ne.s32.totalorder %s196, %s198
    %p205 = scmp.eq.s32.totalorder %s20, 1
    %p206 = por %p204, %p205
    %p207 = scmp.ne.s32.totalorder %s198, %s199
    %p208 = scmp.eq.s32.totalorder %s20, 0
    %p209 = por %p207, %p208
    %p210 = scmp.ne.s32.totalorder %s198, %s199
    %p211 = scmp.eq.s32.totalorder %s21, 1
    %p212 = por %p210, %p211
    %p214 = scmp.ne.s32.totalorder %s199, %s213
    %p215 = scmp.eq.s32.totalorder %s21, 0
    %p216 = por %p214, %p215
    %s217 = ssub.s32 %s15, %s22
    %p218 = scmp.eq.s32.totalorder %s217, 0
    %s220 = sadd.s32 %s219, 1
    %s221 = scalar_select %p218, %s219, %s220
    %p224 = pneg %p218
    %p225 = scmp.eq.s32.totalorder %s15, 1
    %p226 = por %p224, %p225
    %p227 = scmp.ne.s32.totalorder %s219, %s222
    %p228 = scmp.eq.s32.totalorder %s15, 0
    %p229 = por %p227, %p228
    %p230 = scmp.ne.s32.totalorder %s219, %s222
    %p231 = scmp.eq.s32.totalorder %s20, 1
    %p232 = por %p230, %p231
    %p233 = scmp.ne.s32.totalorder %s222, %s223
    %p234 = scmp.eq.s32.totalorder %s20, 0
    %p235 = por %p233, %p234
    %p236 = scmp.ne.s32.totalorder %s222, %s223
    %p237 = scmp.eq.s32.totalorder %s21, 1
    %p238 = por %p236, %p237
    %p240 = scmp.ne.s32.totalorder %s223, %s239
    %p241 = scmp.eq.s32.totalorder %s21, 0
    %p242 = por %p240, %p241
    %p243 = scmp.le.s32.totalorder 1, %s15
    %p244 = scmp.lt.s32.totalorder %s15, 3
    %p245 = pnand %p243, %p244
    %p246 = pneg %p245
    // Predicated region
    $region9: #{bottleneck_forward.1} parent=5 // pred_check
      _
    $region10: #{bottleneck_forward.1} parent=5 // pred_check_branch
      %248 = sbr.rel (%p245) target = $region12
    $region11: #{bottleneck_forward.1} parent=5 // pred_region
      %s249 = ssub.s32 %s15, 1
      // Predicated region
      $region13: #{bottleneck_forward.1} parent=11 // pred_check
        %p250 = pneg %p62
      $region14: #{bottleneck_forward.1} parent=11 // pred_check_branch
        %252 = sbr.rel (%p250) target = $region16
      $region15: #{bottleneck_forward.1} parent=11 // pred_region
        _
      $region16: #{bottleneck_forward.1} parent=11 // pred_fallthru
        _
      // Predicated region
      $region17: #{bottleneck_forward.1} parent=11 // pred_check
        %p253 = pneg %p83
      $region18: #{bottleneck_forward.1} parent=11 // pred_check_branch
        %255 = sbr.rel (%p253) target = $region20
      $region19: #{bottleneck_forward.1} parent=11 // pred_region
        _
      $region20: #{bottleneck_forward.1} parent=11 // pred_fallthru
        _
      // Predicated region
      $region21: #{bottleneck_forward.1} parent=11 // pred_check
        %p256 = pneg %p104
      $region22: #{bottleneck_forward.1} parent=11 // pred_check_branch
        %258 = sbr.rel (%p256) target = $region24
      $region23: #{bottleneck_forward.1} parent=11 // pred_region
        _
      $region24: #{bottleneck_forward.1} parent=11 // pred_fallthru
        _
      // Predicated region
      $region25: #{bottleneck_forward.1} parent=11 // pred_check
        %p259 = pneg %p125
      $region26: #{bottleneck_forward.1} parent=11 // pred_check_branch
        %261 = sbr.rel (%p259) target = $region28
      $region27: #{bottleneck_forward.1} parent=11 // pred_region
        _
      $region28: #{bottleneck_forward.1} parent=11 // pred_fallthru
        _
      // Predicated region
      $region29: #{bottleneck_forward.1} parent=11 // pred_check
        %p262 = pneg %p146
      $region30: #{bottleneck_forward.1} parent=11 // pred_check_branch
        %264 = sbr.rel (%p262) target = $region32
      $region31: #{bottleneck_forward.1} parent=11 // pred_region
        _
      $region32: #{bottleneck_forward.1} parent=11 // pred_fallthru
        _
      // Predicated region
      $region33: #{bottleneck_forward.1} parent=11 // pred_check
        %p265 = pneg %p167
      $region34: #{bottleneck_forward.1} parent=11 // pred_check_branch
        %267 = sbr.rel (%p265) target = $region36
      $region35: #{bottleneck_forward.1} parent=11 // pred_region
        _
      $region36: #{bottleneck_forward.1} parent=11 // pred_fallthru
        _
      // Predicated region
      $region37: #{bottleneck_forward.1} parent=11 // pred_check
        %p268 = pneg %p188
      $region38: #{bottleneck_forward.1} parent=11 // pred_check_branch
        %270 = sbr.rel (%p268) target = $region40
      $region39: #{bottleneck_forward.1} parent=11 // pred_region
        _
      $region40: #{bottleneck_forward.1} parent=11 // pred_fallthru
        _
      // Predicated region
      $region41: #{bottleneck_forward.1} parent=11 // pred_check
        %p271 = pneg %p209
      $region42: #{bottleneck_forward.1} parent=11 // pred_check_branch
        %273 = sbr.rel (%p271) target = $region44
      $region43: #{bottleneck_forward.1} parent=11 // pred_region
        _
      $region44: #{bottleneck_forward.1} parent=11 // pred_fallthru
        _
    $region12: #{bottleneck_forward.1} parent=5 // pred_fallthru
      _
    %p274 = scmp.lt.s32.totalorder %s15, 2
    // Predicated region
    $region45: #{bottleneck_forward.1} parent=5 // pred_check
      %p275 = pneg %p274
    $region46: #{bottleneck_forward.1} parent=5 // pred_check_branch
      %277 = sbr.rel (%p275) target = $region48
    $region47: #{bottleneck_forward.1} parent=5 // pred_region
      // Predicated region
      $region49: #{bottleneck_forward.1} parent=47 // pred_check
        %p278 = pneg %p35
      $region50: #{bottleneck_forward.1} parent=47 // pred_check_branch
        %280 = sbr.rel (%p278) target = $region52
      $region51: #{bottleneck_forward.1} parent=47 // pred_region
        %p281 = scmp.lt.s32.totalorder %s15, 1
        %s282 = scalar_select %p281, %s15, 1
        %s283 = smul.addr %s282, 32
        %s284 = smul.addr %s283, 4
        %s285 = scalar_lea.vmem %s0, %s284
      $region52: #{bottleneck_forward.1} parent=47 // pred_fallthru
        _
    $region48: #{bottleneck_forward.1} parent=5 // pred_fallthru
      _
    %p286 = scmp.le.s32.totalorder 1, %s15
    %p287 = scmp.lt.s32.totalorder %s15, 3
    %p288 = pnand %p286, %p287
    %p289 = pneg %p288
    // Predicated region
    $region53: #{bottleneck_forward.1} parent=5 // pred_check
      _
    $region54: #{bottleneck_forward.1} parent=5 // pred_check_branch
      %291 = sbr.rel (%p288) target = $region56
    $region55: #{bottleneck_forward.1} parent=5 // pred_region
      %s292 = ssub.s32 %s15, 1
      %p293 = scmp.lt.s32.totalorder %s20, 1
      %s294 = scalar_select %p293, %s20, 1
      %s295 = smul.addr %s294, 32
      %s296 = smul.addr %s295, 4
      %s297 = scalar_lea.vmem %s0, %s296
      %p298 = pneg %p41
      %p299 = pneg %p38
      %p300 = pneg %p62
      %p301 = pneg %p59
      %p302 = pneg %p83
      %p303 = pneg %p80
      %p304 = pneg %p104
      %p305 = pneg %p101
      %p306 = pneg %p125
      %p307 = pneg %p122
      %p308 = pneg %p146
      %p309 = pneg %p143
      %p310 = pneg %p167
      %p311 = pneg %p164
      %p312 = pneg %p188
      %p313 = pneg %p185
      %p314 = pneg %p209
      %p315 = pneg %p206
      %p316 = pneg %p235
      %p317 = pneg %p232
      %p318 = scmp.lt.s32.totalorder %s20, 1
      %s319 = scalar_select %p318, %s20, 1
      %s320 = smul.addr %s319, 32
      %s321 = smul.addr %s320, 4
      %s322 = scalar_lea.vmem %s9, %s321
      %p323 = scmp.lt.s32.totalorder %s20, 1
      %s324 = scalar_select %p323, %s20, 1
      %s325 = smul.addr %s324, 32
      %s326 = smul.addr %s325, 4
      %s327 = scalar_lea.vmem %s0, %s326
      %p328 = scmp.lt.s32.totalorder %s20, 1
      %s329 = scalar_select %p328, %s20, 1
      %s330 = smul.addr %s329, 32
      %s331 = smul.addr %s330, 4
      %s332 = scalar_lea.vmem %s9, %s331
      %v334 = vld [vmem:[%s327] sm:$0xf]
      %v335 = vld [vmem:[%s327 + $0x4] sm:$0xf]
      %v336 = vld [vmem:[%s327 + $0x8] sm:$0xf]
      %v337 = vld [vmem:[%s327 + $0xc] sm:$0xf]
      %v338 = vld [vmem:[%s327 + $0x10] sm:$0xf]
      %v339 = vld [vmem:[%s327 + $0x14] sm:$0xf]
      %v340 = vld [vmem:[%s327 + $0x18] sm:$0xf]
      %v341 = vld [vmem:[%s327 + $0x1c] sm:$0xf]
      %v342 = vld [vmem:[%s327 + $0x20] sm:$0xf]
      %v343 = vld [vmem:[%s327 + $0x24] sm:$0xf]
      %v344 = vld [vmem:[%s327 + $0x28] sm:$0xf]
      %v345 = vld [vmem:[%s327 + $0x2c] sm:$0xf]
      %v346 = vld [vmem:[%s327 + $0x30] sm:$0xf]
      %v347 = vld [vmem:[%s327 + $0x34] sm:$0xf]
      %v348 = vld [vmem:[%s327 + $0x38] sm:$0xf]
      %v349 = vld [vmem:[%s327 + $0x3c] sm:$0xf]
      %v350 = vld [vmem:[%s327 + $0x40] sm:$0xf]
      %v351 = vld [vmem:[%s327 + $0x44] sm:$0xf]
      %v352 = vld [vmem:[%s327 + $0x48] sm:$0xf]
      %v353 = vld [vmem:[%s327 + $0x4c] sm:$0xf]
      %v354 = vld [vmem:[%s327 + $0x50] sm:$0xf]
      %v355 = vld [vmem:[%s327 + $0x54] sm:$0xf]
      %v356 = vld [vmem:[%s327 + $0x58] sm:$0xf]
      %v357 = vld [vmem:[%s327 + $0x5c] sm:$0xf]
      %v358 = vld [vmem:[%s327 + $0x60] sm:$0xf]
      %v359 = vld [vmem:[%s327 + $0x64] sm:$0xf]
      %v360 = vld [vmem:[%s327 + $0x68] sm:$0xf]
      %v361 = vld [vmem:[%s327 + $0x6c] sm:$0xf]
      %v362 = vld [vmem:[%s327 + $0x70] sm:$0xf]
      %v363 = vld [vmem:[%s327 + $0x74] sm:$0xf]
      %v364 = vld [vmem:[%s327 + $0x78] sm:$0xf]
      %v365 = vld [vmem:[%s327 + $0x7c] sm:$0xf]
      %v366 = vld [vmem:[%s7] sm:$0xf]
      %v367 = vld [vmem:[%s7 + $0x4] sm:$0xf]
      %v368 = vld [vmem:[%s7 + $0x8] sm:$0xf]
      %v369 = vld [vmem:[%s7 + $0xc] sm:$0xf]
      %v370 = vld [vmem:[%s7 + $0x10] sm:$0xf]
      %v371 = vld [vmem:[%s7 + $0x14] sm:$0xf]
      %v372 = vld [vmem:[%s7 + $0x18] sm:$0xf]
      %v373 = vld [vmem:[%s7 + $0x1c] sm:$0xf]
      %v374 = vld [vmem:[%s7 + $0x20] sm:$0xf]
      %v375 = vld [vmem:[%s7 + $0x24] sm:$0xf]
      %v376 = vld [vmem:[%s7 + $0x28] sm:$0xf]
      %v377 = vld [vmem:[%s7 + $0x2c] sm:$0xf]
      %v378 = vld [vmem:[%s7 + $0x30] sm:$0xf]
      %v379 = vld [vmem:[%s7 + $0x34] sm:$0xf]
      %v380 = vld [vmem:[%s7 + $0x38] sm:$0xf]
      %v381 = vld [vmem:[%s7 + $0x3c] sm:$0xf]
      %v382 = vld [vmem:[%s8] sm:$0x1]
      %v384 = vlaneseq
      %v385 = vshrl.u32 %v384, 7
      %v386 = vsub.s32 0, %v385
      %v387 = vrot.slane %v382, %v386
      %v421 = vunpack.c.l.b16 %v334
      %v422 = vunpack.c.l.b16 %v335
      %v423 = vunpack.c.l.b16 %v336
      %v424 = vunpack.c.l.b16 %v337
      %v425 = vunpack.c.l.b16 %v338
      %v426 = vunpack.c.l.b16 %v339
      %v427 = vunpack.c.l.b16 %v340
      %v428 = vunpack.c.l.b16 %v341
      %v429 = vunpack.c.l.b16 %v342
      %v430 = vunpack.c.l.b16 %v343
      %v431 = vunpack.c.l.b16 %v344
      %v432 = vunpack.c.l.b16 %v345
      %v433 = vunpack.c.l.b16 %v346
      %v434 = vunpack.c.l.b16 %v347
      %v435 = vunpack.c.l.b16 %v348
      %v436 = vunpack.c.l.b16 %v349
      %v437 = vunpack.c.l.b16 %v350
      %v438 = vunpack.c.l.b16 %v351
      %v439 = vunpack.c.l.b16 %v352
      %v440 = vunpack.c.l.b16 %v353
      %v441 = vunpack.c.l.b16 %v354
      %v442 = vunpack.c.l.b16 %v355
      %v443 = vunpack.c.l.b16 %v356
      %v444 = vunpack.c.l.b16 %v357
      %v445 = vunpack.c.l.b16 %v358
      %v446 = vunpack.c.l.b16 %v359
      %v447 = vunpack.c.l.b16 %v360
      %v448 = vunpack.c.l.b16 %v361
      %v449 = vunpack.c.l.b16 %v362
      %v450 = vunpack.c.l.b16 %v363
      %v451 = vunpack.c.l.b16 %v364
      %v452 = vunpack.c.l.b16 %v365
      %v453 = vpack.c.b16 %v422, %v421
      %v454 = vpack.c.b16 %v424, %v423
      %v455 = vpack.c.b16 %v426, %v425
      %v456 = vpack.c.b16 %v428, %v427
      %v457 = vpack.c.b16 %v430, %v429
      %v458 = vpack.c.b16 %v432, %v431
      %v459 = vpack.c.b16 %v434, %v433
      %v460 = vpack.c.b16 %v436, %v435
      %v461 = vpack.c.b16 %v438, %v437
      %v462 = vpack.c.b16 %v440, %v439
      %v463 = vpack.c.b16 %v442, %v441
      %v464 = vpack.c.b16 %v444, %v443
      %v465 = vpack.c.b16 %v446, %v445
      %v466 = vpack.c.b16 %v448, %v447
      %v467 = vpack.c.b16 %v450, %v449
      %v468 = vpack.c.b16 %v452, %v451
      %v501 = vunpack.c.l.b16 %v366
      %v502 = vunpack.c.l.b16 %v367
      %v503 = vunpack.c.l.b16 %v368
      %v504 = vunpack.c.l.b16 %v369
      %v505 = vunpack.c.l.b16 %v370
      %v506 = vunpack.c.l.b16 %v371
      %v507 = vunpack.c.l.b16 %v372
      %v508 = vunpack.c.l.b16 %v373
      %v509 = vunpack.c.l.b16 %v374
      %v510 = vunpack.c.l.b16 %v375
      %v511 = vunpack.c.l.b16 %v376
      %v512 = vunpack.c.l.b16 %v377
      %v513 = vunpack.c.l.b16 %v378
      %v514 = vunpack.c.l.b16 %v379
      %v515 = vunpack.c.l.b16 %v380
      %v516 = vunpack.c.l.b16 %v381
      %v517 = vpack.c.b16 %v502, %v501
      %v518 = vpack.c.b16 %v504, %v503
      %v519 = vpack.c.b16 %v506, %v505
      %v520 = vpack.c.b16 %v508, %v507
      %v521 = vpack.c.b16 %v510, %v509
      %v522 = vpack.c.b16 %v512, %v511
      %v523 = vpack.c.b16 %v514, %v513
      %v524 = vpack.c.b16 %v516, %v515
      %533 = vmatprep.subr.bf16.mxu0 0
      %534 = vmatpush1.bf16.msra.mxu0 %v517
      %535 = vmatprep.subr.bf16.mxu0 0
      %536 = vmatpush1.bf16.msra.mxu0 %v518
      %537 = vmatprep.subr.bf16.mxu0 0
      %538 = vmatpush1.bf16.msra.mxu0 %v519
      %539 = vmatprep.subr.bf16.mxu0 0
      %540 = vmatpush1.bf16.msra.mxu0 %v520
      %541 = vmatprep.subr.bf16.mxu0 0
      %542 = vmatpush1.bf16.msra.mxu0 %v521
      %543 = vmatprep.subr.bf16.mxu0 0
      %544 = vmatpush1.bf16.msra.mxu0 %v522
      %545 = vmatprep.subr.bf16.mxu0 0
      %546 = vmatpush1.bf16.msra.mxu0 %v523
      %547 = vmatprep.subr.bf16.mxu0 0
      %548 = vmatpush1.bf16.msra.mxu0 %v524
      %549 = vmatprep.subr.bf16.mxu0 0
      %550 = vmatpush1.bf16.msra.mxu0 0
      %551 = vmatprep.subr.bf16.mxu0 0
      %552 = vmatpush1.bf16.msra.mxu0 0
      %553 = vmatprep.subr.bf16.mxu0 0
      %554 = vmatpush1.bf16.msra.mxu0 0
      %555 = vmatprep.subr.bf16.mxu0 0
      %556 = vmatpush1.bf16.msra.mxu0 0
      %557 = vmatprep.subr.bf16.mxu0 0
      %558 = vmatpush1.bf16.msra.mxu0 0
      %559 = vmatprep.subr.bf16.mxu0 0
      %560 = vmatpush1.bf16.msra.mxu0 0
      %561 = vmatprep.subr.bf16.mxu0 0
      %562 = vmatpush1.bf16.msra.mxu0 0
      %563 = vmatprep.subr.bf16.mxu0 0
      %564 = vmatpush1.bf16.msra.mxu0 0
      %565 = vmatprep.mubr.bf16.mxu0 0
      %566 = vmatmul.mubr.bf16.gmra.mrb[0].mxu0 %v453
      %v567 = vpop.f32.mrb[0].mxu0
      %v568 = vadd.f32 %v387, %v567
      %v569 = vpop.f32.mrb[0].mxu0
      %v570 = vpop.f32.mrb[0].mxu0
      %v571 = vadd.f32 %v387, %v570
      %v572 = vpop.f32.mrb[0].mxu0
      %573 = vmatprep.mubr.bf16.mxu0 0
      %574 = vmatmul.mubr.bf16.gmra.mrb[0].mxu0 %v454
      %v575 = vpop.f32.mrb[0].mxu0
      %v576 = vadd.f32 %v387, %v575
      %v577 = vpop.f32.mrb[0].mxu0
      %v578 = vpop.f32.mrb[0].mxu0
      %v579 = vadd.f32 %v387, %v578
      %v580 = vpop.f32.mrb[0].mxu0
      %581 = vmatprep.mubr.bf16.mxu0 0
      %582 = vmatmul.mubr.bf16.gmra.mrb[0].mxu0 %v455
      %v583 = vpop.f32.mrb[0].mxu0
      %v584 = vadd.f32 %v387, %v583
      %v585 = vpop.f32.mrb[0].mxu0
      %v586 = vpop.f32.mrb[0].mxu0
      %v587 = vadd.f32 %v387, %v586
      %v588 = vpop.f32.mrb[0].mxu0
      %589 = vmatprep.mubr.bf16.mxu0 0
      %590 = vmatmul.mubr.bf16.gmra.mrb[0].mxu0 %v456
      %v591 = vpop.f32.mrb[0].mxu0
      %v592 = vadd.f32 %v387, %v591
      %v593 = vpop.f32.mrb[0].mxu0
      %v594 = vpop.f32.mrb[0].mxu0
      %v595 = vadd.f32 %v387, %v594
      %v596 = vpop.f32.mrb[0].mxu0
      %597 = vmatprep.mubr.bf16.mxu0 0
      %598 = vmatmul.mubr.bf16.gmra.mrb[0].mxu0 %v457
      %v599 = vpop.f32.mrb[0].mxu0
      %v600 = vadd.f32 %v387, %v599
      %v601 = vpop.f32.mrb[0].mxu0
      %v602 = vpop.f32.mrb[0].mxu0
      %v603 = vadd.f32 %v387, %v602
      %v604 = vpop.f32.mrb[0].mxu0
      %605 = vmatprep.mubr.bf16.mxu0 0
      %606 = vmatmul.mubr.bf16.gmra.mrb[0].mxu0 %v458
      %v607 = vpop.f32.mrb[0].mxu0
      %v608 = vadd.f32 %v387, %v607
      %v609 = vpop.f32.mrb[0].mxu0
      %v610 = vpop.f32.mrb[0].mxu0
      %v611 = vadd.f32 %v387, %v610
      %v612 = vpop.f32.mrb[0].mxu0
      %613 = vmatprep.mubr.bf16.mxu0 0
      %614 = vmatmul.mubr.bf16.gmra.mrb[0].mxu0 %v459
      %v615 = vpop.f32.mrb[0].mxu0
      %v616 = vadd.f32 %v387, %v615
      %v617 = vpop.f32.mrb[0].mxu0
      %v618 = vpop.f32.mrb[0].mxu0
      %v619 = vadd.f32 %v387, %v618
      %v620 = vpop.f32.mrb[0].mxu0
      %621 = vmatprep.mubr.bf16.mxu0 0
      %622 = vmatmul.mubr.bf16.gmra.mrb[0].mxu0 %v460
      %v623 = vpop.f32.mrb[0].mxu0
      %v624 = vadd.f32 %v387, %v623
      %v625 = vpop.f32.mrb[0].mxu0
      %v626 = vpop.f32.mrb[0].mxu0
      %v627 = vadd.f32 %v387, %v626
      %v628 = vpop.f32.mrb[0].mxu0
      %629 = vmatprep.mubr.bf16.mxu0 0
      %630 = vmatmul.mubr.bf16.gmra.mrb[0].mxu0 %v461
      %v631 = vpop.f32.mrb[0].mxu0
      %v632 = vadd.f32 %v387, %v631
      %v633 = vpop.f32.mrb[0].mxu0
      %v634 = vpop.f32.mrb[0].mxu0
      %v635 = vadd.f32 %v387, %v634
      %v636 = vpop.f32.mrb[0].mxu0
      %637 = vmatprep.mubr.bf16.mxu0 0
      %638 = vmatmul.mubr.bf16.gmra.mrb[0].mxu0 %v462
      %v639 = vpop.f32.mrb[0].mxu0
      %v640 = vadd.f32 %v387, %v639
      %v641 = vpop.f32.mrb[0].mxu0
      %v642 = vpop.f32.mrb[0].mxu0
      %v643 = vadd.f32 %v387, %v642
      %v644 = vpop.f32.mrb[0].mxu0
      %645 = vmatprep.mubr.bf16.mxu0 0
      %646 = vmatmul.mubr.bf16.gmra.mrb[0].mxu0 %v463
      %v647 = vpop.f32.mrb[0].mxu0
      %v648 = vadd.f32 %v387, %v647
      %v649 = vpop.f32.mrb[0].mxu0
      %v650 = vpop.f32.mrb[0].mxu0
      %v651 = vadd.f32 %v387, %v650
      %v652 = vpop.f32.mrb[0].mxu0
      %653 = vmatprep.mubr.bf16.mxu0 0
      %654 = vmatmul.mubr.bf16.gmra.mrb[0].mxu0 %v464
      %v655 = vpop.f32.mrb[0].mxu0
      %v656 = vadd.f32 %v387, %v655
      %v657 = vpop.f32.mrb[0].mxu0
      %v658 = vpop.f32.mrb[0].mxu0
      %v659 = vadd.f32 %v387, %v658
      %v660 = vpop.f32.mrb[0].mxu0
      %661 = vmatprep.mubr.bf16.mxu0 0
      %662 = vmatmul.mubr.bf16.gmra.mrb[0].mxu0 %v465
      %v663 = vpop.f32.mrb[0].mxu0
      %v664 = vadd.f32 %v387, %v663
      %v665 = vpop.f32.mrb[0].mxu0
      %v666 = vpop.f32.mrb[0].mxu0
      %v667 = vadd.f32 %v387, %v666
      %v668 = vpop.f32.mrb[0].mxu0
      %669 = vmatprep.mubr.bf16.mxu0 0
      %670 = vmatmul.mubr.bf16.gmra.mrb[0].mxu0 %v466
      %v671 = vpop.f32.mrb[0].mxu0
      %v672 = vadd.f32 %v387, %v671
      %v673 = vpop.f32.mrb[0].mxu0
      %v674 = vpop.f32.mrb[0].mxu0
      %v675 = vadd.f32 %v387, %v674
      %v676 = vpop.f32.mrb[0].mxu0
      %677 = vmatprep.mubr.bf16.mxu0 0
      %678 = vmatmul.mubr.bf16.gmra.mrb[0].mxu0 %v467
      %v679 = vpop.f32.mrb[0].mxu0
      %v680 = vadd.f32 %v387, %v679
      %v681 = vpop.f32.mrb[0].mxu0
      %v682 = vpop.f32.mrb[0].mxu0
      %v683 = vadd.f32 %v387, %v682
      %v684 = vpop.f32.mrb[0].mxu0
      %685 = vmatprep.mubr.bf16.mxu0 0
      %686 = vmatmul.mubr.bf16.gmra.mrb[0].mxu0 %v468
      %v687 = vpop.f32.mrb[0].mxu0
      %v688 = vadd.f32 %v387, %v687
      %v689 = vpop.f32.mrb[0].mxu0
      %v690 = vpop.f32.mrb[0].mxu0
      %v691 = vadd.f32 %v387, %v690
      %v692 = vpop.f32.mrb[0].mxu0
      %693 = vdwg.mxu0
      %v694 = vld [vmem:[%s1] sm:$0xf]
      %v695 = vld [vmem:[%s1 + $0x4] sm:$0xf]
      %v696 = vld [vmem:[%s1 + $0x8] sm:$0xf]
      %v697 = vld [vmem:[%s1 + $0xc] sm:$0xf]
      %v698 = vld [vmem:[%s1 + $0x10] sm:$0xf]
      %v699 = vld [vmem:[%s1 + $0x14] sm:$0xf]
      %v700 = vld [vmem:[%s1 + $0x18] sm:$0xf]
      %v701 = vld [vmem:[%s1 + $0x1c] sm:$0xf]
      %v702 = vld [vmem:[%s1 + $0x20] sm:$0xf]
      %v703 = vld [vmem:[%s1 + $0x24] sm:$0xf]
      %v704 = vld [vmem:[%s1 + $0x28] sm:$0xf]
      %v705 = vld [vmem:[%s1 + $0x2c] sm:$0xf]
      %v706 = vld [vmem:[%s1 + $0x30] sm:$0xf]
      %v707 = vld [vmem:[%s1 + $0x34] sm:$0xf]
      %v708 = vld [vmem:[%s1 + $0x38] sm:$0xf]
      %v709 = vld [vmem:[%s1 + $0x3c] sm:$0xf]
      %v710 = vld [vmem:[%s2] sm:$0x1]
      %v712 = vlaneseq
      %v713 = vshrl.u32 %v712, 7
      %v714 = vsub.s32 0, %v713
      %v715 = vrot.slane %v710, %v714
      %v733 = vunpack.c.l.b16 %v694
      %v734 = vunpack.c.l.b16 %v695
      %v735 = vunpack.c.l.b16 %v696
      %v736 = vunpack.c.l.b16 %v697
      %v737 = vunpack.c.l.b16 %v698
      %v738 = vunpack.c.l.b16 %v699
      %v739 = vunpack.c.l.b16 %v700
      %v740 = vunpack.c.l.b16 %v701
      %v741 = vunpack.c.l.b16 %v702
      %v742 = vunpack.c.l.b16 %v703
      %v743 = vunpack.c.l.b16 %v704
      %v744 = vunpack.c.l.b16 %v705
      %v745 = vunpack.c.l.b16 %v706
      %v746 = vunpack.c.l.b16 %v707
      %v747 = vunpack.c.l.b16 %v708
      %v748 = vunpack.c.l.b16 %v709
      %v749 = vpack.c.b16 %v734, %v733
      %v750 = vpack.c.b16 %v736, %v735
      %v751 = vpack.c.b16 %v738, %v737
      %v752 = vpack.c.b16 %v740, %v739
      %v753 = vpack.c.b16 %v742, %v741
      %v754 = vpack.c.b16 %v744, %v743
      %v755 = vpack.c.b16 %v746, %v745
      %v756 = vpack.c.b16 %v748, %v747
      %765 = vmatprep.subr.bf16.mxu0 0
      %766 = vmatpush1.bf16.msra.mxu0 %v749
      %767 = vmatprep.subr.bf16.mxu0 0
      %768 = vmatpush1.bf16.msra.mxu0 %v750
      %769 = vmatprep.subr.bf16.mxu0 0
      %770 = vmatpush1.bf16.msra.mxu0 %v751
      %771 = vmatprep.subr.bf16.mxu0 0
      %772 = vmatpush1.bf16.msra.mxu0 %v752
      %773 = vmatprep.subr.bf16.mxu0 0
      %774 = vmatpush1.bf16.msra.mxu0 %v753
      %775 = vmatprep.subr.bf16.mxu0 0
      %776 = vmatpush1.bf16.msra.mxu0 %v754
      %777 = vmatprep.subr.bf16.mxu0 0
      %778 = vmatpush1.bf16.msra.mxu0 %v755
      %779 = vmatprep.subr.bf16.mxu0 0
      %780 = vmatpush1.bf16.msra.mxu0 %v756
      %781 = vmatprep.subr.bf16.mxu0 0
      %782 = vmatpush1.bf16.msra.mxu0 0
      %783 = vmatprep.subr.bf16.mxu0 0
      %784 = vmatpush1.bf16.msra.mxu0 0
      %785 = vmatprep.subr.bf16.mxu0 0
      %786 = vmatpush1.bf16.msra.mxu0 0
      %787 = vmatprep.subr.bf16.mxu0 0
      %788 = vmatpush1.bf16.msra.mxu0 0
      %789 = vmatprep.subr.bf16.mxu0 0
      %790 = vmatpush1.bf16.msra.mxu0 0
      %791 = vmatprep.subr.bf16.mxu0 0
      %792 = vmatpush1.bf16.msra.mxu0 0
      %793 = vmatprep.subr.bf16.mxu0 0
      %794 = vmatpush1.bf16.msra.mxu0 0
      %795 = vmatprep.subr.bf16.mxu0 0
      %796 = vmatpush1.bf16.msra.mxu0 0
      %797 = vmatprep.mubr.bf16.mxu0 0
      %798 = vmatmul.mubr.bf16.gmra.mrb[0].mxu0 %v453
      %v799 = vpop.f32.mrb[0].mxu0
      %v800 = vadd.f32 %v715, %v799
      %v801 = vpop.f32.mrb[0].mxu0
      %v802 = vpop.f32.mrb[0].mxu0
      %v803 = vadd.f32 %v715, %v802
      %v804 = vpop.f32.mrb[0].mxu0
      %805 = vmatprep.mubr.bf16.mxu0 0
      %806 = vmatmul.mubr.bf16.gmra.mrb[0].mxu0 %v454
      %v807 = vpop.f32.mrb[0].mxu0
      %v808 = vadd.f32 %v715, %v807
      %v809 = vpop.f32.mrb[0].mxu0
      %v810 = vpop.f32.mrb[0].mxu0
      %v811 = vadd.f32 %v715, %v810
      %v812 = vpop.f32.mrb[0].mxu0
      %813 = vmatprep.mubr.bf16.mxu0 0
      %814 = vmatmul.mubr.bf16.gmra.mrb[0].mxu0 %v455
      %v815 = vpop.f32.mrb[0].mxu0
      %v816 = vadd.f32 %v715, %v815
      %v817 = vpop.f32.mrb[0].mxu0
      %v818 = vpop.f32.mrb[0].mxu0
      %v819 = vadd.f32 %v715, %v818
      %v820 = vpop.f32.mrb[0].mxu0
      %821 = vmatprep.mubr.bf16.mxu0 0
      %822 = vmatmul.mubr.bf16.gmra.mrb[0].mxu0 %v456
      %v823 = vpop.f32.mrb[0].mxu0
      %v824 = vadd.f32 %v715, %v823
      %v825 = vpop.f32.mrb[0].mxu0
      %v826 = vpop.f32.mrb[0].mxu0
      %v827 = vadd.f32 %v715, %v826
      %v828 = vpop.f32.mrb[0].mxu0
      %829 = vmatprep.mubr.bf16.mxu0 0
      %830 = vmatmul.mubr.bf16.gmra.mrb[0].mxu0 %v457
      %v831 = vpop.f32.mrb[0].mxu0
      %v832 = vadd.f32 %v715, %v831
      %v833 = vpop.f32.mrb[0].mxu0
      %v834 = vpop.f32.mrb[0].mxu0
      %v835 = vadd.f32 %v715, %v834
      %v836 = vpop.f32.mrb[0].mxu0
      %837 = vmatprep.mubr.bf16.mxu0 0
      %838 = vmatmul.mubr.bf16.gmra.mrb[0].mxu0 %v458
      %v839 = vpop.f32.mrb[0].mxu0
      %v840 = vadd.f32 %v715, %v839
      %v841 = vpop.f32.mrb[0].mxu0
      %v842 = vpop.f32.mrb[0].mxu0
      %v843 = vadd.f32 %v715, %v842
      %v844 = vpop.f32.mrb[0].mxu0
      %845 = vmatprep.mubr.bf16.mxu0 0
      %846 = vmatmul.mubr.bf16.gmra.mrb[0].mxu0 %v459
      %v847 = vpop.f32.mrb[0].mxu0
      %v848 = vadd.f32 %v715, %v847
      %v849 = vpop.f32.mrb[0].mxu0
      %v850 = vpop.f32.mrb[0].mxu0
      %v851 = vadd.f32 %v715, %v850
      %v852 = vpop.f32.mrb[0].mxu0
      %853 = vmatprep.mubr.bf16.mxu0 0
      %854 = vmatmul.mubr.bf16.gmra.mrb[0].mxu0 %v460
      %v855 = vpop.f32.mrb[0].mxu0
      %v856 = vadd.f32 %v715, %v855
      %v857 = vpop.f32.mrb[0].mxu0
      %v858 = vpop.f32.mrb[0].mxu0
      %v859 = vadd.f32 %v715, %v858
      %v860 = vpop.f32.mrb[0].mxu0
      %861 = vmatprep.mubr.bf16.mxu0 0
      %862 = vmatmul.mubr.bf16.gmra.mrb[0].mxu0 %v461
      %v863 = vpop.f32.mrb[0].mxu0
      %v864 = vadd.f32 %v715, %v863
      %v865 = vpop.f32.mrb[0].mxu0
      %v866 = vpop.f32.mrb[0].mxu0
      %v867 = vadd.f32 %v715, %v866
      %v868 = vpop.f32.mrb[0].mxu0
      %869 = vmatprep.mubr.bf16.mxu0 0
      %870 = vmatmul.mubr.bf16.gmra.mrb[0].mxu0 %v462
      %v871 = vpop.f32.mrb[0].mxu0
      %v872 = vadd.f32 %v715, %v871
      %v873 = vpop.f32.mrb[0].mxu0
      %v874 = vpop.f32.mrb[0].mxu0
      %v875 = vadd.f32 %v715, %v874
      %v876 = vpop.f32.mrb[0].mxu0
      %877 = vmatprep.mubr.bf16.mxu0 0
      %878 = vmatmul.mubr.bf16.gmra.mrb[0].mxu0 %v463
      %v879 = vpop.f32.mrb[0].mxu0
      %v880 = vadd.f32 %v715, %v879
      %v881 = vpop.f32.mrb[0].mxu0
      %v882 = vpop.f32.mrb[0].mxu0
      %v883 = vadd.f32 %v715, %v882
      %v884 = vpop.f32.mrb[0].mxu0
      %885 = vmatprep.mubr.bf16.mxu0 0
      %886 = vmatmul.mubr.bf16.gmra.mrb[0].mxu0 %v464
      %v887 = vpop.f32.mrb[0].mxu0
      %v888 = vadd.f32 %v715, %v887
      %v889 = vpop.f32.mrb[0].mxu0
      %v890 = vpop.f32.mrb[0].mxu0
      %v891 = vadd.f32 %v715, %v890
      %v892 = vpop.f32.mrb[0].mxu0
      %893 = vmatprep.mubr.bf16.mxu0 0
      %894 = vmatmul.mubr.bf16.gmra.mrb[0].mxu0 %v465
      %v895 = vpop.f32.mrb[0].mxu0
      %v896 = vadd.f32 %v715, %v895
      %v897 = vpop.f32.mrb[0].mxu0
      %v898 = vpop.f32.mrb[0].mxu0
      %v899 = vadd.f32 %v715, %v898
      %v900 = vpop.f32.mrb[0].mxu0
      %901 = vmatprep.mubr.bf16.mxu0 0
      %902 = vmatmul.mubr.bf16.gmra.mrb[0].mxu0 %v466
      %v903 = vpop.f32.mrb[0].mxu0
      %v904 = vadd.f32 %v715, %v903
      %v905 = vpop.f32.mrb[0].mxu0
      %v906 = vpop.f32.mrb[0].mxu0
      %v907 = vadd.f32 %v715, %v906
      %v908 = vpop.f32.mrb[0].mxu0
      %909 = vmatprep.mubr.bf16.mxu0 0
      %910 = vmatmul.mubr.bf16.gmra.mrb[0].mxu0 %v467
      %v911 = vpop.f32.mrb[0].mxu0
      %v912 = vadd.f32 %v715, %v911
      %v913 = vpop.f32.mrb[0].mxu0
      %v914 = vpop.f32.mrb[0].mxu0
      %v915 = vadd.f32 %v715, %v914
      %v916 = vpop.f32.mrb[0].mxu0
      %917 = vmatprep.mubr.bf16.mxu0 0
      %918 = vmatmul.mubr.bf16.gmra.mrb[0].mxu0 %v468
      %v919 = vpop.f32.mrb[0].mxu0
      %v920 = vadd.f32 %v715, %v919
      %v921 = vpop.f32.mrb[0].mxu0
      %v922 = vpop.f32.mrb[0].mxu0
      %v923 = vadd.f32 %v715, %v922
      %v924 = vpop.f32.mrb[0].mxu0
      %925 = vdwg.mxu0
      %v926 = vmax.f32 %v800, 0.0
      %v927 = vmax.f32 %v803, 0.0
      %v928 = vmax.f32 %v808, 0.0
      %v929 = vmax.f32 %v811, 0.0
      %v930 = vmax.f32 %v816, 0.0
      %v931 = vmax.f32 %v819, 0.0
      %v932 = vmax.f32 %v824, 0.0
      %v933 = vmax.f32 %v827, 0.0
      %v934 = vmax.f32 %v832, 0.0
      %v935 = vmax.f32 %v835, 0.0
      %v936 = vmax.f32 %v840, 0.0
      %v937 = vmax.f32 %v843, 0.0
      %v938 = vmax.f32 %v848, 0.0
      %v939 = vmax.f32 %v851, 0.0
      %v940 = vmax.f32 %v856, 0.0
      %v941 = vmax.f32 %v859, 0.0
      %v942 = vmax.f32 %v864, 0.0
      %v943 = vmax.f32 %v867, 0.0
      %v944 = vmax.f32 %v872, 0.0
      %v945 = vmax.f32 %v875, 0.0
      %v946 = vmax.f32 %v880, 0.0
      %v947 = vmax.f32 %v883, 0.0
      %v948 = vmax.f32 %v888, 0.0
      %v949 = vmax.f32 %v891, 0.0
      %v950 = vmax.f32 %v896, 0.0
      %v951 = vmax.f32 %v899, 0.0
      %v952 = vmax.f32 %v904, 0.0
      %v953 = vmax.f32 %v907, 0.0
      %v954 = vmax.f32 %v912, 0.0
      %v955 = vmax.f32 %v915, 0.0
      %v956 = vmax.f32 %v920, 0.0
      %v957 = vmax.f32 %v923, 0.0
      %958 = vst [vmem:[#allocation2] sm:$0xf] 0
      %959 = vst [vmem:[#allocation2 + $0x4] sm:$0xf] 0
      %960 = vst [vmem:[#allocation2 + $0x8] sm:$0xf] 0
      %s961 = scalar_lea.vmem [#allocation2], 204
      %962 = vst [vmem:[%s961] sm:$0xf] 0
      %963 = vst [vmem:[%s961 + $0x4] sm:$0xf] 0
      %964 = vst [vmem:[%s961 + $0x8] sm:$0xf] 0
      %s965 = scalar_lea.vmem [#allocation2], 12
      %vm966 = vcmask 1040384
      %vm967 = vsmask.f32 256
      %vm968 = vmand %vm966, %vm967
      %v969 = vld [vmem:[%s965] sm:$0x1]
      %v970 = vsel %vm968, 0, %v969
      %971 = vst [vmem:[%s965] sm:$0x1] %v970
      %v972 = vld [vmem:[%s965 + $0xc] sm:$0x1]
      %v973 = vsel %vm968, 0, %v972
      %974 = vst [vmem:[%s965 + $0xc] sm:$0x1] %v973
      %v975 = vld [vmem:[%s965 + $0x18] sm:$0x1]
      %v976 = vsel %vm968, 0, %v975
      %977 = vst [vmem:[%s965 + $0x18] sm:$0x1] %v976
      %v978 = vld [vmem:[%s965 + $0x24] sm:$0x1]
      %v979 = vsel %vm968, 0, %v978
      %980 = vst [vmem:[%s965 + $0x24] sm:$0x1] %v979
      %v981 = vld [vmem:[%s965 + $0x30] sm:$0x1]
      %v982 = vsel %vm968, 0, %v981
      %983 = vst [vmem:[%s965 + $0x30] sm:$0x1] %v982
      %v984 = vld [vmem:[%s965 + $0x3c] sm:$0x1]
      %v985 = vsel %vm968, 0, %v984
      %986 = vst [vmem:[%s965 + $0x3c] sm:$0x1] %v985
      %v987 = vld [vmem:[%s965 + $0x48] sm:$0x1]
      %v988 = vsel %vm968, 0, %v987
      %989 = vst [vmem:[%s965 + $0x48] sm:$0x1] %v988
      %v990 = vld [vmem:[%s965 + $0x54] sm:$0x1]
      %v991 = vsel %vm968, 0, %v990
      %992 = vst [vmem:[%s965 + $0x54] sm:$0x1] %v991
      %v993 = vld [vmem:[%s965 + $0x60] sm:$0x1]
      %v994 = vsel %vm968, 0, %v993
      %995 = vst [vmem:[%s965 + $0x60] sm:$0x1] %v994
      %v996 = vld [vmem:[%s965 + $0x6c] sm:$0x1]
      %v997 = vsel %vm968, 0, %v996
      %998 = vst [vmem:[%s965 + $0x6c] sm:$0x1] %v997
      %v999 = vld [vmem:[%s965 + $0x78] sm:$0x1]
      %v1000 = vsel %vm968, 0, %v999
      %1001 = vst [vmem:[%s965 + $0x78] sm:$0x1] %v1000
      %v1002 = vld [vmem:[%s965 + $0x84] sm:$0x1]
      %v1003 = vsel %vm968, 0, %v1002
      %1004 = vst [vmem:[%s965 + $0x84] sm:$0x1] %v1003
      %v1005 = vld [vmem:[%s965 + $0x90] sm:$0x1]
      %v1006 = vsel %vm968, 0, %v1005
      %1007 = vst [vmem:[%s965 + $0x90] sm:$0x1] %v1006
      %v1008 = vld [vmem:[%s965 + $0x9c] sm:$0x1]
      %v1009 = vsel %vm968, 0, %v1008
      %1010 = vst [vmem:[%s965 + $0x9c] sm:$0x1] %v1009
      %v1011 = vld [vmem:[%s965 + $0xa8] sm:$0x1]
      %v1012 = vsel %vm968, 0, %v1011
      %1013 = vst [vmem:[%s965 + $0xa8] sm:$0x1] %v1012
      %v1014 = vld [vmem:[%s965 + $0xb4] sm:$0x1]
      %v1015 = vsel %vm968, 0, %v1014
      %1016 = vst [vmem:[%s965 + $0xb4] sm:$0x1] %v1015
      %vm1017 = vsmask.f32 7938
      %vm1018 = vmand %vm966, %vm1017
      %v1019 = vld [vmem:[%s965 + $0x8] sm:$0x1]
      %v1020 = vsel %vm1018, 0, %v1019
      %1021 = vst [vmem:[%s965 + $0x8] sm:$0x1] %v1020
      %v1022 = vld [vmem:[%s965 + $0x14] sm:$0x1]
      %v1023 = vsel %vm1018, 0, %v1022
      %1024 = vst [vmem:[%s965 + $0x14] sm:$0x1] %v1023
      %v1025 = vld [vmem:[%s965 + $0x20] sm:$0x1]
      %v1026 = vsel %vm1018, 0, %v1025
      %1027 = vst [vmem:[%s965 + $0x20] sm:$0x1] %v1026
      %v1028 = vld [vmem:[%s965 + $0x2c] sm:$0x1]
      %v1029 = vsel %vm1018, 0, %v1028
      %1030 = vst [vmem:[%s965 + $0x2c] sm:$0x1] %v1029
      %v1031 = vld [vmem:[%s965 + $0x38] sm:$0x1]
      %v1032 = vsel %vm1018, 0, %v1031
      %1033 = vst [vmem:[%s965 + $0x38] sm:$0x1] %v1032
      %v1034 = vld [vmem:[%s965 + $0x44] sm:$0x1]
      %v1035 = vsel %vm1018, 0, %v1034
      %1036 = vst [vmem:[%s965 + $0x44] sm:$0x1] %v1035
      %v1037 = vld [vmem:[%s965 + $0x50] sm:$0x1]
      %v1038 = vsel %vm1018, 0, %v1037
      %1039 = vst [vmem:[%s965 + $0x50] sm:$0x1] %v1038
      %v1040 = vld [vmem:[%s965 + $0x5c] sm:$0x1]
      %v1041 = vsel %vm1018, 0, %v1040
      %1042 = vst [vmem:[%s965 + $0x5c] sm:$0x1] %v1041
      %v1043 = vld [vmem:[%s965 + $0x68] sm:$0x1]
      %v1044 = vsel %vm1018, 0, %v1043
      %1045 = vst [vmem:[%s965 + $0x68] sm:$0x1] %v1044
      %v1046 = vld [vmem:[%s965 + $0x74] sm:$0x1]
      %v1047 = vsel %vm1018, 0, %v1046
      %1048 = vst [vmem:[%s965 + $0x74] sm:$0x1] %v1047
      %v1049 = vld [vmem:[%s965 + $0x80] sm:$0x1]
      %v1050 = vsel %vm1018, 0, %v1049
      %1051 = vst [vmem:[%s965 + $0x80] sm:$0x1] %v1050
      %v1052 = vld [vmem:[%s965 + $0x8c] sm:$0x1]
      %v1053 = vsel %vm1018, 0, %v1052
      %1054 = vst [vmem:[%s965 + $0x8c] sm:$0x1] %v1053
      %v1055 = vld [vmem:[%s965 + $0x98] sm:$0x1]
      %v1056 = vsel %vm1018, 0, %v1055
      %1057 = vst [vmem:[%s965 + $0x98] sm:$0x1] %v1056
      %v1058 = vld [vmem:[%s965 + $0xa4] sm:$0x1]
      %v1059 = vsel %vm1018, 0, %v1058
      %1060 = vst [vmem:[%s965 + $0xa4] sm:$0x1] %v1059
      %v1061 = vld [vmem:[%s965 + $0xb0] sm:$0x1]
      %v1062 = vsel %vm1018, 0, %v1061
      %1063 = vst [vmem:[%s965 + $0xb0] sm:$0x1] %v1062
      %v1064 = vld [vmem:[%s965 + $0xbc] sm:$0x1]
      %v1065 = vsel %vm1018, 0, %v1064
      %1066 = vst [vmem:[%s965 + $0xbc] sm:$0x1] %v1065
      %v1067 = vpack.c.bf16 %v927, %v926
      %v1068 = vpack.c.bf16 %v929, %v928
      %v1069 = vpack.c.bf16 %v931, %v930
      %v1070 = vpack.c.bf16 %v933, %v932
      %v1071 = vpack.c.bf16 %v935, %v934
      %v1072 = vpack.c.bf16 %v937, %v936
      %v1073 = vpack.c.bf16 %v939, %v938
      %v1074 = vpack.c.bf16 %v941, %v940
      %v1075 = vpack.c.bf16 %v943, %v942
      %v1076 = vpack.c.bf16 %v945, %v944
      %v1077 = vpack.c.bf16 %v947, %v946
      %v1078 = vpack.c.bf16 %v949, %v948
      %v1079 = vpack.c.bf16 %v951, %v950
      %v1080 = vpack.c.bf16 %v953, %v952
      %v1081 = vpack.c.bf16 %v955, %v954
      %v1082 = vpack.c.bf16 %v957, %v956
      %v1099 = vunpack.c.l.b16 %v1067
      %v1100 = vunpack.c.h.b16 %v1067
      %v1101 = vunpack.c.l.b16 %v1068
      %v1102 = vunpack.c.h.b16 %v1068
      %v1103 = vunpack.c.l.b16 %v1069
      %v1104 = vunpack.c.h.b16 %v1069
      %v1105 = vunpack.c.l.b16 %v1070
      %v1106 = vunpack.c.h.b16 %v1070
      %v1107 = vunpack.c.l.b16 %v1071
      %v1108 = vunpack.c.h.b16 %v1071
      %v1109 = vunpack.c.l.b16 %v1072
      %v1110 = vunpack.c.h.b16 %v1072
      %v1111 = vunpack.c.l.b16 %v1073
      %v1112 = vunpack.c.h.b16 %v1073
      %v1113 = vunpack.c.l.b16 %v1074
      %v1114 = vunpack.c.h.b16 %v1074
      %v1115 = vunpack.c.l.b16 %v1075
      %v1116 = vunpack.c.h.b16 %v1075
      %v1117 = vunpack.c.l.b16 %v1076
      %v1118 = vunpack.c.h.b16 %v1076
      %v1119 = vunpack.c.l.b16 %v1077
      %v1120 = vunpack.c.h.b16 %v1077
      %v1121 = vunpack.c.l.b16 %v1078
      %v1122 = vunpack.c.h.b16 %v1078
      %v1123 = vunpack.c.l.b16 %v1079
      %v1124 = vunpack.c.h.b16 %v1079
      %v1125 = vunpack.c.l.b16 %v1080
      %v1126 = vunpack.c.h.b16 %v1080
      %v1127 = vunpack.c.l.b16 %v1081
      %v1128 = vunpack.c.h.b16 %v1081
      %v1129 = vunpack.c.l.b16 %v1082
      %v1130 = vunpack.c.h.b16 %v1082
      %v1131 = vpack.c.b16 %v1099, %v1099
      %v1132 = vpack.c.b16 %v1100, %v1100
      %v1133 = vpack.c.b16 %v1101, %v1101
      %v1134 = vpack.c.b16 %v1102, %v1102
      %v1135 = vpack.c.b16 %v1103, %v1103
      %v1136 = vpack.c.b16 %v1104, %v1104
      %v1137 = vpack.c.b16 %v1105, %v1105
      %v1138 = vpack.c.b16 %v1106, %v1106
      %v1139 = vpack.c.b16 %v1107, %v1107
      %v1140 = vpack.c.b16 %v1108, %v1108
      %v1141 = vpack.c.b16 %v1109, %v1109
      %v1142 = vpack.c.b16 %v1110, %v1110
      %v1143 = vpack.c.b16 %v1111, %v1111
      %v1144 = vpack.c.b16 %v1112, %v1112
      %v1145 = vpack.c.b16 %v1113, %v1113
      %v1146 = vpack.c.b16 %v1114, %v1114
      %v1147 = vpack.c.b16 %v1115, %v1115
      %v1148 = vpack.c.b16 %v1116, %v1116
      %v1149 = vpack.c.b16 %v1117, %v1117
      %v1150 = vpack.c.b16 %v1118, %v1118
      %v1151 = vpack.c.b16 %v1119, %v1119
      %v1152 = vpack.c.b16 %v1120, %v1120
      %v1153 = vpack.c.b16 %v1121, %v1121
      %v1154 = vpack.c.b16 %v1122, %v1122
      %v1155 = vpack.c.b16 %v1123, %v1123
      %v1156 = vpack.c.b16 %v1124, %v1124
      %v1157 = vpack.c.b16 %v1125, %v1125
      %v1158 = vpack.c.b16 %v1126, %v1126
      %v1159 = vpack.c.b16 %v1127, %v1127
      %v1160 = vpack.c.b16 %v1128, %v1128
      %v1161 = vpack.c.b16 %v1129, %v1129
      %v1162 = vpack.c.b16 %v1130, %v1130
      %vm1163 = vsmask.f32 4368
      %vm1164 = vmor %vm967, %vm1163
      %v1166 = vshrl.u32 %v1131, 16
      %v1168 = vrot.slane %v1166, 7
      %v1169 = vshll.u32 %v1131, 16
      %v1171 = vor.u32 %v1168, %v1169
      %v1172 = vrot.slane %v1168, 4
      %v1174 = vshrl.u32 %v1132, 16
      %v1176 = vrot.slane %v1174, 7
      %v1177 = vshll.u32 %v1132, 16
      %v1179 = vor.u32 %v1176, %v1177
      %v1180 = vsel %vm1164, %v1172, %v1179
      %v1181 = vrot.slane %v1176, 4
      %v1183 = vshrl.u32 %v1133, 16
      %v1185 = vrot.slane %v1183, 7
      %v1186 = vshll.u32 %v1133, 16
      %v1188 = vor.u32 %v1185, %v1186
      %v1189 = vrot.slane %v1185, 4
      %v1191 = vshrl.u32 %v1134, 16
      %v1193 = vrot.slane %v1191, 7
      %v1194 = vshll.u32 %v1134, 16
      %v1196 = vor.u32 %v1193, %v1194
      %v1197 = vsel %vm1164, %v1189, %v1196
      %v1198 = vrot.slane %v1193, 4
      %v1200 = vshrl.u32 %v1135, 16
      %v1202 = vrot.slane %v1200, 7
      %v1203 = vshll.u32 %v1135, 16
      %v1205 = vor.u32 %v1202, %v1203
      %v1206 = vrot.slane %v1202, 4
      %v1208 = vshrl.u32 %v1136, 16
      %v1210 = vrot.slane %v1208, 7
      %v1211 = vshll.u32 %v1136, 16
      %v1213 = vor.u32 %v1210, %v1211
      %v1214 = vsel %vm1164, %v1206, %v1213
      %v1215 = vrot.slane %v1210, 4
      %v1217 = vshrl.u32 %v1137, 16
      %v1219 = vrot.slane %v1217, 7
      %v1220 = vshll.u32 %v1137, 16
      %v1222 = vor.u32 %v1219, %v1220
      %v1223 = vrot.slane %v1219, 4
      %v1225 = vshrl.u32 %v1138, 16
      %v1227 = vrot.slane %v1225, 7
      %v1228 = vshll.u32 %v1138, 16
      %v1230 = vor.u32 %v1227, %v1228
      %v1231 = vsel %vm1164, %v1223, %v1230
      %v1232 = vrot.slane %v1227, 4
      %v1234 = vshrl.u32 %v1139, 16
      %v1236 = vrot.slane %v1234, 7
      %v1237 = vshll.u32 %v1139, 16
      %v1239 = vor.u32 %v1236, %v1237
      %v1240 = vrot.slane %v1236, 4
      %v1242 = vshrl.u32 %v1140, 16
      %v1244 = vrot.slane %v1242, 7
      %v1245 = vshll.u32 %v1140, 16
      %v1247 = vor.u32 %v1244, %v1245
      %v1248 = vsel %vm1164, %v1240, %v1247
      %v1249 = vrot.slane %v1244, 4
      %v1251 = vshrl.u32 %v1141, 16
      %v1253 = vrot.slane %v1251, 7
      %v1254 = vshll.u32 %v1141, 16
      %v1256 = vor.u32 %v1253, %v1254
      %v1257 = vrot.slane %v1253, 4
      %v1259 = vshrl.u32 %v1142, 16
      %v1261 = vrot.slane %v1259, 7
      %v1262 = vshll.u32 %v1142, 16
      %v1264 = vor.u32 %v1261, %v1262
      %v1265 = vsel %vm1164, %v1257, %v1264
      %v1266 = vrot.slane %v1261, 4
      %v1268 = vshrl.u32 %v1143, 16
      %v1270 = vrot.slane %v1268, 7
      %v1271 = vshll.u32 %v1143, 16
      %v1273 = vor.u32 %v1270, %v1271
      %v1274 = vrot.slane %v1270, 4
      %v1276 = vshrl.u32 %v1144, 16
      %v1278 = vrot.slane %v1276, 7
      %v1279 = vshll.u32 %v1144, 16
      %v1281 = vor.u32 %v1278, %v1279
      %v1282 = vsel %vm1164, %v1274, %v1281
      %v1283 = vrot.slane %v1278, 4
      %v1285 = vshrl.u32 %v1145, 16
      %v1287 = vrot.slane %v1285, 7
      %v1288 = vshll.u32 %v1145, 16
      %v1290 = vor.u32 %v1287, %v1288
      %v1291 = vrot.slane %v1287, 4
      %v1293 = vshrl.u32 %v1146, 16
      %v1295 = vrot.slane %v1293, 7
      %v1296 = vshll.u32 %v1146, 16
      %v1298 = vor.u32 %v1295, %v1296
      %v1299 = vsel %vm1164, %v1291, %v1298
      %v1300 = vrot.slane %v1295, 4
      %v1302 = vshrl.u32 %v1147, 16
      %v1304 = vrot.slane %v1302, 7
      %v1305 = vshll.u32 %v1147, 16
      %v1307 = vor.u32 %v1304, %v1305
      %v1308 = vrot.slane %v1304, 4
      %v1310 = vshrl.u32 %v1148, 16
      %v1312 = vrot.slane %v1310, 7
      %v1313 = vshll.u32 %v1148, 16
      %v1315 = vor.u32 %v1312, %v1313
      %v1316 = vsel %vm1164, %v1308, %v1315
      %v1317 = vrot.slane %v1312, 4
      %v1319 = vshrl.u32 %v1149, 16
      %v1321 = vrot.slane %v1319, 7
      %v1322 = vshll.u32 %v1149, 16
      %v1324 = vor.u32 %v1321, %v1322
      %v1325 = vrot.slane %v1321, 4
      %v1327 = vshrl.u32 %v1150, 16
      %v1329 = vrot.slane %v1327, 7
      %v1330 = vshll.u32 %v1150, 16
      %v1332 = vor.u32 %v1329, %v1330
      %v1333 = vsel %vm1164, %v1325, %v1332
      %v1334 = vrot.slane %v1329, 4
      %v1336 = vshrl.u32 %v1151, 16
      %v1338 = vrot.slane %v1336, 7
      %v1339 = vshll.u32 %v1151, 16
      %v1341 = vor.u32 %v1338, %v1339
      %v1342 = vrot.slane %v1338, 4
      %v1344 = vshrl.u32 %v1152, 16
      %v1346 = vrot.slane %v1344, 7
      %v1347 = vshll.u32 %v1152, 16
      %v1349 = vor.u32 %v1346, %v1347
      %v1350 = vsel %vm1164, %v1342, %v1349
      %v1351 = vrot.slane %v1346, 4
      %v1353 = vshrl.u32 %v1153, 16
      %v1355 = vrot.slane %v1353, 7
      %v1356 = vshll.u32 %v1153, 16
      %v1358 = vor.u32 %v1355, %v1356
      %v1359 = vrot.slane %v1355, 4
      %v1361 = vshrl.u32 %v1154, 16
      %v1363 = vrot.slane %v1361, 7
      %v1364 = vshll.u32 %v1154, 16
      %v1366 = vor.u32 %v1363, %v1364
      %v1367 = vsel %vm1164, %v1359, %v1366
      %v1368 = vrot.slane %v1363, 4
      %v1370 = vshrl.u32 %v1155, 16
      %v1372 = vrot.slane %v1370, 7
      %v1373 = vshll.u32 %v1155, 16
      %v1375 = vor.u32 %v1372, %v1373
      %v1376 = vrot.slane %v1372, 4
      %v1378 = vshrl.u32 %v1156, 16
      %v1380 = vrot.slane %v1378, 7
      %v1381 = vshll.u32 %v1156, 16
      %v1383 = vor.u32 %v1380, %v1381
      %v1384 = vsel %vm1164, %v1376, %v1383
      %v1385 = vrot.slane %v1380, 4
      %v1387 = vshrl.u32 %v1157, 16
      %v1389 = vrot.slane %v1387, 7
      %v1390 = vshll.u32 %v1157, 16
      %v1392 = vor.u32 %v1389, %v1390
      %v1393 = vrot.slane %v1389, 4
      %v1395 = vshrl.u32 %v1158, 16
      %v1397 = vrot.slane %v1395, 7
      %v1398 = vshll.u32 %v1158, 16
      %v1400 = vor.u32 %v1397, %v1398
      %v1401 = vsel %vm1164, %v1393, %v1400
      %v1402 = vrot.slane %v1397, 4
      %v1404 = vshrl.u32 %v1159, 16
      %v1406 = vrot.slane %v1404, 7
      %v1407 = vshll.u32 %v1159, 16
      %v1409 = vor.u32 %v1406, %v1407
      %v1410 = vrot.slane %v1406, 4
      %v1412 = vshrl.u32 %v1160, 16
      %v1414 = vrot.slane %v1412, 7
      %v1415 = vshll.u32 %v1160, 16
      %v1417 = vor.u32 %v1414, %v1415
      %v1418 = vsel %vm1164, %v1410, %v1417
      %v1419 = vrot.slane %v1414, 4
      %v1421 = vshrl.u32 %v1161, 16
      %v1423 = vrot.slane %v1421, 7
      %v1424 = vshll.u32 %v1161, 16
      %v1426 = vor.u32 %v1423, %v1424
      %v1427 = vrot.slane %v1423, 4
      %v1429 = vshrl.u32 %v1162, 16
      %v1431 = vrot.slane %v1429, 7
      %v1432 = vshll.u32 %v1162, 16
      %v1434 = vor.u32 %v1431, %v1432
      %v1435 = vsel %vm1164, %v1427, %v1434
      %v1436 = vrot.slane %v1431, 4
      %vm1485 = vcmask 1043456
      %vm1486 = vmand %vm1485, %vm1017
      %v1487 = vld [vmem:[%s965] sm:$0xf]
      %v1488 = vsel %vm1486, %v1171, %v1487
      %1489 = vst [vmem:[%s965] sm:$0xf] %v1488
      %1490 = vst [vmem:[%s965 + $0x4] sm:$0xf] %v1180
      %v1491 = vld [vmem:[%s965 + $0x8] sm:$0x1]
      %v1492 = vsel %vm968, %v1181, %v1491
      %1493 = vst [vmem:[%s965 + $0x8] sm:$0x1] %v1492
      %v1494 = vld [vmem:[%s965 + $0xc] sm:$0xf]
      %v1495 = vsel %vm1486, %v1188, %v1494
      %1496 = vst [vmem:[%s965 + $0xc] sm:$0xf] %v1495
      %1497 = vst [vmem:[%s965 + $0x10] sm:$0xf] %v1197
      %v1498 = vld [vmem:[%s965 + $0x14] sm:$0x1]
      %v1499 = vsel %vm968, %v1198, %v1498
      %1500 = vst [vmem:[%s965 + $0x14] sm:$0x1] %v1499
      %v1501 = vld [vmem:[%s965 + $0x18] sm:$0xf]
      %v1502 = vsel %vm1486, %v1205, %v1501
      %1503 = vst [vmem:[%s965 + $0x18] sm:$0xf] %v1502
      %1504 = vst [vmem:[%s965 + $0x1c] sm:$0xf] %v1214
      %v1505 = vld [vmem:[%s965 + $0x20] sm:$0x1]
      %v1506 = vsel %vm968, %v1215, %v1505
      %1507 = vst [vmem:[%s965 + $0x20] sm:$0x1] %v1506
      %v1508 = vld [vmem:[%s965 + $0x24] sm:$0xf]
      %v1509 = vsel %vm1486, %v1222, %v1508
      %1510 = vst [vmem:[%s965 + $0x24] sm:$0xf] %v1509
      %1511 = vst [vmem:[%s965 + $0x28] sm:$0xf] %v1231
      %v1512 = vld [vmem:[%s965 + $0x2c] sm:$0x1]
      %v1513 = vsel %vm968, %v1232, %v1512
      %1514 = vst [vmem:[%s965 + $0x2c] sm:$0x1] %v1513
      %v1515 = vld [vmem:[%s965 + $0x30] sm:$0xf]
      %v1516 = vsel %vm1486, %v1239, %v1515
      %1517 = vst [vmem:[%s965 + $0x30] sm:$0xf] %v1516
      %1518 = vst [vmem:[%s965 + $0x34] sm:$0xf] %v1248
      %v1519 = vld [vmem:[%s965 + $0x38] sm:$0x1]
      %v1520 = vsel %vm968, %v1249, %v1519
      %1521 = vst [vmem:[%s965 + $0x38] sm:$0x1] %v1520
      %v1522 = vld [vmem:[%s965 + $0x3c] sm:$0xf]
      %v1523 = vsel %vm1486, %v1256, %v1522
      %1524 = vst [vmem:[%s965 + $0x3c] sm:$0xf] %v1523
      %1525 = vst [vmem:[%s965 + $0x40] sm:$0xf] %v1265
      %v1526 = vld [vmem:[%s965 + $0x44] sm:$0x1]
      %v1527 = vsel %vm968, %v1266, %v1526
      %1528 = vst [vmem:[%s965 + $0x44] sm:$0x1] %v1527
      %v1529 = vld [vmem:[%s965 + $0x48] sm:$0xf]
      %v1530 = vsel %vm1486, %v1273, %v1529
      %1531 = vst [vmem:[%s965 + $0x48] sm:$0xf] %v1530
      %1532 = vst [vmem:[%s965 + $0x4c] sm:$0xf] %v1282
      %v1533 = vld [vmem:[%s965 + $0x50] sm:$0x1]
      %v1534 = vsel %vm968, %v1283, %v1533
      %1535 = vst [vmem:[%s965 + $0x50] sm:$0x1] %v1534
      %v1536 = vld [vmem:[%s965 + $0x54] sm:$0xf]
      %v1537 = vsel %vm1486, %v1290, %v1536
      %1538 = vst [vmem:[%s965 + $0x54] sm:$0xf] %v1537
      %1539 = vst [vmem:[%s965 + $0x58] sm:$0xf] %v1299
      %v1540 = vld [vmem:[%s965 + $0x5c] sm:$0x1]
      %v1541 = vsel %vm968, %v1300, %v1540
      %1542 = vst [vmem:[%s965 + $0x5c] sm:$0x1] %v1541
      %v1543 = vld [vmem:[%s965 + $0x60] sm:$0xf]
      %v1544 = vsel %vm1486, %v1307, %v1543
      %1545 = vst [vmem:[%s965 + $0x60] sm:$0xf] %v1544
      %1546 = vst [vmem:[%s965 + $0x64] sm:$0xf] %v1316
      %v1547 = vld [vmem:[%s965 + $0x68] sm:$0x1]
      %v1548 = vsel %vm968, %v1317, %v1547
      %1549 = vst [vmem:[%s965 + $0x68] sm:$0x1] %v1548
      %v1550 = vld [vmem:[%s965 + $0x6c] sm:$0xf]
      %v1551 = vsel %vm1486, %v1324, %v1550
      %1552 = vst [vmem:[%s965 + $0x6c] sm:$0xf] %v1551
      %1553 = vst [vmem:[%s965 + $0x70] sm:$0xf] %v1333
      %v1554 = vld [vmem:[%s965 + $0x74] sm:$0x1]
      %v1555 = vsel %vm968, %v1334, %v1554
      %1556 = vst [vmem:[%s965 + $0x74] sm:$0x1] %v1555
      %v1557 = vld [vmem:[%s965 + $0x78] sm:$0xf]
      %v1558 = vsel %vm1486, %v1341, %v1557
      %1559 = vst [vmem:[%s965 + $0x78] sm:$0xf] %v1558
      %1560 = vst [vmem:[%s965 + $0x7c] sm:$0xf] %v1350
      %v1561 = vld [vmem:[%s965 + $0x80] sm:$0x1]
      %v1562 = vsel %vm968, %v1351, %v1561
      %1563 = vst [vmem:[%s965 + $0x80] sm:$0x1] %v1562
      %v1564 = vld [vmem:[%s965 + $0x84] sm:$0xf]
      %v1565 = vsel %vm1486, %v1358, %v1564
      %1566 = vst [vmem:[%s965 + $0x84] sm:$0xf] %v1565
      %1567 = vst [vmem:[%s965 + $0x88] sm:$0xf] %v1367
      %v1568 = vld [vmem:[%s965 + $0x8c] sm:$0x1]
      %v1569 = vsel %vm968, %v1368, %v1568
      %1570 = vst [vmem:[%s965 + $0x8c] sm:$0x1] %v1569
      %v1571 = vld [vmem:[%s965 + $0x90] sm:$0xf]
      %v1572 = vsel %vm1486, %v1375, %v1571
      %1573 = vst [vmem:[%s965 + $0x90] sm:$0xf] %v1572
      %1574 = vst [vmem:[%s965 + $0x94] sm:$0xf] %v1384
      %v1575 = vld [vmem:[%s965 + $0x98] sm:$0x1]
      %v1576 = vsel %vm968, %v1385, %v1575
      %1577 = vst [vmem:[%s965 + $0x98] sm:$0x1] %v1576
      %v1578 = vld [vmem:[%s965 + $0x9c] sm:$0xf]
      %v1579 = vsel %vm1486, %v1392, %v1578
      %1580 = vst [vmem:[%s965 + $0x9c] sm:$0xf] %v1579
      %1581 = vst [vmem:[%s965 + $0xa0] sm:$0xf] %v1401
      %v1582 = vld [vmem:[%s965 + $0xa4] sm:$0x1]
      %v1583 = vsel %vm968, %v1402, %v1582
      %1584 = vst [vmem:[%s965 + $0xa4] sm:$0x1] %v1583
      %v1585 = vld [vmem:[%s965 + $0xa8] sm:$0xf]
      %v1586 = vsel %vm1486, %v1409, %v1585
      %1587 = vst [vmem:[%s965 + $0xa8] sm:$0xf] %v1586
      %1588 = vst [vmem:[%s965 + $0xac] sm:$0xf] %v1418
      %v1589 = vld [vmem:[%s965 + $0xb0] sm:$0x1]
      %v1590 = vsel %vm968, %v1419, %v1589
      %1591 = vst [vmem:[%s965 + $0xb0] sm:$0x1] %v1590
      %v1592 = vld [vmem:[%s965 + $0xb4] sm:$0xf]
      %v1593 = vsel %vm1486, %v1426, %v1592
      %1594 = vst [vmem:[%s965 + $0xb4] sm:$0xf] %v1593
      %1595 = vst [vmem:[%s965 + $0xb8] sm:$0xf] %v1435
      %v1596 = vld [vmem:[%s965 + $0xbc] sm:$0x1]
      %v1597 = vsel %vm968, %v1436, %v1596
      %1598 = vst [vmem:[%s965 + $0xbc] sm:$0x1] %v1597
      %v1599 = vld [vmem:[%s4] sm:$0x1]
      %v1600 = vld [vmem:[#allocation2] sm:$0xf]
      %v1601 = vld [vmem:[#allocation2 + $0x4] sm:$0xf]
      %v1602 = vld [vmem:[#allocation2 + $0x8] sm:$0xf]
      %v1603 = vld [vmem:[#allocation2 + $0xc] sm:$0xf]
      %v1604 = vld [vmem:[#allocation2 + $0x10] sm:$0xf]
      %v1605 = vld [vmem:[#allocation2 + $0x14] sm:$0xf]
      %v1606 = vld [vmem:[#allocation2 + $0x18] sm:$0xf]
      %v1607 = vld [vmem:[#allocation2 + $0x1c] sm:$0xf]
      %v1608 = vld [vmem:[#allocation2 + $0x20] sm:$0xf]
      %v1609 = vld [vmem:[#allocation2 + $0x24] sm:$0xf]
      %v1610 = vld [vmem:[#allocation2 + $0x28] sm:$0xf]
      %v1611 = vld [vmem:[#allocation2 + $0x2c] sm:$0xf]
      %v1612 = vld [vmem:[#allocation2 + $0x30] sm:$0xf]
      %v1613 = vld [vmem:[#allocation2 + $0x34] sm:$0xf]
      %v1614 = vld [vmem:[#allocation2 + $0x38] sm:$0xf]
      %v1615 = vld [vmem:[#allocation2 + $0x3c] sm:$0xf]
      %v1616 = vld [vmem:[#allocation2 + $0x40] sm:$0xf]
      %v1617 = vld [vmem:[#allocation2 + $0x44] sm:$0xf]
      %v1618 = vld [vmem:[#allocation2 + $0x48] sm:$0xf]
      %v1619 = vld [vmem:[#allocation2 + $0x4c] sm:$0xf]
      %v1620 = vld [vmem:[#allocation2 + $0x50] sm:$0xf]
      %v1621 = vld [vmem:[#allocation2 + $0x54] sm:$0xf]
      %v1622 = vld [vmem:[#allocation2 + $0x58] sm:$0xf]
      %v1623 = vld [vmem:[#allocation2 + $0x5c] sm:$0xf]
      %v1624 = vld [vmem:[#allocation2 + $0x60] sm:$0xf]
      %v1625 = vld [vmem:[#allocation2 + $0x64] sm:$0xf]
      %v1626 = vld [vmem:[#allocation2 + $0x68] sm:$0xf]
      %v1627 = vld [vmem:[#allocation2 + $0x6c] sm:$0xf]
      %v1628 = vld [vmem:[#allocation2 + $0x70] sm:$0xf]
      %v1629 = vld [vmem:[#allocation2 + $0x74] sm:$0xf]
      %v1630 = vld [vmem:[#allocation2 + $0x78] sm:$0xf]
      %v1631 = vld [vmem:[#allocation2 + $0x7c] sm:$0xf]
      %v1632 = vld [vmem:[#allocation2 + $0x80] sm:$0xf]
      %v1633 = vld [vmem:[#allocation2 + $0x84] sm:$0xf]
      %v1634 = vld [vmem:[#allocation2 + $0x88] sm:$0xf]
      %v1635 = vld [vmem:[#allocation2 + $0x8c] sm:$0xf]
      %v1636 = vld [vmem:[#allocation2 + $0x90] sm:$0xf]
      %v1637 = vld [vmem:[#allocation2 + $0x94] sm:$0xf]
      %v1638 = vld [vmem:[#allocation2 + $0x98] sm:$0xf]
      %v1639 = vld [vmem:[#allocation2 + $0x9c] sm:$0xf]
      %v1640 = vld [vmem:[#allocation2 + $0xa0] sm:$0xf]
      %v1641 = vld [vmem:[#allocation2 + $0xa4] sm:$0xf]
      %v1642 = vld [vmem:[#allocation2 + $0xa8] sm:$0xf]
      %v1643 = vld [vmem:[#allocation2 + $0xac] sm:$0xf]
      %v1644 = vld [vmem:[#allocation2 + $0xb0] sm:$0xf]
      %v1645 = vld [vmem:[#allocation2 + $0xb4] sm:$0xf]
      %v1646 = vld [vmem:[#allocation2 + $0xb8] sm:$0xf]
      %v1647 = vld [vmem:[#allocation2 + $0xbc] sm:$0xf]
      %v1648 = vld [vmem:[#allocation2 + $0xc0] sm:$0xf]
      %v1649 = vld [vmem:[#allocation2 + $0xc4] sm:$0xf]
      %v1650 = vld [vmem:[#allocation2 + $0xc8] sm:$0xf]
      %v1651 = vld [vmem:[#allocation2 + $0xcc] sm:$0xf]
      %v1652 = vld [vmem:[#allocation2 + $0xd0] sm:$0xf]
      %v1653 = vld [vmem:[#allocation2 + $0xd4] sm:$0xf]
      %v1690 = vunpack.c.l.b16 %v1600
      %v1691 = vunpack.c.l.b16 %v1601
      %v1692 = vunpack.c.l.b16 %v1603
      %v1693 = vunpack.c.l.b16 %v1604
      %v1694 = vunpack.c.l.b16 %v1606
      %v1695 = vunpack.c.l.b16 %v1607
      %v1696 = vunpack.c.l.b16 %v1609
      %v1697 = vunpack.c.l.b16 %v1610
      %v1698 = vunpack.c.l.b16 %v1612
      %v1699 = vunpack.c.l.b16 %v1613
      %v1700 = vunpack.c.l.b16 %v1615
      %v1701 = vunpack.c.l.b16 %v1616
      %v1702 = vunpack.c.l.b16 %v1618
      %v1703 = vunpack.c.l.b16 %v1619
      %v1704 = vunpack.c.l.b16 %v1621
      %v1705 = vunpack.c.l.b16 %v1622
      %v1706 = vunpack.c.l.b16 %v1624
      %v1707 = vunpack.c.l.b16 %v1625
      %v1708 = vunpack.c.l.b16 %v1627
      %v1709 = vunpack.c.l.b16 %v1628
      %v1710 = vunpack.c.l.b16 %v1630
      %v1711 = vunpack.c.l.b16 %v1631
      %v1712 = vunpack.c.l.b16 %v1633
      %v1713 = vunpack.c.l.b16 %v1634
      %v1714 = vunpack.c.l.b16 %v1636
      %v1715 = vunpack.c.l.b16 %v1637
      %v1716 = vunpack.c.l.b16 %v1639
      %v1717 = vunpack.c.l.b16 %v1640
      %v1718 = vunpack.c.l.b16 %v1642
      %v1719 = vunpack.c.l.b16 %v1643
      %v1720 = vunpack.c.l.b16 %v1645
      %v1721 = vunpack.c.l.b16 %v1646
      %v1722 = vunpack.c.l.b16 %v1648
      %v1723 = vunpack.c.l.b16 %v1649
      %v1724 = vunpack.c.l.b16 %v1651
      %v1725 = vunpack.c.l.b16 %v1652
      %v1726 = vpack.c.b16 %v1691, %v1690
      %v1727 = vpack.c.b16 %v1693, %v1692
      %v1728 = vpack.c.b16 %v1695, %v1694
      %v1729 = vpack.c.b16 %v1697, %v1696
      %v1730 = vpack.c.b16 %v1699, %v1698
      %v1731 = vpack.c.b16 %v1701, %v1700
      %v1732 = vpack.c.b16 %v1703, %v1702
      %v1733 = vpack.c.b16 %v1705, %v1704
      %v1734 = vpack.c.b16 %v1707, %v1706
      %v1735 = vpack.c.b16 %v1709, %v1708
      %v1736 = vpack.c.b16 %v1711, %v1710
      %v1737 = vpack.c.b16 %v1713, %v1712
      %v1738 = vpack.c.b16 %v1715, %v1714
      %v1739 = vpack.c.b16 %v1717, %v1716
      %v1740 = vpack.c.b16 %v1719, %v1718
      %v1741 = vpack.c.b16 %v1721, %v1720
      %v1742 = vpack.c.b16 %v1723, %v1722
      %v1743 = vpack.c.b16 %v1725, %v1724
      %v1780 = vunpack.c.l.b16 %v1602
      %v1781 = vunpack.c.l.b16 %v1605
      %v1782 = vunpack.c.l.b16 %v1608
      %v1783 = vunpack.c.l.b16 %v1611
      %v1784 = vunpack.c.l.b16 %v1614
      %v1785 = vunpack.c.l.b16 %v1617
      %v1786 = vunpack.c.l.b16 %v1620
      %v1787 = vunpack.c.l.b16 %v1623
      %v1788 = vunpack.c.l.b16 %v1626
      %v1789 = vunpack.c.l.b16 %v1629
      %v1790 = vunpack.c.l.b16 %v1632
      %v1791 = vunpack.c.l.b16 %v1635
      %v1792 = vunpack.c.l.b16 %v1638
      %v1793 = vunpack.c.l.b16 %v1641
      %v1794 = vunpack.c.l.b16 %v1644
      %v1795 = vunpack.c.l.b16 %v1647
      %v1796 = vunpack.c.l.b16 %v1650
      %v1797 = vunpack.c.l.b16 %v1653
      %v1798 = vpack.c.b16 %v1780, %v1780
      %v1799 = vpack.c.b16 %v1781, %v1781
      %v1800 = vpack.c.b16 %v1782, %v1782
      %v1801 = vpack.c.b16 %v1783, %v1783
      %v1802 = vpack.c.b16 %v1784, %v1784
      %v1803 = vpack.c.b16 %v1785, %v1785
      %v1804 = vpack.c.b16 %v1786, %v1786
      %v1805 = vpack.c.b16 %v1787, %v1787
      %v1806 = vpack.c.b16 %v1788, %v1788
      %v1807 = vpack.c.b16 %v1789, %v1789
      %v1808 = vpack.c.b16 %v1790, %v1790
      %v1809 = vpack.c.b16 %v1791, %v1791
      %v1810 = vpack.c.b16 %v1792, %v1792
      %v1811 = vpack.c.b16 %v1793, %v1793
      %v1812 = vpack.c.b16 %v1794, %v1794
      %v1813 = vpack.c.b16 %v1795, %v1795
      %v1814 = vpack.c.b16 %v1796, %v1796
      %v1815 = vpack.c.b16 %v1797, %v1797
      %vm1816 = vsmask.f32 7424
      %v1818 = vshrl.u32 %v1726, 16
      %v1820 = vshll.u32 %v1726, 16
      %v1822 = vrot.slane %v1820, 1
      %v1823 = vor.u32 %v1818, %v1822
      %v1825 = vshll.u32 %v1798, 16
      %v1827 = vrot.slane %v1825, 1
      %v1828 = vsel %vm1816, %v1823, %v1827
      %v1830 = vshrl.u32 %v1727, 16
      %v1832 = vshll.u32 %v1727, 16
      %v1834 = vrot.slane %v1832, 1
      %v1835 = vor.u32 %v1830, %v1834
      %v1837 = vshll.u32 %v1799, 16
      %v1839 = vrot.slane %v1837, 1
      %v1840 = vsel %vm1816, %v1835, %v1839
      %v1842 = vshrl.u32 %v1728, 16
      %v1844 = vshll.u32 %v1728, 16
      %v1846 = vrot.slane %v1844, 1
      %v1847 = vor.u32 %v1842, %v1846
      %v1849 = vshll.u32 %v1800, 16
      %v1851 = vrot.slane %v1849, 1
      %v1852 = vsel %vm1816, %v1847, %v1851
      %v1854 = vshrl.u32 %v1729, 16
      %v1856 = vshll.u32 %v1729, 16
      %v1858 = vrot.slane %v1856, 1
      %v1859 = vor.u32 %v1854, %v1858
      %v1861 = vshll.u32 %v1801, 16
      %v1863 = vrot.slane %v1861, 1
      %v1864 = vsel %vm1816, %v1859, %v1863
      %v1866 = vshrl.u32 %v1730, 16
      %v1868 = vshll.u32 %v1730, 16
      %v1870 = vrot.slane %v1868, 1
      %v1871 = vor.u32 %v1866, %v1870
      %v1873 = vshll.u32 %v1802, 16
      %v1875 = vrot.slane %v1873, 1
      %v1876 = vsel %vm1816, %v1871, %v1875
      %v1878 = vshrl.u32 %v1731, 16
      %v1880 = vshll.u32 %v1731, 16
      %v1882 = vrot.slane %v1880, 1
      %v1883 = vor.u32 %v1878, %v1882
      %v1885 = vshll.u32 %v1803, 16
      %v1887 = vrot.slane %v1885, 1
      %v1888 = vsel %vm1816, %v1883, %v1887
      %v1890 = vshrl.u32 %v1732, 16
      %v1892 = vshll.u32 %v1732, 16
      %v1894 = vrot.slane %v1892, 1
      %v1895 = vor.u32 %v1890, %v1894
      %v1897 = vshll.u32 %v1804, 16
      %v1899 = vrot.slane %v1897, 1
      %v1900 = vsel %vm1816, %v1895, %v1899
      %v1902 = vshrl.u32 %v1733, 16
      %v1904 = vshll.u32 %v1733, 16
      %v1906 = vrot.slane %v1904, 1
      %v1907 = vor.u32 %v1902, %v1906
      %v1909 = vshll.u32 %v1805, 16
      %v1911 = vrot.slane %v1909, 1
      %v1912 = vsel %vm1816, %v1907, %v1911
      %v1914 = vshrl.u32 %v1734, 16
      %v1916 = vshll.u32 %v1734, 16
      %v1918 = vrot.slane %v1916, 1
      %v1919 = vor.u32 %v1914, %v1918
      %v1921 = vshll.u32 %v1806, 16
      %v1923 = vrot.slane %v1921, 1
      %v1924 = vsel %vm1816, %v1919, %v1923
      %v1926 = vshrl.u32 %v1735, 16
      %v1928 = vshll.u32 %v1735, 16
      %v1930 = vrot.slane %v1928, 1
      %v1931 = vor.u32 %v1926, %v1930
      %v1933 = vshll.u32 %v1807, 16
      %v1935 = vrot.slane %v1933, 1
      %v1936 = vsel %vm1816, %v1931, %v1935
      %v1938 = vshrl.u32 %v1736, 16
      %v1940 = vshll.u32 %v1736, 16
      %v1942 = vrot.slane %v1940, 1
      %v1943 = vor.u32 %v1938, %v1942
      %v1945 = vshll.u32 %v1808, 16
      %v1947 = vrot.slane %v1945, 1
      %v1948 = vsel %vm1816, %v1943, %v1947
      %v1950 = vshrl.u32 %v1737, 16
      %v1952 = vshll.u32 %v1737, 16
      %v1954 = vrot.slane %v1952, 1
      %v1955 = vor.u32 %v1950, %v1954
      %v1957 = vshll.u32 %v1809, 16
      %v1959 = vrot.slane %v1957, 1
      %v1960 = vsel %vm1816, %v1955, %v1959
      %v1962 = vshrl.u32 %v1738, 16
      %v1964 = vshll.u32 %v1738, 16
      %v1966 = vrot.slane %v1964, 1
      %v1967 = vor.u32 %v1962, %v1966
      %v1969 = vshll.u32 %v1810, 16
      %v1971 = vrot.slane %v1969, 1
      %v1972 = vsel %vm1816, %v1967, %v1971
      %v1974 = vshrl.u32 %v1739, 16
      %v1976 = vshll.u32 %v1739, 16
      %v1978 = vrot.slane %v1976, 1
      %v1979 = vor.u32 %v1974, %v1978
      %v1981 = vshll.u32 %v1811, 16
      %v1983 = vrot.slane %v1981, 1
      %v1984 = vsel %vm1816, %v1979, %v1983
      %v1986 = vshrl.u32 %v1740, 16
      %v1988 = vshll.u32 %v1740, 16
      %v1990 = vrot.slane %v1988, 1
      %v1991 = vor.u32 %v1986, %v1990
      %v1993 = vshll.u32 %v1812, 16
      %v1995 = vrot.slane %v1993, 1
      %v1996 = vsel %vm1816, %v1991, %v1995
      %v1998 = vshrl.u32 %v1741, 16
      %v2000 = vshll.u32 %v1741, 16
      %v2002 = vrot.slane %v2000, 1
      %v2003 = vor.u32 %v1998, %v2002
      %v2005 = vshll.u32 %v1813, 16
      %v2007 = vrot.slane %v2005, 1
      %v2008 = vsel %vm1816, %v2003, %v2007
      %v2010 = vshrl.u32 %v1742, 16
      %v2012 = vshll.u32 %v1742, 16
      %v2014 = vrot.slane %v2012, 1
      %v2015 = vor.u32 %v2010, %v2014
      %v2017 = vshll.u32 %v1814, 16
      %v2019 = vrot.slane %v2017, 1
      %v2020 = vsel %vm1816, %v2015, %v2019
      %v2022 = vshrl.u32 %v1743, 16
      %v2024 = vshll.u32 %v1743, 16
      %v2026 = vrot.slane %v2024, 1
      %v2027 = vor.u32 %v2022, %v2026
      %v2029 = vshll.u32 %v1815, 16
      %v2031 = vrot.slane %v2029, 1
      %v2032 = vsel %vm1816, %v2027, %v2031
      %vm2051 = vcmask 1046528
      %v2052 = vrot.slane %v1726, 1
      %v2053 = vrot.slane %v1798, 1
      %v2054 = vsel %vm2051, %v2052, %v2053
      %v2055 = vrot.slane %v1727, 1
      %v2056 = vrot.slane %v1799, 1
      %v2057 = vsel %vm2051, %v2055, %v2056
      %v2058 = vrot.slane %v1728, 1
      %v2059 = vrot.slane %v1800, 1
      %v2060 = vsel %vm2051, %v2058, %v2059
      %v2061 = vrot.slane %v1729, 1
      %v2062 = vrot.slane %v1801, 1
      %v2063 = vsel %vm2051, %v2061, %v2062
      %v2064 = vrot.slane %v1730, 1
      %v2065 = vrot.slane %v1802, 1
      %v2066 = vsel %vm2051, %v2064, %v2065
      %v2067 = vrot.slane %v1731, 1
      %v2068 = vrot.slane %v1803, 1
      %v2069 = vsel %vm2051, %v2067, %v2068
      %v2070 = vrot.slane %v1732, 1
      %v2071 = vrot.slane %v1804, 1
      %v2072 = vsel %vm2051, %v2070, %v2071
      %v2073 = vrot.slane %v1733, 1
      %v2074 = vrot.slane %v1805, 1
      %v2075 = vsel %vm2051, %v2073, %v2074
      %v2076 = vrot.slane %v1734, 1
      %v2077 = vrot.slane %v1806, 1
      %v2078 = vsel %vm2051, %v2076, %v2077
      %v2079 = vrot.slane %v1735, 1
      %v2080 = vrot.slane %v1807, 1
      %v2081 = vsel %vm2051, %v2079, %v2080
      %v2082 = vrot.slane %v1736, 1
      %v2083 = vrot.slane %v1808, 1
      %v2084 = vsel %vm2051, %v2082, %v2083
      %v2085 = vrot.slane %v1737, 1
      %v2086 = vrot.slane %v1809, 1
      %v2087 = vsel %vm2051, %v2085, %v2086
      %v2088 = vrot.slane %v1738, 1
      %v2089 = vrot.slane %v1810, 1
      %v2090 = vsel %vm2051, %v2088, %v2089
      %v2091 = vrot.slane %v1739, 1
      %v2092 = vrot.slane %v1811, 1
      %v2093 = vsel %vm2051, %v2091, %v2092
      %v2094 = vrot.slane %v1740, 1
      %v2095 = vrot.slane %v1812, 1
      %v2096 = vsel %vm2051, %v2094, %v2095
      %v2097 = vrot.slane %v1741, 1
      %v2098 = vrot.slane %v1813, 1
      %v2099 = vsel %vm2051, %v2097, %v2098
      %v2100 = vrot.slane %v1742, 1
      %v2101 = vrot.slane %v1814, 1
      %v2102 = vsel %vm2051, %v2100, %v2101
      %v2103 = vrot.slane %v1743, 1
      %v2104 = vrot.slane %v1815, 1
      %v2105 = vsel %vm2051, %v2103, %v2104
      %v2124 = vld [vmem:[%s3] sm:$0xf]
      %v2125 = vld [vmem:[%s3 + $0x4] sm:$0xf]
      %v2126 = vld [vmem:[%s3 + $0x8] sm:$0xf]
      %v2127 = vld [vmem:[%s3 + $0xc] sm:$0xf]
      %v2128 = vld [vmem:[%s3 + $0x10] sm:$0xf]
      %v2129 = vld [vmem:[%s3 + $0x14] sm:$0xf]
      %v2130 = vld [vmem:[%s3 + $0x18] sm:$0xf]
      %v2131 = vld [vmem:[%s3 + $0x1c] sm:$0xf]
      %v2132 = vld [vmem:[%s3 + $0x20] sm:$0xf]
      %v2133 = vld [vmem:[%s3 + $0x24] sm:$0xf]
      %v2134 = vld [vmem:[%s3 + $0x28] sm:$0xf]
      %v2135 = vld [vmem:[%s3 + $0x2c] sm:$0xf]
      %v2136 = vld [vmem:[%s3 + $0x30] sm:$0xf]
      %v2137 = vld [vmem:[%s3 + $0x34] sm:$0xf]
      %v2138 = vld [vmem:[%s3 + $0x38] sm:$0xf]
      %v2139 = vld [vmem:[%s3 + $0x3c] sm:$0xf]
      %v2140 = vld [vmem:[%s3 + $0x40] sm:$0xf]
      %v2141 = vld [vmem:[%s3 + $0x44] sm:$0xf]
      %v2142 = vld [vmem:[%s3 + $0x48] sm:$0xf]
      %v2143 = vld [vmem:[%s3 + $0x4c] sm:$0xf]
      %v2144 = vld [vmem:[%s3 + $0x50] sm:$0xf]
      %v2145 = vld [vmem:[%s3 + $0x54] sm:$0xf]
      %v2146 = vld [vmem:[%s3 + $0x58] sm:$0xf]
      %v2147 = vld [vmem:[%s3 + $0x5c] sm:$0xf]
      %v2148 = vld [vmem:[%s3 + $0x60] sm:$0xf]
      %v2149 = vld [vmem:[%s3 + $0x64] sm:$0xf]
      %v2150 = vld [vmem:[%s3 + $0x68] sm:$0xf]
      %v2151 = vld [vmem:[%s3 + $0x6c] sm:$0xf]
      %v2152 = vld [vmem:[%s3 + $0x70] sm:$0xf]
      %v2153 = vld [vmem:[%s3 + $0x74] sm:$0xf]
      %v2154 = vld [vmem:[%s3 + $0x78] sm:$0xf]
      %v2155 = vld [vmem:[%s3 + $0x7c] sm:$0xf]
      %v2156 = vld [vmem:[%s3 + $0x80] sm:$0xf]
      %v2157 = vld [vmem:[%s3 + $0x84] sm:$0xf]
      %v2158 = vld [vmem:[%s3 + $0x88] sm:$0xf]
      %v2159 = vld [vmem:[%s3 + $0x8c] sm:$0xf]
      %v2160 = vld [vmem:[%s3 + $0x90] sm:$0xf]
      %v2161 = vld [vmem:[%s3 + $0x94] sm:$0xf]
      %v2162 = vld [vmem:[%s3 + $0x98] sm:$0xf]
      %v2163 = vld [vmem:[%s3 + $0x9c] sm:$0xf]
      %v2164 = vld [vmem:[%s3 + $0xa0] sm:$0xf]
      %v2165 = vld [vmem:[%s3 + $0xa4] sm:$0xf]
      %v2166 = vld [vmem:[%s3 + $0xa8] sm:$0xf]
      %v2167 = vld [vmem:[%s3 + $0xac] sm:$0xf]
      %v2168 = vld [vmem:[%s3 + $0xb0] sm:$0xf]
      %v2169 = vld [vmem:[%s3 + $0xb4] sm:$0xf]
      %v2170 = vld [vmem:[%s3 + $0xb8] sm:$0xf]
      %v2171 = vld [vmem:[%s3 + $0xbc] sm:$0xf]
      %v2173 = vlaneseq
      %v2174 = vshrl.u32 %v2173, 7
      %v2175 = vsub.s32 0, %v2174
      %v2176 = vrot.slane %v1599, %v2175
      %v2226 = vunpack.c.l.b16 %v2124
      %v2227 = vunpack.c.l.b16 %v2125
      %v2228 = vunpack.c.l.b16 %v2126
      %v2229 = vunpack.c.l.b16 %v2127
      %v2230 = vunpack.c.l.b16 %v2128
      %v2231 = vunpack.c.l.b16 %v2129
      %v2232 = vunpack.c.l.b16 %v2130
      %v2233 = vunpack.c.l.b16 %v2131
      %v2234 = vunpack.c.l.b16 %v2132
      %v2235 = vunpack.c.l.b16 %v2133
      %v2236 = vunpack.c.l.b16 %v2134
      %v2237 = vunpack.c.l.b16 %v2135
      %v2238 = vunpack.c.l.b16 %v2136
      %v2239 = vunpack.c.l.b16 %v2137
      %v2240 = vunpack.c.l.b16 %v2138
      %v2241 = vunpack.c.l.b16 %v2139
      %v2242 = vunpack.c.l.b16 %v2140
      %v2243 = vunpack.c.l.b16 %v2141
      %v2244 = vunpack.c.l.b16 %v2142
      %v2245 = vunpack.c.l.b16 %v2143
      %v2246 = vunpack.c.l.b16 %v2144
      %v2247 = vunpack.c.l.b16 %v2145
      %v2248 = vunpack.c.l.b16 %v2146
      %v2249 = vunpack.c.l.b16 %v2147
      %v2250 = vunpack.c.l.b16 %v2148
      %v2251 = vunpack.c.l.b16 %v2149
      %v2252 = vunpack.c.l.b16 %v2150
      %v2253 = vunpack.c.l.b16 %v2151
      %v2254 = vunpack.c.l.b16 %v2152
      %v2255 = vunpack.c.l.b16 %v2153
      %v2256 = vunpack.c.l.b16 %v2154
      %v2257 = vunpack.c.l.b16 %v2155
      %v2258 = vunpack.c.l.b16 %v2156
      %v2259 = vunpack.c.l.b16 %v2157
      %v2260 = vunpack.c.l.b16 %v2158
      %v2261 = vunpack.c.l.b16 %v2159
      %v2262 = vunpack.c.l.b16 %v2160
      %v2263 = vunpack.c.l.b16 %v2161
      %v2264 = vunpack.c.l.b16 %v2162
      %v2265 = vunpack.c.l.b16 %v2163
      %v2266 = vunpack.c.l.b16 %v2164
      %v2267 = vunpack.c.l.b16 %v2165
      %v2268 = vunpack.c.l.b16 %v2166
      %v2269 = vunpack.c.l.b16 %v2167
      %v2270 = vunpack.c.l.b16 %v2168
      %v2271 = vunpack.c.l.b16 %v2169
      %v2272 = vunpack.c.l.b16 %v2170
      %v2273 = vunpack.c.l.b16 %v2171
      %v2274 = vpack.c.b16 %v2227, %v2226
      %v2275 = vpack.c.b16 %v2229, %v2228
      %v2276 = vpack.c.b16 %v2231, %v2230
      %v2277 = vpack.c.b16 %v2233, %v2232
      %v2278 = vpack.c.b16 %v2235, %v2234
      %v2279 = vpack.c.b16 %v2237, %v2236
      %v2280 = vpack.c.b16 %v2239, %v2238
      %v2281 = vpack.c.b16 %v2241, %v2240
      %v2282 = vpack.c.b16 %v2243, %v2242
      %v2283 = vpack.c.b16 %v2245, %v2244
      %v2284 = vpack.c.b16 %v2247, %v2246
      %v2285 = vpack.c.b16 %v2249, %v2248
      %v2286 = vpack.c.b16 %v2251, %v2250
      %v2287 = vpack.c.b16 %v2253, %v2252
      %v2288 = vpack.c.b16 %v2255, %v2254
      %v2289 = vpack.c.b16 %v2257, %v2256
      %v2290 = vpack.c.b16 %v2259, %v2258
      %v2291 = vpack.c.b16 %v2261, %v2260
      %v2292 = vpack.c.b16 %v2263, %v2262
      %v2293 = vpack.c.b16 %v2265, %v2264
      %v2294 = vpack.c.b16 %v2267, %v2266
      %v2295 = vpack.c.b16 %v2269, %v2268
      %v2296 = vpack.c.b16 %v2271, %v2270
      %v2297 = vpack.c.b16 %v2273, %v2272
      %2322 = vmatprep.subr.bf16.mxu0 0
      %2323 = vmatpush1.bf16.msra.mxu0 %v2274
      %2324 = vmatprep.subr.bf16.mxu0 0
      %2325 = vmatpush1.bf16.msra.mxu0 %v2275
      %2326 = vmatprep.subr.bf16.mxu0 0
      %2327 = vmatpush1.bf16.msra.mxu0 %v2276
      %2328 = vmatprep.subr.bf16.mxu0 0
      %2329 = vmatpush1.bf16.msra.mxu0 %v2277
      %2330 = vmatprep.subr.bf16.mxu0 0
      %2331 = vmatpush1.bf16.msra.mxu0 %v2278
      %2332 = vmatprep.subr.bf16.mxu0 0
      %2333 = vmatpush1.bf16.msra.mxu0 %v2279
      %2334 = vmatprep.subr.bf16.mxu0 0
      %2335 = vmatpush1.bf16.msra.mxu0 %v2280
      %2336 = vmatprep.subr.bf16.mxu0 0
      %2337 = vmatpush1.bf16.msra.mxu0 %v2281
      %2338 = vmatprep.subr.bf16.mxu0 0
      %2339 = vmatpush1.bf16.msra.mxu0 %v2282
      %2340 = vmatprep.subr.bf16.mxu0 0
      %2341 = vmatpush1.bf16.msra.mxu0 %v2283
      %2342 = vmatprep.subr.bf16.mxu0 0
      %2343 = vmatpush1.bf16.msra.mxu0 %v2284
      %2344 = vmatprep.subr.bf16.mxu0 0
      %2345 = vmatpush1.bf16.msra.mxu0 %v2285
      %2346 = vmatprep.subr.bf16.mxu0 0
      %2347 = vmatpush1.bf16.msra.mxu0 %v2286
      %2348 = vmatprep.subr.bf16.mxu0 0
      %2349 = vmatpush1.bf16.msra.mxu0 %v2287
      %2350 = vmatprep.subr.bf16.mxu0 0
      %2351 = vmatpush1.bf16.msra.mxu0 %v2288
      %2352 = vmatprep.subr.bf16.mxu0 0
      %2353 = vmatpush1.bf16.msra.mxu0 %v2289
      %2354 = vmatprep.mubr.bf16.mxu0 %v1828
      %2355 = vmatmul.mubr.bf16.gmra.mrb[0].mxu0 %v1726
      %v2356 = vpop.f32.mrb[0].mxu0
      %v2357 = vadd.f32 %v2176, %v2356
      %v2358 = vpop.f32.mrb[0].mxu0
      %v2359 = vpop.f32.mrb[0].mxu0
      %v2360 = vadd.f32 %v2176, %v2359
      %v2361 = vpop.f32.mrb[0].mxu0
      %2362 = vmatprep.mubr.bf16.mxu0 %v1840
      %2363 = vmatmul.mubr.bf16.gmra.mrb[0].mxu0 %v1727
      %v2364 = vpop.f32.mrb[0].mxu0
      %v2365 = vadd.f32 %v2176, %v2364
      %v2366 = vpop.f32.mrb[0].mxu0
      %v2367 = vpop.f32.mrb[0].mxu0
      %v2368 = vadd.f32 %v2176, %v2367
      %v2369 = vpop.f32.mrb[0].mxu0
      %2370 = vmatprep.mubr.bf16.mxu0 %v1852
      %2371 = vmatmul.mubr.bf16.gmra.mrb[0].mxu0 %v1728
      %v2372 = vpop.f32.mrb[0].mxu0
      %v2373 = vadd.f32 %v2176, %v2372
      %v2374 = vpop.f32.mrb[0].mxu0
      %v2375 = vpop.f32.mrb[0].mxu0
      %v2376 = vadd.f32 %v2176, %v2375
      %v2377 = vpop.f32.mrb[0].mxu0
      %2378 = vmatprep.mubr.bf16.mxu0 %v1864
      %2379 = vmatmul.mubr.bf16.gmra.mrb[0].mxu0 %v1729
      %v2380 = vpop.f32.mrb[0].mxu0
      %v2381 = vadd.f32 %v2176, %v2380
      %v2382 = vpop.f32.mrb[0].mxu0
      %v2383 = vpop.f32.mrb[0].mxu0
      %v2384 = vadd.f32 %v2176, %v2383
      %v2385 = vpop.f32.mrb[0].mxu0
      %2386 = vmatprep.mubr.bf16.mxu0 %v1876
      %2387 = vmatmul.mubr.bf16.gmra.mrb[0].mxu0 %v1730
      %v2388 = vpop.f32.mrb[0].mxu0
      %v2389 = vadd.f32 %v2176, %v2388
      %v2390 = vpop.f32.mrb[0].mxu0
      %v2391 = vpop.f32.mrb[0].mxu0
      %v2392 = vadd.f32 %v2176, %v2391
      %v2393 = vpop.f32.mrb[0].mxu0
      %2394 = vmatprep.mubr.bf16.mxu0 %v1888
      %2395 = vmatmul.mubr.bf16.gmra.mrb[0].mxu0 %v1731
      %v2396 = vpop.f32.mrb[0].mxu0
      %v2397 = vadd.f32 %v2176, %v2396
      %v2398 = vpop.f32.mrb[0].mxu0
      %v2399 = vpop.f32.mrb[0].mxu0
      %v2400 = vadd.f32 %v2176, %v2399
      %v2401 = vpop.f32.mrb[0].mxu0
      %2402 = vmatprep.mubr.bf16.mxu0 %v1900
      %2403 = vmatmul.mubr.bf16.gmra.mrb[0].mxu0 %v1732
      %v2404 = vpop.f32.mrb[0].mxu0
      %v2405 = vadd.f32 %v2176, %v2404
      %v2406 = vpop.f32.mrb[0].mxu0
      %v2407 = vpop.f32.mrb[0].mxu0
      %v2408 = vadd.f32 %v2176, %v2407
      %v2409 = vpop.f32.mrb[0].mxu0
      %2410 = vmatprep.mubr.bf16.mxu0 %v1912
      %2411 = vmatmul.mubr.bf16.gmra.mrb[0].mxu0 %v1733
      %v2412 = vpop.f32.mrb[0].mxu0
      %v2413 = vadd.f32 %v2176, %v2412
      %v2414 = vpop.f32.mrb[0].mxu0
      %v2415 = vpop.f32.mrb[0].mxu0
      %v2416 = vadd.f32 %v2176, %v2415
      %v2417 = vpop.f32.mrb[0].mxu0
      %2418 = vmatprep.mubr.bf16.mxu0 %v1924
      %2419 = vmatmul.mubr.bf16.gmra.mrb[0].mxu0 %v1734
      %v2420 = vpop.f32.mrb[0].mxu0
      %v2421 = vadd.f32 %v2176, %v2420
      %v2422 = vpop.f32.mrb[0].mxu0
      %v2423 = vpop.f32.mrb[0].mxu0
      %v2424 = vadd.f32 %v2176, %v2423
      %v2425 = vpop.f32.mrb[0].mxu0
      %2426 = vmatprep.mubr.bf16.mxu0 %v1936
      %2427 = vmatmul.mubr.bf16.gmra.mrb[0].mxu0 %v1735
      %v2428 = vpop.f32.mrb[0].mxu0
      %v2429 = vadd.f32 %v2176, %v2428
      %v2430 = vpop.f32.mrb[0].mxu0
      %v2431 = vpop.f32.mrb[0].mxu0
      %v2432 = vadd.f32 %v2176, %v2431
      %v2433 = vpop.f32.mrb[0].mxu0
      %2434 = vmatprep.mubr.bf16.mxu0 %v1948
      %2435 = vmatmul.mubr.bf16.gmra.mrb[0].mxu0 %v1736
      %v2436 = vpop.f32.mrb[0].mxu0
      %v2437 = vadd.f32 %v2176, %v2436
      %v2438 = vpop.f32.mrb[0].mxu0
      %v2439 = vpop.f32.mrb[0].mxu0
      %v2440 = vadd.f32 %v2176, %v2439
      %v2441 = vpop.f32.mrb[0].mxu0
      %2442 = vmatprep.mubr.bf16.mxu0 %v1960
      %2443 = vmatmul.mubr.bf16.gmra.mrb[0].mxu0 %v1737
      %v2444 = vpop.f32.mrb[0].mxu0
      %v2445 = vadd.f32 %v2176, %v2444
      %v2446 = vpop.f32.mrb[0].mxu0
      %v2447 = vpop.f32.mrb[0].mxu0
      %v2448 = vadd.f32 %v2176, %v2447
      %v2449 = vpop.f32.mrb[0].mxu0
      %2450 = vmatprep.mubr.bf16.mxu0 %v1972
      %2451 = vmatmul.mubr.bf16.gmra.mrb[0].mxu0 %v1738
      %v2452 = vpop.f32.mrb[0].mxu0
      %v2453 = vadd.f32 %v2176, %v2452
      %v2454 = vpop.f32.mrb[0].mxu0
      %v2455 = vpop.f32.mrb[0].mxu0
      %v2456 = vadd.f32 %v2176, %v2455
      %v2457 = vpop.f32.mrb[0].mxu0
      %2458 = vmatprep.mubr.bf16.mxu0 %v1984
      %2459 = vmatmul.mubr.bf16.gmra.mrb[0].mxu0 %v1739
      %v2460 = vpop.f32.mrb[0].mxu0
      %v2461 = vadd.f32 %v2176, %v2460
      %v2462 = vpop.f32.mrb[0].mxu0
      %v2463 = vpop.f32.mrb[0].mxu0
      %v2464 = vadd.f32 %v2176, %v2463
      %v2465 = vpop.f32.mrb[0].mxu0
      %2466 = vmatprep.mubr.bf16.mxu0 %v1996
      %2467 = vmatmul.mubr.bf16.gmra.mrb[0].mxu0 %v1740
      %v2468 = vpop.f32.mrb[0].mxu0
      %v2469 = vadd.f32 %v2176, %v2468
      %v2470 = vpop.f32.mrb[0].mxu0
      %v2471 = vpop.f32.mrb[0].mxu0
      %v2472 = vadd.f32 %v2176, %v2471
      %v2473 = vpop.f32.mrb[0].mxu0
      %2474 = vmatprep.mubr.bf16.mxu0 %v2008
      %2475 = vmatmul.mubr.bf16.gmra.mrb[0].mxu0 %v1741
      %v2476 = vpop.f32.mrb[0].mxu0
      %v2477 = vadd.f32 %v2176, %v2476
      %v2478 = vpop.f32.mrb[0].mxu0
      %v2479 = vpop.f32.mrb[0].mxu0
      %v2480 = vadd.f32 %v2176, %v2479
      %v2481 = vpop.f32.mrb[0].mxu0
      %2482 = vdwg.mxu0
      %2483 = vmatprep.subr.bf16.mxu0 0
      %2484 = vmatpush1.bf16.msra.mxu0 %v2290
      %2485 = vmatprep.subr.bf16.mxu0 0
      %2486 = vmatpush1.bf16.msra.mxu0 %v2291
      %2487 = vmatprep.subr.bf16.mxu0 0
      %2488 = vmatpush1.bf16.msra.mxu0 %v2292
      %2489 = vmatprep.subr.bf16.mxu0 0
      %2490 = vmatpush1.bf16.msra.mxu0 %v2293
      %2491 = vmatprep.subr.bf16.mxu0 0
      %2492 = vmatpush1.bf16.msra.mxu0 %v2294
      %2493 = vmatprep.subr.bf16.mxu0 0
      %2494 = vmatpush1.bf16.msra.mxu0 %v2295
      %2495 = vmatprep.subr.bf16.mxu0 0
      %2496 = vmatpush1.bf16.msra.mxu0 %v2296
      %2497 = vmatprep.subr.bf16.mxu0 0
      %2498 = vmatpush1.bf16.msra.mxu0 %v2297
      %2499 = vmatprep.subr.bf16.mxu0 0
      %2500 = vmatpush1.bf16.msra.mxu0 0
      %2501 = vmatprep.subr.bf16.mxu0 0
      %2502 = vmatpush1.bf16.msra.mxu0 0
      %2503 = vmatprep.subr.bf16.mxu0 0
      %2504 = vmatpush1.bf16.msra.mxu0 0
      %2505 = vmatprep.subr.bf16.mxu0 0
      %2506 = vmatpush1.bf16.msra.mxu0 0
      %2507 = vmatprep.subr.bf16.mxu0 0
      %2508 = vmatpush1.bf16.msra.mxu0 0
      %2509 = vmatprep.subr.bf16.mxu0 0
      %2510 = vmatpush1.bf16.msra.mxu0 0
      %2511 = vmatprep.subr.bf16.mxu0 0
      %2512 = vmatpush1.bf16.msra.mxu0 0
      %2513 = vmatprep.subr.bf16.mxu0 0
      %2514 = vmatpush1.bf16.msra.mxu0 0
      %2515 = vmatprep.mubr.bf16.mxu0 0
      %2516 = vmatmul.mubr.bf16.gmra.mrb[0].mxu0 %v2054
      %v2517 = vpop.f32.mrb[0].mxu0
      %v2518 = vadd.f32 %v2357, %v2517
      %v2519 = vpop.f32.mrb[0].mxu0
      %v2520 = vpop.f32.mrb[0].mxu0
      %v2521 = vadd.f32 %v2360, %v2520
      %v2522 = vpop.f32.mrb[0].mxu0
      %2523 = vmatprep.mubr.bf16.mxu0 0
      %2524 = vmatmul.mubr.bf16.gmra.mrb[0].mxu0 %v2057
      %v2525 = vpop.f32.mrb[0].mxu0
      %v2526 = vadd.f32 %v2365, %v2525
      %v2527 = vpop.f32.mrb[0].mxu0
      %v2528 = vpop.f32.mrb[0].mxu0
      %v2529 = vadd.f32 %v2368, %v2528
      %v2530 = vpop.f32.mrb[0].mxu0
      %2531 = vmatprep.mubr.bf16.mxu0 0
      %2532 = vmatmul.mubr.bf16.gmra.mrb[0].mxu0 %v2060
      %v2533 = vpop.f32.mrb[0].mxu0
      %v2534 = vadd.f32 %v2373, %v2533
      %v2535 = vpop.f32.mrb[0].mxu0
      %v2536 = vpop.f32.mrb[0].mxu0
      %v2537 = vadd.f32 %v2376, %v2536
      %v2538 = vpop.f32.mrb[0].mxu0
      %2539 = vmatprep.mubr.bf16.mxu0 0
      %2540 = vmatmul.mubr.bf16.gmra.mrb[0].mxu0 %v2063
      %v2541 = vpop.f32.mrb[0].mxu0
      %v2542 = vadd.f32 %v2381, %v2541
      %v2543 = vpop.f32.mrb[0].mxu0
      %v2544 = vpop.f32.mrb[0].mxu0
      %v2545 = vadd.f32 %v2384, %v2544
      %v2546 = vpop.f32.mrb[0].mxu0
      %2547 = vmatprep.mubr.bf16.mxu0 0
      %2548 = vmatmul.mubr.bf16.gmra.mrb[0].mxu0 %v2066
      %v2549 = vpop.f32.mrb[0].mxu0
      %v2550 = vadd.f32 %v2389, %v2549
      %v2551 = vpop.f32.mrb[0].mxu0
      %v2552 = vpop.f32.mrb[0].mxu0
      %v2553 = vadd.f32 %v2392, %v2552
      %v2554 = vpop.f32.mrb[0].mxu0
      %2555 = vmatprep.mubr.bf16.mxu0 0
      %2556 = vmatmul.mubr.bf16.gmra.mrb[0].mxu0 %v2069
      %v2557 = vpop.f32.mrb[0].mxu0
      %v2558 = vadd.f32 %v2397, %v2557
      %v2559 = vpop.f32.mrb[0].mxu0
      %v2560 = vpop.f32.mrb[0].mxu0
      %v2561 = vadd.f32 %v2400, %v2560
      %v2562 = vpop.f32.mrb[0].mxu0
      %2563 = vmatprep.mubr.bf16.mxu0 0
      %2564 = vmatmul.mubr.bf16.gmra.mrb[0].mxu0 %v2072
      %v2565 = vpop.f32.mrb[0].mxu0
      %v2566 = vadd.f32 %v2405, %v2565
      %v2567 = vpop.f32.mrb[0].mxu0
      %v2568 = vpop.f32.mrb[0].mxu0
      %v2569 = vadd.f32 %v2408, %v2568
      %v2570 = vpop.f32.mrb[0].mxu0
      %2571 = vmatprep.mubr.bf16.mxu0 0
      %2572 = vmatmul.mubr.bf16.gmra.mrb[0].mxu0 %v2075
      %v2573 = vpop.f32.mrb[0].mxu0
      %v2574 = vadd.f32 %v2413, %v2573
      %v2575 = vpop.f32.mrb[0].mxu0
      %v2576 = vpop.f32.mrb[0].mxu0
      %v2577 = vadd.f32 %v2416, %v2576
      %v2578 = vpop.f32.mrb[0].mxu0
      %2579 = vmatprep.mubr.bf16.mxu0 0
      %2580 = vmatmul.mubr.bf16.gmra.mrb[0].mxu0 %v2078
      %v2581 = vpop.f32.mrb[0].mxu0
      %v2582 = vadd.f32 %v2421, %v2581
      %v2583 = vpop.f32.mrb[0].mxu0
      %v2584 = vpop.f32.mrb[0].mxu0
      %v2585 = vadd.f32 %v2424, %v2584
      %v2586 = vpop.f32.mrb[0].mxu0
      %2587 = vmatprep.mubr.bf16.mxu0 0
      %2588 = vmatmul.mubr.bf16.gmra.mrb[0].mxu0 %v2081
      %v2589 = vpop.f32.mrb[0].mxu0
      %v2590 = vadd.f32 %v2429, %v2589
      %v2591 = vpop.f32.mrb[0].mxu0
      %v2592 = vpop.f32.mrb[0].mxu0
      %v2593 = vadd.f32 %v2432, %v2592
      %v2594 = vpop.f32.mrb[0].mxu0
      %2595 = vmatprep.mubr.bf16.mxu0 0
      %2596 = vmatmul.mubr.bf16.gmra.mrb[0].mxu0 %v2084
      %v2597 = vpop.f32.mrb[0].mxu0
      %v2598 = vadd.f32 %v2437, %v2597
      %v2599 = vpop.f32.mrb[0].mxu0
      %v2600 = vpop.f32.mrb[0].mxu0
      %v2601 = vadd.f32 %v2440, %v2600
      %v2602 = vpop.f32.mrb[0].mxu0
      %2603 = vmatprep.mubr.bf16.mxu0 0
      %2604 = vmatmul.mubr.bf16.gmra.mrb[0].mxu0 %v2087
      %v2605 = vpop.f32.mrb[0].mxu0
      %v2606 = vadd.f32 %v2445, %v2605
      %v2607 = vpop.f32.mrb[0].mxu0
      %v2608 = vpop.f32.mrb[0].mxu0
      %v2609 = vadd.f32 %v2448, %v2608
      %v2610 = vpop.f32.mrb[0].mxu0
      %2611 = vmatprep.mubr.bf16.mxu0 0
      %2612 = vmatmul.mubr.bf16.gmra.mrb[0].mxu0 %v2090
      %v2613 = vpop.f32.mrb[0].mxu0
      %v2614 = vadd.f32 %v2453, %v2613
      %v2615 = vpop.f32.mrb[0].mxu0
      %v2616 = vpop.f32.mrb[0].mxu0
      %v2617 = vadd.f32 %v2456, %v2616
      %v2618 = vpop.f32.mrb[0].mxu0
      %2619 = vmatprep.mubr.bf16.mxu0 0
      %2620 = vmatmul.mubr.bf16.gmra.mrb[0].mxu0 %v2093
      %v2621 = vpop.f32.mrb[0].mxu0
      %v2622 = vadd.f32 %v2461, %v2621
      %v2623 = vpop.f32.mrb[0].mxu0
      %v2624 = vpop.f32.mrb[0].mxu0
      %v2625 = vadd.f32 %v2464, %v2624
      %v2626 = vpop.f32.mrb[0].mxu0
      %2627 = vmatprep.mubr.bf16.mxu0 0
      %2628 = vmatmul.mubr.bf16.gmra.mrb[0].mxu0 %v2096
      %v2629 = vpop.f32.mrb[0].mxu0
      %v2630 = vadd.f32 %v2469, %v2629
      %v2631 = vpop.f32.mrb[0].mxu0
      %v2632 = vpop.f32.mrb[0].mxu0
      %v2633 = vadd.f32 %v2472, %v2632
      %v2634 = vpop.f32.mrb[0].mxu0
      %2635 = vmatprep.mubr.bf16.mxu0 0
      %2636 = vmatmul.mubr.bf16.gmra.mrb[0].mxu0 %v2099
      %v2637 = vpop.f32.mrb[0].mxu0
      %v2638 = vadd.f32 %v2477, %v2637
      %v2639 = vpop.f32.mrb[0].mxu0
      %v2640 = vpop.f32.mrb[0].mxu0
      %v2641 = vadd.f32 %v2480, %v2640
      %v2642 = vpop.f32.mrb[0].mxu0
      %2643 = vdwg.mxu0
      %s2644 = scalar_lea.vmem %s3, 192
      %v2645 = vld [vmem:[%s2644] sm:$0xf]
      %v2646 = vld [vmem:[%s2644 + $0x4] sm:$0xf]
      %v2647 = vld [vmem:[%s2644 + $0x8] sm:$0xf]
      %v2648 = vld [vmem:[%s2644 + $0xc] sm:$0xf]
      %v2649 = vld [vmem:[%s2644 + $0x10] sm:$0xf]
      %v2650 = vld [vmem:[%s2644 + $0x14] sm:$0xf]
      %v2651 = vld [vmem:[%s2644 + $0x18] sm:$0xf]
      %v2652 = vld [vmem:[%s2644 + $0x1c] sm:$0xf]
      %v2653 = vld [vmem:[%s2644 + $0x20] sm:$0xf]
      %v2654 = vld [vmem:[%s2644 + $0x24] sm:$0xf]
      %v2655 = vld [vmem:[%s2644 + $0x28] sm:$0xf]
      %v2656 = vld [vmem:[%s2644 + $0x2c] sm:$0xf]
      %v2657 = vld [vmem:[%s2644 + $0x30] sm:$0xf]
      %v2658 = vld [vmem:[%s2644 + $0x34] sm:$0xf]
      %v2659 = vld [vmem:[%s2644 + $0x38] sm:$0xf]
      %v2660 = vld [vmem:[%s2644 + $0x3c] sm:$0xf]
      %v2661 = vld [vmem:[%s2644 + $0x40] sm:$0xf]
      %v2662 = vld [vmem:[%s2644 + $0x44] sm:$0xf]
      %v2663 = vld [vmem:[%s2644 + $0x48] sm:$0xf]
      %v2664 = vld [vmem:[%s2644 + $0x4c] sm:$0xf]
      %v2665 = vld [vmem:[%s2644 + $0x50] sm:$0xf]
      %v2666 = vld [vmem:[%s2644 + $0x54] sm:$0xf]
      %v2667 = vld [vmem:[%s2644 + $0x58] sm:$0xf]
      %v2668 = vld [vmem:[%s2644 + $0x5c] sm:$0xf]
      %v2669 = vld [vmem:[%s2644 + $0x60] sm:$0xf]
      %v2670 = vld [vmem:[%s2644 + $0x64] sm:$0xf]
      %v2671 = vld [vmem:[%s2644 + $0x68] sm:$0xf]
      %v2672 = vld [vmem:[%s2644 + $0x6c] sm:$0xf]
      %v2673 = vld [vmem:[%s2644 + $0x70] sm:$0xf]
      %v2674 = vld [vmem:[%s2644 + $0x74] sm:$0xf]
      %v2675 = vld [vmem:[%s2644 + $0x78] sm:$0xf]
      %v2676 = vld [vmem:[%s2644 + $0x7c] sm:$0xf]
      %v2677 = vld [vmem:[%s2644 + $0x80] sm:$0xf]
      %v2678 = vld [vmem:[%s2644 + $0x84] sm:$0xf]
      %v2679 = vld [vmem:[%s2644 + $0x88] sm:$0xf]
      %v2680 = vld [vmem:[%s2644 + $0x8c] sm:$0xf]
      %v2681 = vld [vmem:[%s2644 + $0x90] sm:$0xf]
      %v2682 = vld [vmem:[%s2644 + $0x94] sm:$0xf]
      %v2683 = vld [vmem:[%s2644 + $0x98] sm:$0xf]
      %v2684 = vld [vmem:[%s2644 + $0x9c] sm:$0xf]
      %v2685 = vld [vmem:[%s2644 + $0xa0] sm:$0xf]
      %v2686 = vld [vmem:[%s2644 + $0xa4] sm:$0xf]
      %v2687 = vld [vmem:[%s2644 + $0xa8] sm:$0xf]
      %v2688 = vld [vmem:[%s2644 + $0xac] sm:$0xf]
      %v2689 = vld [vmem:[%s2644 + $0xb0] sm:$0xf]
      %v2690 = vld [vmem:[%s2644 + $0xb4] sm:$0xf]
      %v2691 = vld [vmem:[%s2644 + $0xb8] sm:$0xf]
      %v2692 = vld [vmem:[%s2644 + $0xbc] sm:$0xf]
      %v2741 = vunpack.c.l.b16 %v2645
      %v2742 = vunpack.c.l.b16 %v2646
      %v2743 = vunpack.c.l.b16 %v2647
      %v2744 = vunpack.c.l.b16 %v2648
      %v2745 = vunpack.c.l.b16 %v2649
      %v2746 = vunpack.c.l.b16 %v2650
      %v2747 = vunpack.c.l.b16 %v2651
      %v2748 = vunpack.c.l.b16 %v2652
      %v2749 = vunpack.c.l.b16 %v2653
      %v2750 = vunpack.c.l.b16 %v2654
      %v2751 = vunpack.c.l.b16 %v2655
      %v2752 = vunpack.c.l.b16 %v2656
      %v2753 = vunpack.c.l.b16 %v2657
      %v2754 = vunpack.c.l.b16 %v2658
      %v2755 = vunpack.c.l.b16 %v2659
      %v2756 = vunpack.c.l.b16 %v2660
      %v2757 = vunpack.c.l.b16 %v2661
      %v2758 = vunpack.c.l.b16 %v2662
      %v2759 = vunpack.c.l.b16 %v2663
      %v2760 = vunpack.c.l.b16 %v2664
      %v2761 = vunpack.c.l.b16 %v2665
      %v2762 = vunpack.c.l.b16 %v2666
      %v2763 = vunpack.c.l.b16 %v2667
      %v2764 = vunpack.c.l.b16 %v2668
      %v2765 = vunpack.c.l.b16 %v2669
      %v2766 = vunpack.c.l.b16 %v2670
      %v2767 = vunpack.c.l.b16 %v2671
      %v2768 = vunpack.c.l.b16 %v2672
      %v2769 = vunpack.c.l.b16 %v2673
      %v2770 = vunpack.c.l.b16 %v2674
      %v2771 = vunpack.c.l.b16 %v2675
      %v2772 = vunpack.c.l.b16 %v2676
      %v2773 = vunpack.c.l.b16 %v2677
      %v2774 = vunpack.c.l.b16 %v2678
      %v2775 = vunpack.c.l.b16 %v2679
      %v2776 = vunpack.c.l.b16 %v2680
      %v2777 = vunpack.c.l.b16 %v2681
      %v2778 = vunpack.c.l.b16 %v2682
      %v2779 = vunpack.c.l.b16 %v2683
      %v2780 = vunpack.c.l.b16 %v2684
      %v2781 = vunpack.c.l.b16 %v2685
      %v2782 = vunpack.c.l.b16 %v2686
      %v2783 = vunpack.c.l.b16 %v2687
      %v2784 = vunpack.c.l.b16 %v2688
      %v2785 = vunpack.c.l.b16 %v2689
      %v2786 = vunpack.c.l.b16 %v2690
      %v2787 = vunpack.c.l.b16 %v2691
      %v2788 = vunpack.c.l.b16 %v2692
      %v2789 = vpack.c.b16 %v2742, %v2741
      %v2790 = vpack.c.b16 %v2744, %v2743
      %v2791 = vpack.c.b16 %v2746, %v2745
      %v2792 = vpack.c.b16 %v2748, %v2747
      %v2793 = vpack.c.b16 %v2750, %v2749
      %v2794 = vpack.c.b16 %v2752, %v2751
      %v2795 = vpack.c.b16 %v2754, %v2753
      %v2796 = vpack.c.b16 %v2756, %v2755
      %v2797 = vpack.c.b16 %v2758, %v2757
      %v2798 = vpack.c.b16 %v2760, %v2759
      %v2799 = vpack.c.b16 %v2762, %v2761
      %v2800 = vpack.c.b16 %v2764, %v2763
      %v2801 = vpack.c.b16 %v2766, %v2765
      %v2802 = vpack.c.b16 %v2768, %v2767
      %v2803 = vpack.c.b16 %v2770, %v2769
      %v2804 = vpack.c.b16 %v2772, %v2771
      %v2805 = vpack.c.b16 %v2774, %v2773
      %v2806 = vpack.c.b16 %v2776, %v2775
      %v2807 = vpack.c.b16 %v2778, %v2777
      %v2808 = vpack.c.b16 %v2780, %v2779
      %v2809 = vpack.c.b16 %v2782, %v2781
      %v2810 = vpack.c.b16 %v2784, %v2783
      %v2811 = vpack.c.b16 %v2786, %v2785
      %v2812 = vpack.c.b16 %v2788, %v2787
      %2837 = vmatprep.subr.bf16.mxu0 0
      %2838 = vmatpush1.bf16.msra.mxu0 %v2789
      %2839 = vmatprep.subr.bf16.mxu0 0
      %2840 = vmatpush1.bf16.msra.mxu0 %v2790
      %2841 = vmatprep.subr.bf16.mxu0 0
      %2842 = vmatpush1.bf16.msra.mxu0 %v2791
      %2843 = vmatprep.subr.bf16.mxu0 0
      %2844 = vmatpush1.bf16.msra.mxu0 %v2792
      %2845 = vmatprep.subr.bf16.mxu0 0
      %2846 = vmatpush1.bf16.msra.mxu0 %v2793
      %2847 = vmatprep.subr.bf16.mxu0 0
      %2848 = vmatpush1.bf16.msra.mxu0 %v2794
      %2849 = vmatprep.subr.bf16.mxu0 0
      %2850 = vmatpush1.bf16.msra.mxu0 %v2795
      %2851 = vmatprep.subr.bf16.mxu0 0
      %2852 = vmatpush1.bf16.msra.mxu0 %v2796
      %2853 = vmatprep.subr.bf16.mxu0 0
      %2854 = vmatpush1.bf16.msra.mxu0 %v2797
      %2855 = vmatprep.subr.bf16.mxu0 0
      %2856 = vmatpush1.bf16.msra.mxu0 %v2798
      %2857 = vmatprep.subr.bf16.mxu0 0
      %2858 = vmatpush1.bf16.msra.mxu0 %v2799
      %2859 = vmatprep.subr.bf16.mxu0 0
      %2860 = vmatpush1.bf16.msra.mxu0 %v2800
      %2861 = vmatprep.subr.bf16.mxu0 0
      %2862 = vmatpush1.bf16.msra.mxu0 %v2801
      %2863 = vmatprep.subr.bf16.mxu0 0
      %2864 = vmatpush1.bf16.msra.mxu0 %v2802
      %2865 = vmatprep.subr.bf16.mxu0 0
      %2866 = vmatpush1.bf16.msra.mxu0 %v2803
      %2867 = vmatprep.subr.bf16.mxu0 0
      %2868 = vmatpush1.bf16.msra.mxu0 %v2804
      %2869 = vmatprep.mubr.bf16.mxu0 %v1840
      %2870 = vmatmul.mubr.bf16.gmra.mrb[0].mxu0 %v1727
      %v2871 = vpop.f32.mrb[0].mxu0
      %v2872 = vadd.f32 0.0, %v2871
      %v2873 = vpop.f32.mrb[0].mxu0
      %v2874 = vpop.f32.mrb[0].mxu0
      %v2875 = vadd.f32 0.0, %v2874
      %v2876 = vpop.f32.mrb[0].mxu0
      %2877 = vmatprep.mubr.bf16.mxu0 %v1852
      %2878 = vmatmul.mubr.bf16.gmra.mrb[0].mxu0 %v1728
      %v2879 = vpop.f32.mrb[0].mxu0
      %v2880 = vadd.f32 0.0, %v2879
      %v2881 = vpop.f32.mrb[0].mxu0
      %v2882 = vpop.f32.mrb[0].mxu0
      %v2883 = vadd.f32 0.0, %v2882
      %v2884 = vpop.f32.mrb[0].mxu0
      %2885 = vmatprep.mubr.bf16.mxu0 %v1864
      %2886 = vmatmul.mubr.bf16.gmra.mrb[0].mxu0 %v1729
      %v2887 = vpop.f32.mrb[0].mxu0
      %v2888 = vadd.f32 0.0, %v2887
      %v2889 = vpop.f32.mrb[0].mxu0
      %v2890 = vpop.f32.mrb[0].mxu0
      %v2891 = vadd.f32 0.0, %v2890
      %v2892 = vpop.f32.mrb[0].mxu0
      %2893 = vmatprep.mubr.bf16.mxu0 %v1876
      %2894 = vmatmul.mubr.bf16.gmra.mrb[0].mxu0 %v1730
      %v2895 = vpop.f32.mrb[0].mxu0
      %v2896 = vadd.f32 0.0, %v2895
      %v2897 = vpop.f32.mrb[0].mxu0
      %v2898 = vpop.f32.mrb[0].mxu0
      %v2899 = vadd.f32 0.0, %v2898
      %v2900 = vpop.f32.mrb[0].mxu0
      %2901 = vmatprep.mubr.bf16.mxu0 %v1888
      %2902 = vmatmul.mubr.bf16.gmra.mrb[0].mxu0 %v1731
      %v2903 = vpop.f32.mrb[0].mxu0
      %v2904 = vadd.f32 0.0, %v2903
      %v2905 = vpop.f32.mrb[0].mxu0
      %v2906 = vpop.f32.mrb[0].mxu0
      %v2907 = vadd.f32 0.0, %v2906
      %v2908 = vpop.f32.mrb[0].mxu0
      %2909 = vmatprep.mubr.bf16.mxu0 %v1900
      %2910 = vmatmul.mubr.bf16.gmra.mrb[0].mxu0 %v1732
      %v2911 = vpop.f32.mrb[0].mxu0
      %v2912 = vadd.f32 0.0, %v2911
      %v2913 = vpop.f32.mrb[0].mxu0
      %v2914 = vpop.f32.mrb[0].mxu0
      %v2915 = vadd.f32 0.0, %v2914
      %v2916 = vpop.f32.mrb[0].mxu0
      %2917 = vmatprep.mubr.bf16.mxu0 %v1912
      %2918 = vmatmul.mubr.bf16.gmra.mrb[0].mxu0 %v1733
      %v2919 = vpop.f32.mrb[0].mxu0
      %v2920 = vadd.f32 0.0, %v2919
      %v2921 = vpop.f32.mrb[0].mxu0
      %v2922 = vpop.f32.mrb[0].mxu0
      %v2923 = vadd.f32 0.0, %v2922
      %v2924 = vpop.f32.mrb[0].mxu0
      %2925 = vmatprep.mubr.bf16.mxu0 %v1924
      %2926 = vmatmul.mubr.bf16.gmra.mrb[0].mxu0 %v1734
      %v2927 = vpop.f32.mrb[0].mxu0
      %v2928 = vadd.f32 0.0, %v2927
      %v2929 = vpop.f32.mrb[0].mxu0
      %v2930 = vpop.f32.mrb[0].mxu0
      %v2931 = vadd.f32 0.0, %v2930
      %v2932 = vpop.f32.mrb[0].mxu0
      %2933 = vmatprep.mubr.bf16.mxu0 %v1936
      %2934 = vmatmul.mubr.bf16.gmra.mrb[0].mxu0 %v1735
      %v2935 = vpop.f32.mrb[0].mxu0
      %v2936 = vadd.f32 0.0, %v2935
      %v2937 = vpop.f32.mrb[0].mxu0
      %v2938 = vpop.f32.mrb[0].mxu0
      %v2939 = vadd.f32 0.0, %v2938
      %v2940 = vpop.f32.mrb[0].mxu0
      %2941 = vmatprep.mubr.bf16.mxu0 %v1948
      %2942 = vmatmul.mubr.bf16.gmra.mrb[0].mxu0 %v1736
      %v2943 = vpop.f32.mrb[0].mxu0
      %v2944 = vadd.f32 0.0, %v2943
      %v2945 = vpop.f32.mrb[0].mxu0
      %v2946 = vpop.f32.mrb[0].mxu0
      %v2947 = vadd.f32 0.0, %v2946
      %v2948 = vpop.f32.mrb[0].mxu0
      %2949 = vmatprep.mubr.bf16.mxu0 %v1960
      %2950 = vmatmul.mubr.bf16.gmra.mrb[0].mxu0 %v1737
      %v2951 = vpop.f32.mrb[0].mxu0
      %v2952 = vadd.f32 0.0, %v2951
      %v2953 = vpop.f32.mrb[0].mxu0
      %v2954 = vpop.f32.mrb[0].mxu0
      %v2955 = vadd.f32 0.0, %v2954
      %v2956 = vpop.f32.mrb[0].mxu0
      %2957 = vmatprep.mubr.bf16.mxu0 %v1972
      %2958 = vmatmul.mubr.bf16.gmra.mrb[0].mxu0 %v1738
      %v2959 = vpop.f32.mrb[0].mxu0
      %v2960 = vadd.f32 0.0, %v2959
      %v2961 = vpop.f32.mrb[0].mxu0
      %v2962 = vpop.f32.mrb[0].mxu0
      %v2963 = vadd.f32 0.0, %v2962
      %v2964 = vpop.f32.mrb[0].mxu0
      %2965 = vmatprep.mubr.bf16.mxu0 %v1984
      %2966 = vmatmul.mubr.bf16.gmra.mrb[0].mxu0 %v1739
      %v2967 = vpop.f32.mrb[0].mxu0
      %v2968 = vadd.f32 0.0, %v2967
      %v2969 = vpop.f32.mrb[0].mxu0
      %v2970 = vpop.f32.mrb[0].mxu0
      %v2971 = vadd.f32 0.0, %v2970
      %v2972 = vpop.f32.mrb[0].mxu0
      %2973 = vmatprep.mubr.bf16.mxu0 %v1996
      %2974 = vmatmul.mubr.bf16.gmra.mrb[0].mxu0 %v1740
      %v2975 = vpop.f32.mrb[0].mxu0
      %v2976 = vadd.f32 0.0, %v2975
      %v2977 = vpop.f32.mrb[0].mxu0
      %v2978 = vpop.f32.mrb[0].mxu0
      %v2979 = vadd.f32 0.0, %v2978
      %v2980 = vpop.f32.mrb[0].mxu0
      %2981 = vmatprep.mubr.bf16.mxu0 %v2008
      %2982 = vmatmul.mubr.bf16.gmra.mrb[0].mxu0 %v1741
      %v2983 = vpop.f32.mrb[0].mxu0
      %v2984 = vadd.f32 0.0, %v2983
      %v2985 = vpop.f32.mrb[0].mxu0
      %v2986 = vpop.f32.mrb[0].mxu0
      %v2987 = vadd.f32 0.0, %v2986
      %v2988 = vpop.f32.mrb[0].mxu0
      %2989 = vmatprep.mubr.bf16.mxu0 %v2020
      %2990 = vmatmul.mubr.bf16.gmra.mrb[0].mxu0 %v1742
      %v2991 = vpop.f32.mrb[0].mxu0
      %v2992 = vadd.f32 0.0, %v2991
      %v2993 = vpop.f32.mrb[0].mxu0
      %v2994 = vpop.f32.mrb[0].mxu0
      %v2995 = vadd.f32 0.0, %v2994
      %v2996 = vpop.f32.mrb[0].mxu0
      %2997 = vdwg.mxu0
      %2998 = vmatprep.subr.bf16.mxu0 0
      %2999 = vmatpush1.bf16.msra.mxu0 %v2805
      %3000 = vmatprep.subr.bf16.mxu0 0
      %3001 = vmatpush1.bf16.msra.mxu0 %v2806
      %3002 = vmatprep.subr.bf16.mxu0 0
      %3003 = vmatpush1.bf16.msra.mxu0 %v2807
      %3004 = vmatprep.subr.bf16.mxu0 0
      %3005 = vmatpush1.bf16.msra.mxu0 %v2808
      %3006 = vmatprep.subr.bf16.mxu0 0
      %3007 = vmatpush1.bf16.msra.mxu0 %v2809
      %3008 = vmatprep.subr.bf16.mxu0 0
      %3009 = vmatpush1.bf16.msra.mxu0 %v2810
      %3010 = vmatprep.subr.bf16.mxu0 0
      %3011 = vmatpush1.bf16.msra.mxu0 %v2811
      %3012 = vmatprep.subr.bf16.mxu0 0
      %3013 = vmatpush1.bf16.msra.mxu0 %v2812
      %3014 = vmatprep.subr.bf16.mxu0 0
      %3015 = vmatpush1.bf16.msra.mxu0 0
      %3016 = vmatprep.subr.bf16.mxu0 0
      %3017 = vmatpush1.bf16.msra.mxu0 0
      %3018 = vmatprep.subr.bf16.mxu0 0
      %3019 = vmatpush1.bf16.msra.mxu0 0
      %3020 = vmatprep.subr.bf16.mxu0 0
      %3021 = vmatpush1.bf16.msra.mxu0 0
      %3022 = vmatprep.subr.bf16.mxu0 0
      %3023 = vmatpush1.bf16.msra.mxu0 0
      %3024 = vmatprep.subr.bf16.mxu0 0
      %3025 = vmatpush1.bf16.msra.mxu0 0
      %3026 = vmatprep.subr.bf16.mxu0 0
      %3027 = vmatpush1.bf16.msra.mxu0 0
      %3028 = vmatprep.subr.bf16.mxu0 0
      %3029 = vmatpush1.bf16.msra.mxu0 0
      %3030 = vmatprep.mubr.bf16.mxu0 0
      %3031 = vmatmul.mubr.bf16.gmra.mrb[0].mxu0 %v2057
      %v3032 = vpop.f32.mrb[0].mxu0
      %v3033 = vadd.f32 %v2872, %v3032
      %v3034 = vpop.f32.mrb[0].mxu0
      %v3035 = vpop.f32.mrb[0].mxu0
      %v3036 = vadd.f32 %v2875, %v3035
      %v3037 = vpop.f32.mrb[0].mxu0
      %3038 = vmatprep.mubr.bf16.mxu0 0
      %3039 = vmatmul.mubr.bf16.gmra.mrb[0].mxu0 %v2060
      %v3040 = vpop.f32.mrb[0].mxu0
      %v3041 = vadd.f32 %v2880, %v3040
      %v3042 = vpop.f32.mrb[0].mxu0
      %v3043 = vpop.f32.mrb[0].mxu0
      %v3044 = vadd.f32 %v2883, %v3043
      %v3045 = vpop.f32.mrb[0].mxu0
      %3046 = vmatprep.mubr.bf16.mxu0 0
      %3047 = vmatmul.mubr.bf16.gmra.mrb[0].mxu0 %v2063
      %v3048 = vpop.f32.mrb[0].mxu0
      %v3049 = vadd.f32 %v2888, %v3048
      %v3050 = vpop.f32.mrb[0].mxu0
      %v3051 = vpop.f32.mrb[0].mxu0
      %v3052 = vadd.f32 %v2891, %v3051
      %v3053 = vpop.f32.mrb[0].mxu0
      %3054 = vmatprep.mubr.bf16.mxu0 0
      %3055 = vmatmul.mubr.bf16.gmra.mrb[0].mxu0 %v2066
      %v3056 = vpop.f32.mrb[0].mxu0
      %v3057 = vadd.f32 %v2896, %v3056
      %v3058 = vpop.f32.mrb[0].mxu0
      %v3059 = vpop.f32.mrb[0].mxu0
      %v3060 = vadd.f32 %v2899, %v3059
      %v3061 = vpop.f32.mrb[0].mxu0
      %3062 = vmatprep.mubr.bf16.mxu0 0
      %3063 = vmatmul.mubr.bf16.gmra.mrb[0].mxu0 %v2069
      %v3064 = vpop.f32.mrb[0].mxu0
      %v3065 = vadd.f32 %v2904, %v3064
      %v3066 = vpop.f32.mrb[0].mxu0
      %v3067 = vpop.f32.mrb[0].mxu0
      %v3068 = vadd.f32 %v2907, %v3067
      %v3069 = vpop.f32.mrb[0].mxu0
      %3070 = vmatprep.mubr.bf16.mxu0 0
      %3071 = vmatmul.mubr.bf16.gmra.mrb[0].mxu0 %v2072
      %v3072 = vpop.f32.mrb[0].mxu0
      %v3073 = vadd.f32 %v2912, %v3072
      %v3074 = vpop.f32.mrb[0].mxu0
      %v3075 = vpop.f32.mrb[0].mxu0
      %v3076 = vadd.f32 %v2915, %v3075
      %v3077 = vpop.f32.mrb[0].mxu0
      %3078 = vmatprep.mubr.bf16.mxu0 0
      %3079 = vmatmul.mubr.bf16.gmra.mrb[0].mxu0 %v2075
      %v3080 = vpop.f32.mrb[0].mxu0
      %v3081 = vadd.f32 %v2920, %v3080
      %v3082 = vpop.f32.mrb[0].mxu0
      %v3083 = vpop.f32.mrb[0].mxu0
      %v3084 = vadd.f32 %v2923, %v3083
      %v3085 = vpop.f32.mrb[0].mxu0
      %3086 = vmatprep.mubr.bf16.mxu0 0
      %3087 = vmatmul.mubr.bf16.gmra.mrb[0].mxu0 %v2078
      %v3088 = vpop.f32.mrb[0].mxu0
      %v3089 = vadd.f32 %v2928, %v3088
      %v3090 = vpop.f32.mrb[0].mxu0
      %v3091 = vpop.f32.mrb[0].mxu0
      %v3092 = vadd.f32 %v2931, %v3091
      %v3093 = vpop.f32.mrb[0].mxu0
      %3094 = vmatprep.mubr.bf16.mxu0 0
      %3095 = vmatmul.mubr.bf16.gmra.mrb[0].mxu0 %v2081
      %v3096 = vpop.f32.mrb[0].mxu0
      %v3097 = vadd.f32 %v2936, %v3096
      %v3098 = vpop.f32.mrb[0].mxu0
      %v3099 = vpop.f32.mrb[0].mxu0
      %v3100 = vadd.f32 %v2939, %v3099
      %v3101 = vpop.f32.mrb[0].mxu0
      %3102 = vmatprep.mubr.bf16.mxu0 0
      %3103 = vmatmul.mubr.bf16.gmra.mrb[0].mxu0 %v2084
      %v3104 = vpop.f32.mrb[0].mxu0
      %v3105 = vadd.f32 %v2944, %v3104
      %v3106 = vpop.f32.mrb[0].mxu0
      %v3107 = vpop.f32.mrb[0].mxu0
      %v3108 = vadd.f32 %v2947, %v3107
      %v3109 = vpop.f32.mrb[0].mxu0
      %3110 = vmatprep.mubr.bf16.mxu0 0
      %3111 = vmatmul.mubr.bf16.gmra.mrb[0].mxu0 %v2087
      %v3112 = vpop.f32.mrb[0].mxu0
      %v3113 = vadd.f32 %v2952, %v3112
      %v3114 = vpop.f32.mrb[0].mxu0
      %v3115 = vpop.f32.mrb[0].mxu0
      %v3116 = vadd.f32 %v2955, %v3115
      %v3117 = vpop.f32.mrb[0].mxu0
      %3118 = vmatprep.mubr.bf16.mxu0 0
      %3119 = vmatmul.mubr.bf16.gmra.mrb[0].mxu0 %v2090
      %v3120 = vpop.f32.mrb[0].mxu0
      %v3121 = vadd.f32 %v2960, %v3120
      %v3122 = vpop.f32.mrb[0].mxu0
      %v3123 = vpop.f32.mrb[0].mxu0
      %v3124 = vadd.f32 %v2963, %v3123
      %v3125 = vpop.f32.mrb[0].mxu0
      %3126 = vmatprep.mubr.bf16.mxu0 0
      %3127 = vmatmul.mubr.bf16.gmra.mrb[0].mxu0 %v2093
      %v3128 = vpop.f32.mrb[0].mxu0
      %v3129 = vadd.f32 %v2968, %v3128
      %v3130 = vpop.f32.mrb[0].mxu0
      %v3131 = vpop.f32.mrb[0].mxu0
      %v3132 = vadd.f32 %v2971, %v3131
      %v3133 = vpop.f32.mrb[0].mxu0
      %3134 = vmatprep.mubr.bf16.mxu0 0
      %3135 = vmatmul.mubr.bf16.gmra.mrb[0].mxu0 %v2096
      %v3136 = vpop.f32.mrb[0].mxu0
      %v3137 = vadd.f32 %v2976, %v3136
      %v3138 = vpop.f32.mrb[0].mxu0
      %v3139 = vpop.f32.mrb[0].mxu0
      %v3140 = vadd.f32 %v2979, %v3139
      %v3141 = vpop.f32.mrb[0].mxu0
      %3142 = vmatprep.mubr.bf16.mxu0 0
      %3143 = vmatmul.mubr.bf16.gmra.mrb[0].mxu0 %v2099
      %v3144 = vpop.f32.mrb[0].mxu0
      %v3145 = vadd.f32 %v2984, %v3144
      %v3146 = vpop.f32.mrb[0].mxu0
      %v3147 = vpop.f32.mrb[0].mxu0
      %v3148 = vadd.f32 %v2987, %v3147
      %v3149 = vpop.f32.mrb[0].mxu0
      %3150 = vmatprep.mubr.bf16.mxu0 0
      %3151 = vmatmul.mubr.bf16.gmra.mrb[0].mxu0 %v2102
      %v3152 = vpop.f32.mrb[0].mxu0
      %v3153 = vadd.f32 %v2992, %v3152
      %v3154 = vpop.f32.mrb[0].mxu0
      %v3155 = vpop.f32.mrb[0].mxu0
      %v3156 = vadd.f32 %v2995, %v3155
      %v3157 = vpop.f32.mrb[0].mxu0
      %3158 = vdwg.mxu0
      %v3159 = vadd.f32 %v2518, %v3033
      %v3160 = vadd.f32 %v2521, %v3036
      %v3161 = vadd.f32 %v2526, %v3041
      %v3162 = vadd.f32 %v2529, %v3044
      %v3163 = vadd.f32 %v2534, %v3049
      %v3164 = vadd.f32 %v2537, %v3052
      %v3165 = vadd.f32 %v2542, %v3057
      %v3166 = vadd.f32 %v2545, %v3060
      %v3167 = vadd.f32 %v2550, %v3065
      %v3168 = vadd.f32 %v2553, %v3068
      %v3169 = vadd.f32 %v2558, %v3073
      %v3170 = vadd.f32 %v2561, %v3076
      %v3171 = vadd.f32 %v2566, %v3081
      %v3172 = vadd.f32 %v2569, %v3084
      %v3173 = vadd.f32 %v2574, %v3089
      %v3174 = vadd.f32 %v2577, %v3092
      %v3175 = vadd.f32 %v2582, %v3097
      %v3176 = vadd.f32 %v2585, %v3100
      %v3177 = vadd.f32 %v2590, %v3105
      %v3178 = vadd.f32 %v2593, %v3108
      %v3179 = vadd.f32 %v2598, %v3113
      %v3180 = vadd.f32 %v2601, %v3116
      %v3181 = vadd.f32 %v2606, %v3121
      %v3182 = vadd.f32 %v2609, %v3124
      %v3183 = vadd.f32 %v2614, %v3129
      %v3184 = vadd.f32 %v2617, %v3132
      %v3185 = vadd.f32 %v2622, %v3137
      %v3186 = vadd.f32 %v2625, %v3140
      %v3187 = vadd.f32 %v2630, %v3145
      %v3188 = vadd.f32 %v2633, %v3148
      %v3189 = vadd.f32 %v2638, %v3153
      %v3190 = vadd.f32 %v2641, %v3156
      %s3191 = scalar_lea.vmem %s3, 384
      %v3192 = vld [vmem:[%s3191] sm:$0xf]
      %v3193 = vld [vmem:[%s3191 + $0x4] sm:$0xf]
      %v3194 = vld [vmem:[%s3191 + $0x8] sm:$0xf]
      %v3195 = vld [vmem:[%s3191 + $0xc] sm:$0xf]
      %v3196 = vld [vmem:[%s3191 + $0x10] sm:$0xf]
      %v3197 = vld [vmem:[%s3191 + $0x14] sm:$0xf]
      %v3198 = vld [vmem:[%s3191 + $0x18] sm:$0xf]
      %v3199 = vld [vmem:[%s3191 + $0x1c] sm:$0xf]
      %v3200 = vld [vmem:[%s3191 + $0x20] sm:$0xf]
      %v3201 = vld [vmem:[%s3191 + $0x24] sm:$0xf]
      %v3202 = vld [vmem:[%s3191 + $0x28] sm:$0xf]
      %v3203 = vld [vmem:[%s3191 + $0x2c] sm:$0xf]
      %v3204 = vld [vmem:[%s3191 + $0x30] sm:$0xf]
      %v3205 = vld [vmem:[%s3191 + $0x34] sm:$0xf]
      %v3206 = vld [vmem:[%s3191 + $0x38] sm:$0xf]
      %v3207 = vld [vmem:[%s3191 + $0x3c] sm:$0xf]
      %v3208 = vld [vmem:[%s3191 + $0x40] sm:$0xf]
      %v3209 = vld [vmem:[%s3191 + $0x44] sm:$0xf]
      %v3210 = vld [vmem:[%s3191 + $0x48] sm:$0xf]
      %v3211 = vld [vmem:[%s3191 + $0x4c] sm:$0xf]
      %v3212 = vld [vmem:[%s3191 + $0x50] sm:$0xf]
      %v3213 = vld [vmem:[%s3191 + $0x54] sm:$0xf]
      %v3214 = vld [vmem:[%s3191 + $0x58] sm:$0xf]
      %v3215 = vld [vmem:[%s3191 + $0x5c] sm:$0xf]
      %v3216 = vld [vmem:[%s3191 + $0x60] sm:$0xf]
      %v3217 = vld [vmem:[%s3191 + $0x64] sm:$0xf]
      %v3218 = vld [vmem:[%s3191 + $0x68] sm:$0xf]
      %v3219 = vld [vmem:[%s3191 + $0x6c] sm:$0xf]
      %v3220 = vld [vmem:[%s3191 + $0x70] sm:$0xf]
      %v3221 = vld [vmem:[%s3191 + $0x74] sm:$0xf]
      %v3222 = vld [vmem:[%s3191 + $0x78] sm:$0xf]
      %v3223 = vld [vmem:[%s3191 + $0x7c] sm:$0xf]
      %v3224 = vld [vmem:[%s3191 + $0x80] sm:$0xf]
      %v3225 = vld [vmem:[%s3191 + $0x84] sm:$0xf]
      %v3226 = vld [vmem:[%s3191 + $0x88] sm:$0xf]
      %v3227 = vld [vmem:[%s3191 + $0x8c] sm:$0xf]
      %v3228 = vld [vmem:[%s3191 + $0x90] sm:$0xf]
      %v3229 = vld [vmem:[%s3191 + $0x94] sm:$0xf]
      %v3230 = vld [vmem:[%s3191 + $0x98] sm:$0xf]
      %v3231 = vld [vmem:[%s3191 + $0x9c] sm:$0xf]
      %v3232 = vld [vmem:[%s3191 + $0xa0] sm:$0xf]
      %v3233 = vld [vmem:[%s3191 + $0xa4] sm:$0xf]
      %v3234 = vld [vmem:[%s3191 + $0xa8] sm:$0xf]
      %v3235 = vld [vmem:[%s3191 + $0xac] sm:$0xf]
      %v3236 = vld [vmem:[%s3191 + $0xb0] sm:$0xf]
      %v3237 = vld [vmem:[%s3191 + $0xb4] sm:$0xf]
      %v3238 = vld [vmem:[%s3191 + $0xb8] sm:$0xf]
      %v3239 = vld [vmem:[%s3191 + $0xbc] sm:$0xf]
      %v3288 = vunpack.c.l.b16 %v3192
      %v3289 = vunpack.c.l.b16 %v3193
      %v3290 = vunpack.c.l.b16 %v3194
      %v3291 = vunpack.c.l.b16 %v3195
      %v3292 = vunpack.c.l.b16 %v3196
      %v3293 = vunpack.c.l.b16 %v3197
      %v3294 = vunpack.c.l.b16 %v3198
      %v3295 = vunpack.c.l.b16 %v3199
      %v3296 = vunpack.c.l.b16 %v3200
      %v3297 = vunpack.c.l.b16 %v3201
      %v3298 = vunpack.c.l.b16 %v3202
      %v3299 = vunpack.c.l.b16 %v3203
      %v3300 = vunpack.c.l.b16 %v3204
      %v3301 = vunpack.c.l.b16 %v3205
      %v3302 = vunpack.c.l.b16 %v3206
      %v3303 = vunpack.c.l.b16 %v3207
      %v3304 = vunpack.c.l.b16 %v3208
      %v3305 = vunpack.c.l.b16 %v3209
      %v3306 = vunpack.c.l.b16 %v3210
      %v3307 = vunpack.c.l.b16 %v3211
      %v3308 = vunpack.c.l.b16 %v3212
      %v3309 = vunpack.c.l.b16 %v3213
      %v3310 = vunpack.c.l.b16 %v3214
      %v3311 = vunpack.c.l.b16 %v3215
      %v3312 = vunpack.c.l.b16 %v3216
      %v3313 = vunpack.c.l.b16 %v3217
      %v3314 = vunpack.c.l.b16 %v3218
      %v3315 = vunpack.c.l.b16 %v3219
      %v3316 = vunpack.c.l.b16 %v3220
      %v3317 = vunpack.c.l.b16 %v3221
      %v3318 = vunpack.c.l.b16 %v3222
      %v3319 = vunpack.c.l.b16 %v3223
      %v3320 = vunpack.c.l.b16 %v3224
      %v3321 = vunpack.c.l.b16 %v3225
      %v3322 = vunpack.c.l.b16 %v3226
      %v3323 = vunpack.c.l.b16 %v3227
      %v3324 = vunpack.c.l.b16 %v3228
      %v3325 = vunpack.c.l.b16 %v3229
      %v3326 = vunpack.c.l.b16 %v3230
      %v3327 = vunpack.c.l.b16 %v3231
      %v3328 = vunpack.c.l.b16 %v3232
      %v3329 = vunpack.c.l.b16 %v3233
      %v3330 = vunpack.c.l.b16 %v3234
      %v3331 = vunpack.c.l.b16 %v3235
      %v3332 = vunpack.c.l.b16 %v3236
      %v3333 = vunpack.c.l.b16 %v3237
      %v3334 = vunpack.c.l.b16 %v3238
      %v3335 = vunpack.c.l.b16 %v3239
      %v3336 = vpack.c.b16 %v3289, %v3288
      %v3337 = vpack.c.b16 %v3291, %v3290
      %v3338 = vpack.c.b16 %v3293, %v3292
      %v3339 = vpack.c.b16 %v3295, %v3294
      %v3340 = vpack.c.b16 %v3297, %v3296
      %v3341 = vpack.c.b16 %v3299, %v3298
      %v3342 = vpack.c.b16 %v3301, %v3300
      %v3343 = vpack.c.b16 %v3303, %v3302
      %v3344 = vpack.c.b16 %v3305, %v3304
      %v3345 = vpack.c.b16 %v3307, %v3306
      %v3346 = vpack.c.b16 %v3309, %v3308
      %v3347 = vpack.c.b16 %v3311, %v3310
      %v3348 = vpack.c.b16 %v3313, %v3312
      %v3349 = vpack.c.b16 %v3315, %v3314
      %v3350 = vpack.c.b16 %v3317, %v3316
      %v3351 = vpack.c.b16 %v3319, %v3318
      %v3352 = vpack.c.b16 %v3321, %v3320
      %v3353 = vpack.c.b16 %v3323, %v3322
      %v3354 = vpack.c.b16 %v3325, %v3324
      %v3355 = vpack.c.b16 %v3327, %v3326
      %v3356 = vpack.c.b16 %v3329, %v3328
      %v3357 = vpack.c.b16 %v3331, %v3330
      %v3358 = vpack.c.b16 %v3333, %v3332
      %v3359 = vpack.c.b16 %v3335, %v3334
      %3384 = vmatprep.subr.bf16.mxu0 0
      %3385 = vmatpush1.bf16.msra.mxu0 %v3336
      %3386 = vmatprep.subr.bf16.mxu0 0
      %3387 = vmatpush1.bf16.msra.mxu0 %v3337
      %3388 = vmatprep.subr.bf16.mxu0 0
      %3389 = vmatpush1.bf16.msra.mxu0 %v3338
      %3390 = vmatprep.subr.bf16.mxu0 0
      %3391 = vmatpush1.bf16.msra.mxu0 %v3339
      %3392 = vmatprep.subr.bf16.mxu0 0
      %3393 = vmatpush1.bf16.msra.mxu0 %v3340
      %3394 = vmatprep.subr.bf16.mxu0 0
      %3395 = vmatpush1.bf16.msra.mxu0 %v3341
      %3396 = vmatprep.subr.bf16.mxu0 0
      %3397 = vmatpush1.bf16.msra.mxu0 %v3342
      %3398 = vmatprep.subr.bf16.mxu0 0
      %3399 = vmatpush1.bf16.msra.mxu0 %v3343
      %3400 = vmatprep.subr.bf16.mxu0 0
      %3401 = vmatpush1.bf16.msra.mxu0 %v3344
      %3402 = vmatprep.subr.bf16.mxu0 0
      %3403 = vmatpush1.bf16.msra.mxu0 %v3345
      %3404 = vmatprep.subr.bf16.mxu0 0
      %3405 = vmatpush1.bf16.msra.mxu0 %v3346
      %3406 = vmatprep.subr.bf16.mxu0 0
      %3407 = vmatpush1.bf16.msra.mxu0 %v3347
      %3408 = vmatprep.subr.bf16.mxu0 0
      %3409 = vmatpush1.bf16.msra.mxu0 %v3348
      %3410 = vmatprep.subr.bf16.mxu0 0
      %3411 = vmatpush1.bf16.msra.mxu0 %v3349
      %3412 = vmatprep.subr.bf16.mxu0 0
      %3413 = vmatpush1.bf16.msra.mxu0 %v3350
      %3414 = vmatprep.subr.bf16.mxu0 0
      %3415 = vmatpush1.bf16.msra.mxu0 %v3351
      %3416 = vmatprep.mubr.bf16.mxu0 %v1852
      %3417 = vmatmul.mubr.bf16.gmra.mrb[0].mxu0 %v1728
      %v3418 = vpop.f32.mrb[0].mxu0
      %v3419 = vadd.f32 0.0, %v3418
      %v3420 = vpop.f32.mrb[0].mxu0
      %v3421 = vpop.f32.mrb[0].mxu0
      %v3422 = vadd.f32 0.0, %v3421
      %v3423 = vpop.f32.mrb[0].mxu0
      %3424 = vmatprep.mubr.bf16.mxu0 %v1864
      %3425 = vmatmul.mubr.bf16.gmra.mrb[0].mxu0 %v1729
      %v3426 = vpop.f32.mrb[0].mxu0
      %v3427 = vadd.f32 0.0, %v3426
      %v3428 = vpop.f32.mrb[0].mxu0
      %v3429 = vpop.f32.mrb[0].mxu0
      %v3430 = vadd.f32 0.0, %v3429
      %v3431 = vpop.f32.mrb[0].mxu0
      %3432 = vmatprep.mubr.bf16.mxu0 %v1876
      %3433 = vmatmul.mubr.bf16.gmra.mrb[0].mxu0 %v1730
      %v3434 = vpop.f32.mrb[0].mxu0
      %v3435 = vadd.f32 0.0, %v3434
      %v3436 = vpop.f32.mrb[0].mxu0
      %v3437 = vpop.f32.mrb[0].mxu0
      %v3438 = vadd.f32 0.0, %v3437
      %v3439 = vpop.f32.mrb[0].mxu0
      %3440 = vmatprep.mubr.bf16.mxu0 %v1888
      %3441 = vmatmul.mubr.bf16.gmra.mrb[0].mxu0 %v1731
      %v3442 = vpop.f32.mrb[0].mxu0
      %v3443 = vadd.f32 0.0, %v3442
      %v3444 = vpop.f32.mrb[0].mxu0
      %v3445 = vpop.f32.mrb[0].mxu0
      %v3446 = vadd.f32 0.0, %v3445
      %v3447 = vpop.f32.mrb[0].mxu0
      %3448 = vmatprep.mubr.bf16.mxu0 %v1900
      %3449 = vmatmul.mubr.bf16.gmra.mrb[0].mxu0 %v1732
      %v3450 = vpop.f32.mrb[0].mxu0
      %v3451 = vadd.f32 0.0, %v3450
      %v3452 = vpop.f32.mrb[0].mxu0
      %v3453 = vpop.f32.mrb[0].mxu0
      %v3454 = vadd.f32 0.0, %v3453
      %v3455 = vpop.f32.mrb[0].mxu0
      %3456 = vmatprep.mubr.bf16.mxu0 %v1912
      %3457 = vmatmul.mubr.bf16.gmra.mrb[0].mxu0 %v1733
      %v3458 = vpop.f32.mrb[0].mxu0
      %v3459 = vadd.f32 0.0, %v3458
      %v3460 = vpop.f32.mrb[0].mxu0
      %v3461 = vpop.f32.mrb[0].mxu0
      %v3462 = vadd.f32 0.0, %v3461
      %v3463 = vpop.f32.mrb[0].mxu0
      %3464 = vmatprep.mubr.bf16.mxu0 %v1924
      %3465 = vmatmul.mubr.bf16.gmra.mrb[0].mxu0 %v1734
      %v3466 = vpop.f32.mrb[0].mxu0
      %v3467 = vadd.f32 0.0, %v3466
      %v3468 = vpop.f32.mrb[0].mxu0
      %v3469 = vpop.f32.mrb[0].mxu0
      %v3470 = vadd.f32 0.0, %v3469
      %v3471 = vpop.f32.mrb[0].mxu0
      %3472 = vmatprep.mubr.bf16.mxu0 %v1936
      %3473 = vmatmul.mubr.bf16.gmra.mrb[0].mxu0 %v1735
      %v3474 = vpop.f32.mrb[0].mxu0
      %v3475 = vadd.f32 0.0, %v3474
      %v3476 = vpop.f32.mrb[0].mxu0
      %v3477 = vpop.f32.mrb[0].mxu0
      %v3478 = vadd.f32 0.0, %v3477
      %v3479 = vpop.f32.mrb[0].mxu0
      %3480 = vmatprep.mubr.bf16.mxu0 %v1948
      %3481 = vmatmul.mubr.bf16.gmra.mrb[0].mxu0 %v1736
      %v3482 = vpop.f32.mrb[0].mxu0
      %v3483 = vadd.f32 0.0, %v3482
      %v3484 = vpop.f32.mrb[0].mxu0
      %v3485 = vpop.f32.mrb[0].mxu0
      %v3486 = vadd.f32 0.0, %v3485
      %v3487 = vpop.f32.mrb[0].mxu0
      %3488 = vmatprep.mubr.bf16.mxu0 %v1960
      %3489 = vmatmul.mubr.bf16.gmra.mrb[0].mxu0 %v1737
      %v3490 = vpop.f32.mrb[0].mxu0
      %v3491 = vadd.f32 0.0, %v3490
      %v3492 = vpop.f32.mrb[0].mxu0
      %v3493 = vpop.f32.mrb[0].mxu0
      %v3494 = vadd.f32 0.0, %v3493
      %v3495 = vpop.f32.mrb[0].mxu0
      %3496 = vmatprep.mubr.bf16.mxu0 %v1972
      %3497 = vmatmul.mubr.bf16.gmra.mrb[0].mxu0 %v1738
      %v3498 = vpop.f32.mrb[0].mxu0
      %v3499 = vadd.f32 0.0, %v3498
      %v3500 = vpop.f32.mrb[0].mxu0
      %v3501 = vpop.f32.mrb[0].mxu0
      %v3502 = vadd.f32 0.0, %v3501
      %v3503 = vpop.f32.mrb[0].mxu0
      %3504 = vmatprep.mubr.bf16.mxu0 %v1984
      %3505 = vmatmul.mubr.bf16.gmra.mrb[0].mxu0 %v1739
      %v3506 = vpop.f32.mrb[0].mxu0
      %v3507 = vadd.f32 0.0, %v3506
      %v3508 = vpop.f32.mrb[0].mxu0
      %v3509 = vpop.f32.mrb[0].mxu0
      %v3510 = vadd.f32 0.0, %v3509
      %v3511 = vpop.f32.mrb[0].mxu0
      %3512 = vmatprep.mubr.bf16.mxu0 %v1996
      %3513 = vmatmul.mubr.bf16.gmra.mrb[0].mxu0 %v1740
      %v3514 = vpop.f32.mrb[0].mxu0
      %v3515 = vadd.f32 0.0, %v3514
      %v3516 = vpop.f32.mrb[0].mxu0
      %v3517 = vpop.f32.mrb[0].mxu0
      %v3518 = vadd.f32 0.0, %v3517
      %v3519 = vpop.f32.mrb[0].mxu0
      %3520 = vmatprep.mubr.bf16.mxu0 %v2008
      %3521 = vmatmul.mubr.bf16.gmra.mrb[0].mxu0 %v1741
      %v3522 = vpop.f32.mrb[0].mxu0
      %v3523 = vadd.f32 0.0, %v3522
      %v3524 = vpop.f32.mrb[0].mxu0
      %v3525 = vpop.f32.mrb[0].mxu0
      %v3526 = vadd.f32 0.0, %v3525
      %v3527 = vpop.f32.mrb[0].mxu0
      %3528 = vmatprep.mubr.bf16.mxu0 %v2020
      %3529 = vmatmul.mubr.bf16.gmra.mrb[0].mxu0 %v1742
      %v3530 = vpop.f32.mrb[0].mxu0
      %v3531 = vadd.f32 0.0, %v3530
      %v3532 = vpop.f32.mrb[0].mxu0
      %v3533 = vpop.f32.mrb[0].mxu0
      %v3534 = vadd.f32 0.0, %v3533
      %v3535 = vpop.f32.mrb[0].mxu0
      %3536 = vmatprep.mubr.bf16.mxu0 %v2032
      %3537 = vmatmul.mubr.bf16.gmra.mrb[0].mxu0 %v1743
      %v3538 = vpop.f32.mrb[0].mxu0
      %v3539 = vadd.f32 0.0, %v3538
      %v3540 = vpop.f32.mrb[0].mxu0
      %v3541 = vpop.f32.mrb[0].mxu0
      %v3542 = vadd.f32 0.0, %v3541
      %v3543 = vpop.f32.mrb[0].mxu0
      %3544 = vdwg.mxu0
      %3545 = vmatprep.subr.bf16.mxu0 0
      %3546 = vmatpush1.bf16.msra.mxu0 %v3352
      %3547 = vmatprep.subr.bf16.mxu0 0
      %3548 = vmatpush1.bf16.msra.mxu0 %v3353
      %3549 = vmatprep.subr.bf16.mxu0 0
      %3550 = vmatpush1.bf16.msra.mxu0 %v3354
      %3551 = vmatprep.subr.bf16.mxu0 0
      %3552 = vmatpush1.bf16.msra.mxu0 %v3355
      %3553 = vmatprep.subr.bf16.mxu0 0
      %3554 = vmatpush1.bf16.msra.mxu0 %v3356
      %3555 = vmatprep.subr.bf16.mxu0 0
      %3556 = vmatpush1.bf16.msra.mxu0 %v3357
      %3557 = vmatprep.subr.bf16.mxu0 0
      %3558 = vmatpush1.bf16.msra.mxu0 %v3358
      %3559 = vmatprep.subr.bf16.mxu0 0
      %3560 = vmatpush1.bf16.msra.mxu0 %v3359
      %3561 = vmatprep.subr.bf16.mxu0 0
      %3562 = vmatpush1.bf16.msra.mxu0 0
      %3563 = vmatprep.subr.bf16.mxu0 0
      %3564 = vmatpush1.bf16.msra.mxu0 0
      %3565 = vmatprep.subr.bf16.mxu0 0
      %3566 = vmatpush1.bf16.msra.mxu0 0
      %3567 = vmatprep.subr.bf16.mxu0 0
      %3568 = vmatpush1.bf16.msra.mxu0 0
      %3569 = vmatprep.subr.bf16.mxu0 0
      %3570 = vmatpush1.bf16.msra.mxu0 0
      %3571 = vmatprep.subr.bf16.mxu0 0
      %3572 = vmatpush1.bf16.msra.mxu0 0
      %3573 = vmatprep.subr.bf16.mxu0 0
      %3574 = vmatpush1.bf16.msra.mxu0 0
      %3575 = vmatprep.subr.bf16.mxu0 0
      %3576 = vmatpush1.bf16.msra.mxu0 0
      %3577 = vmatprep.mubr.bf16.mxu0 0
      %3578 = vmatmul.mubr.bf16.gmra.mrb[0].mxu0 %v2060
      %v3579 = vpop.f32.mrb[0].mxu0
      %v3580 = vadd.f32 %v3419, %v3579
      %v3581 = vpop.f32.mrb[0].mxu0
      %v3582 = vpop.f32.mrb[0].mxu0
      %v3583 = vadd.f32 %v3422, %v3582
      %v3584 = vpop.f32.mrb[0].mxu0
      %3585 = vmatprep.mubr.bf16.mxu0 0
      %3586 = vmatmul.mubr.bf16.gmra.mrb[0].mxu0 %v2063
      %v3587 = vpop.f32.mrb[0].mxu0
      %v3588 = vadd.f32 %v3427, %v3587
      %v3589 = vpop.f32.mrb[0].mxu0
      %v3590 = vpop.f32.mrb[0].mxu0
      %v3591 = vadd.f32 %v3430, %v3590
      %v3592 = vpop.f32.mrb[0].mxu0
      %3593 = vmatprep.mubr.bf16.mxu0 0
      %3594 = vmatmul.mubr.bf16.gmra.mrb[0].mxu0 %v2066
      %v3595 = vpop.f32.mrb[0].mxu0
      %v3596 = vadd.f32 %v3435, %v3595
      %v3597 = vpop.f32.mrb[0].mxu0
      %v3598 = vpop.f32.mrb[0].mxu0
      %v3599 = vadd.f32 %v3438, %v3598
      %v3600 = vpop.f32.mrb[0].mxu0
      %3601 = vmatprep.mubr.bf16.mxu0 0
      %3602 = vmatmul.mubr.bf16.gmra.mrb[0].mxu0 %v2069
      %v3603 = vpop.f32.mrb[0].mxu0
      %v3604 = vadd.f32 %v3443, %v3603
      %v3605 = vpop.f32.mrb[0].mxu0
      %v3606 = vpop.f32.mrb[0].mxu0
      %v3607 = vadd.f32 %v3446, %v3606
      %v3608 = vpop.f32.mrb[0].mxu0
      %3609 = vmatprep.mubr.bf16.mxu0 0
      %3610 = vmatmul.mubr.bf16.gmra.mrb[0].mxu0 %v2072
      %v3611 = vpop.f32.mrb[0].mxu0
      %v3612 = vadd.f32 %v3451, %v3611
      %v3613 = vpop.f32.mrb[0].mxu0
      %v3614 = vpop.f32.mrb[0].mxu0
      %v3615 = vadd.f32 %v3454, %v3614
      %v3616 = vpop.f32.mrb[0].mxu0
      %3617 = vmatprep.mubr.bf16.mxu0 0
      %3618 = vmatmul.mubr.bf16.gmra.mrb[0].mxu0 %v2075
      %v3619 = vpop.f32.mrb[0].mxu0
      %v3620 = vadd.f32 %v3459, %v3619
      %v3621 = vpop.f32.mrb[0].mxu0
      %v3622 = vpop.f32.mrb[0].mxu0
      %v3623 = vadd.f32 %v3462, %v3622
      %v3624 = vpop.f32.mrb[0].mxu0
      %3625 = vmatprep.mubr.bf16.mxu0 0
      %3626 = vmatmul.mubr.bf16.gmra.mrb[0].mxu0 %v2078
      %v3627 = vpop.f32.mrb[0].mxu0
      %v3628 = vadd.f32 %v3467, %v3627
      %v3629 = vpop.f32.mrb[0].mxu0
      %v3630 = vpop.f32.mrb[0].mxu0
      %v3631 = vadd.f32 %v3470, %v3630
      %v3632 = vpop.f32.mrb[0].mxu0
      %3633 = vmatprep.mubr.bf16.mxu0 0
      %3634 = vmatmul.mubr.bf16.gmra.mrb[0].mxu0 %v2081
      %v3635 = vpop.f32.mrb[0].mxu0
      %v3636 = vadd.f32 %v3475, %v3635
      %v3637 = vpop.f32.mrb[0].mxu0
      %v3638 = vpop.f32.mrb[0].mxu0
      %v3639 = vadd.f32 %v3478, %v3638
      %v3640 = vpop.f32.mrb[0].mxu0
      %3641 = vmatprep.mubr.bf16.mxu0 0
      %3642 = vmatmul.mubr.bf16.gmra.mrb[0].mxu0 %v2084
      %v3643 = vpop.f32.mrb[0].mxu0
      %v3644 = vadd.f32 %v3483, %v3643
      %v3645 = vpop.f32.mrb[0].mxu0
      %v3646 = vpop.f32.mrb[0].mxu0
      %v3647 = vadd.f32 %v3486, %v3646
      %v3648 = vpop.f32.mrb[0].mxu0
      %3649 = vmatprep.mubr.bf16.mxu0 0
      %3650 = vmatmul.mubr.bf16.gmra.mrb[0].mxu0 %v2087
      %v3651 = vpop.f32.mrb[0].mxu0
      %v3652 = vadd.f32 %v3491, %v3651
      %v3653 = vpop.f32.mrb[0].mxu0
      %v3654 = vpop.f32.mrb[0].mxu0
      %v3655 = vadd.f32 %v3494, %v3654
      %v3656 = vpop.f32.mrb[0].mxu0
      %3657 = vmatprep.mubr.bf16.mxu0 0
      %3658 = vmatmul.mubr.bf16.gmra.mrb[0].mxu0 %v2090
      %v3659 = vpop.f32.mrb[0].mxu0
      %v3660 = vadd.f32 %v3499, %v3659
      %v3661 = vpop.f32.mrb[0].mxu0
      %v3662 = vpop.f32.mrb[0].mxu0
      %v3663 = vadd.f32 %v3502, %v3662
      %v3664 = vpop.f32.mrb[0].mxu0
      %3665 = vmatprep.mubr.bf16.mxu0 0
      %3666 = vmatmul.mubr.bf16.gmra.mrb[0].mxu0 %v2093
      %v3667 = vpop.f32.mrb[0].mxu0
      %v3668 = vadd.f32 %v3507, %v3667
      %v3669 = vpop.f32.mrb[0].mxu0
      %v3670 = vpop.f32.mrb[0].mxu0
      %v3671 = vadd.f32 %v3510, %v3670
      %v3672 = vpop.f32.mrb[0].mxu0
      %3673 = vmatprep.mubr.bf16.mxu0 0
      %3674 = vmatmul.mubr.bf16.gmra.mrb[0].mxu0 %v2096
      %v3675 = vpop.f32.mrb[0].mxu0
      %v3676 = vadd.f32 %v3515, %v3675
      %v3677 = vpop.f32.mrb[0].mxu0
      %v3678 = vpop.f32.mrb[0].mxu0
      %v3679 = vadd.f32 %v3518, %v3678
      %v3680 = vpop.f32.mrb[0].mxu0
      %3681 = vmatprep.mubr.bf16.mxu0 0
      %3682 = vmatmul.mubr.bf16.gmra.mrb[0].mxu0 %v2099
      %v3683 = vpop.f32.mrb[0].mxu0
      %v3684 = vadd.f32 %v3523, %v3683
      %v3685 = vpop.f32.mrb[0].mxu0
      %v3686 = vpop.f32.mrb[0].mxu0
      %v3687 = vadd.f32 %v3526, %v3686
      %v3688 = vpop.f32.mrb[0].mxu0
      %3689 = vmatprep.mubr.bf16.mxu0 0
      %3690 = vmatmul.mubr.bf16.gmra.mrb[0].mxu0 %v2102
      %v3691 = vpop.f32.mrb[0].mxu0
      %v3692 = vadd.f32 %v3531, %v3691
      %v3693 = vpop.f32.mrb[0].mxu0
      %v3694 = vpop.f32.mrb[0].mxu0
      %v3695 = vadd.f32 %v3534, %v3694
      %v3696 = vpop.f32.mrb[0].mxu0
      %3697 = vmatprep.mubr.bf16.mxu0 0
      %3698 = vmatmul.mubr.bf16.gmra.mrb[0].mxu0 %v2105
      %v3699 = vpop.f32.mrb[0].mxu0
      %v3700 = vadd.f32 %v3539, %v3699
      %v3701 = vpop.f32.mrb[0].mxu0
      %v3702 = vpop.f32.mrb[0].mxu0
      %v3703 = vadd.f32 %v3542, %v3702
      %v3704 = vpop.f32.mrb[0].mxu0
      %3705 = vdwg.mxu0
      %v3706 = vadd.f32 %v3159, %v3580
      %v3707 = vadd.f32 %v3160, %v3583
      %v3708 = vadd.f32 %v3161, %v3588
      %v3709 = vadd.f32 %v3162, %v3591
      %v3710 = vadd.f32 %v3163, %v3596
      %v3711 = vadd.f32 %v3164, %v3599
      %v3712 = vadd.f32 %v3165, %v3604
      %v3713 = vadd.f32 %v3166, %v3607
      %v3714 = vadd.f32 %v3167, %v3612
      %v3715 = vadd.f32 %v3168, %v3615
      %v3716 = vadd.f32 %v3169, %v3620
      %v3717 = vadd.f32 %v3170, %v3623
      %v3718 = vadd.f32 %v3171, %v3628
      %v3719 = vadd.f32 %v3172, %v3631
      %v3720 = vadd.f32 %v3173, %v3636
      %v3721 = vadd.f32 %v3174, %v3639
      %v3722 = vadd.f32 %v3175, %v3644
      %v3723 = vadd.f32 %v3176, %v3647
      %v3724 = vadd.f32 %v3177, %v3652
      %v3725 = vadd.f32 %v3178, %v3655
      %v3726 = vadd.f32 %v3179, %v3660
      %v3727 = vadd.f32 %v3180, %v3663
      %v3728 = vadd.f32 %v3181, %v3668
      %v3729 = vadd.f32 %v3182, %v3671
      %v3730 = vadd.f32 %v3183, %v3676
      %v3731 = vadd.f32 %v3184, %v3679
      %v3732 = vadd.f32 %v3185, %v3684
      %v3733 = vadd.f32 %v3186, %v3687
      %v3734 = vadd.f32 %v3187, %v3692
      %v3735 = vadd.f32 %v3188, %v3695
      %v3736 = vadd.f32 %v3189, %v3700
      %v3737 = vadd.f32 %v3190, %v3703
      %v3738 = vmax.f32 %v3706, 0.0
      %v3739 = vmax.f32 %v3707, 0.0
      %v3740 = vmax.f32 %v3708, 0.0
      %v3741 = vmax.f32 %v3709, 0.0
      %v3742 = vmax.f32 %v3710, 0.0
      %v3743 = vmax.f32 %v3711, 0.0
      %v3744 = vmax.f32 %v3712, 0.0
      %v3745 = vmax.f32 %v3713, 0.0
      %v3746 = vmax.f32 %v3714, 0.0
      %v3747 = vmax.f32 %v3715, 0.0
      %v3748 = vmax.f32 %v3716, 0.0
      %v3749 = vmax.f32 %v3717, 0.0
      %v3750 = vmax.f32 %v3718, 0.0
      %v3751 = vmax.f32 %v3719, 0.0
      %v3752 = vmax.f32 %v3720, 0.0
      %v3753 = vmax.f32 %v3721, 0.0
      %v3754 = vmax.f32 %v3722, 0.0
      %v3755 = vmax.f32 %v3723, 0.0
      %v3756 = vmax.f32 %v3724, 0.0
      %v3757 = vmax.f32 %v3725, 0.0
      %v3758 = vmax.f32 %v3726, 0.0
      %v3759 = vmax.f32 %v3727, 0.0
      %v3760 = vmax.f32 %v3728, 0.0
      %v3761 = vmax.f32 %v3729, 0.0
      %v3762 = vmax.f32 %v3730, 0.0
      %v3763 = vmax.f32 %v3731, 0.0
      %v3764 = vmax.f32 %v3732, 0.0
      %v3765 = vmax.f32 %v3733, 0.0
      %v3766 = vmax.f32 %v3734, 0.0
      %v3767 = vmax.f32 %v3735, 0.0
      %v3768 = vmax.f32 %v3736, 0.0
      %v3769 = vmax.f32 %v3737, 0.0
      %v3770 = vpack.c.bf16 %v3739, %v3738
      %v3771 = vpack.c.bf16 %v3741, %v3740
      %v3772 = vpack.c.bf16 %v3743, %v3742
      %v3773 = vpack.c.bf16 %v3745, %v3744
      %v3774 = vpack.c.bf16 %v3747, %v3746
      %v3775 = vpack.c.bf16 %v3749, %v3748
      %v3776 = vpack.c.bf16 %v3751, %v3750
      %v3777 = vpack.c.bf16 %v3753, %v3752
      %v3778 = vpack.c.bf16 %v3755, %v3754
      %v3779 = vpack.c.bf16 %v3757, %v3756
      %v3780 = vpack.c.bf16 %v3759, %v3758
      %v3781 = vpack.c.bf16 %v3761, %v3760
      %v3782 = vpack.c.bf16 %v3763, %v3762
      %v3783 = vpack.c.bf16 %v3765, %v3764
      %v3784 = vpack.c.bf16 %v3767, %v3766
      %v3785 = vpack.c.bf16 %v3769, %v3768
      %v3786 = vld [vmem:[%s5] sm:$0xf]
      %v3787 = vld [vmem:[%s5 + $0x4] sm:$0xf]
      %v3788 = vld [vmem:[%s5 + $0x8] sm:$0xf]
      %v3789 = vld [vmem:[%s5 + $0xc] sm:$0xf]
      %v3790 = vld [vmem:[%s5 + $0x10] sm:$0xf]
      %v3791 = vld [vmem:[%s5 + $0x14] sm:$0xf]
      %v3792 = vld [vmem:[%s5 + $0x18] sm:$0xf]
      %v3793 = vld [vmem:[%s5 + $0x1c] sm:$0xf]
      %v3794 = vld [vmem:[%s5 + $0x20] sm:$0xf]
      %v3795 = vld [vmem:[%s5 + $0x24] sm:$0xf]
      %v3796 = vld [vmem:[%s5 + $0x28] sm:$0xf]
      %v3797 = vld [vmem:[%s5 + $0x2c] sm:$0xf]
      %v3798 = vld [vmem:[%s5 + $0x30] sm:$0xf]
      %v3799 = vld [vmem:[%s5 + $0x34] sm:$0xf]
      %v3800 = vld [vmem:[%s5 + $0x38] sm:$0xf]
      %v3801 = vld [vmem:[%s5 + $0x3c] sm:$0xf]
      %v3802 = vld [vmem:[%s6] sm:$0x1]
      %v3804 = vlaneseq
      %v3805 = vshrl.u32 %v3804, 7
      %v3806 = vsub.s32 0, %v3805
      %v3807 = vrot.slane %v3802, %v3806
      %v3825 = vunpack.c.l.b16 %v3786
      %v3826 = vunpack.c.l.b16 %v3787
      %v3827 = vunpack.c.l.b16 %v3788
      %v3828 = vunpack.c.l.b16 %v3789
      %v3829 = vunpack.c.l.b16 %v3790
      %v3830 = vunpack.c.l.b16 %v3791
      %v3831 = vunpack.c.l.b16 %v3792
      %v3832 = vunpack.c.l.b16 %v3793
      %v3833 = vunpack.c.l.b16 %v3794
      %v3834 = vunpack.c.l.b16 %v3795
      %v3835 = vunpack.c.l.b16 %v3796
      %v3836 = vunpack.c.l.b16 %v3797
      %v3837 = vunpack.c.l.b16 %v3798
      %v3838 = vunpack.c.l.b16 %v3799
      %v3839 = vunpack.c.l.b16 %v3800
      %v3840 = vunpack.c.l.b16 %v3801
      %v3841 = vpack.c.b16 %v3826, %v3825
      %v3842 = vpack.c.b16 %v3828, %v3827
      %v3843 = vpack.c.b16 %v3830, %v3829
      %v3844 = vpack.c.b16 %v3832, %v3831
      %v3845 = vpack.c.b16 %v3834, %v3833
      %v3846 = vpack.c.b16 %v3836, %v3835
      %v3847 = vpack.c.b16 %v3838, %v3837
      %v3848 = vpack.c.b16 %v3840, %v3839
      %3857 = vmatprep.subr.bf16.mxu0 0
      %3858 = vmatpush1.bf16.msra.mxu0 %v3841
      %3859 = vmatprep.subr.bf16.mxu0 0
      %3860 = vmatpush1.bf16.msra.mxu0 %v3842
      %3861 = vmatprep.subr.bf16.mxu0 0
      %3862 = vmatpush1.bf16.msra.mxu0 %v3843
      %3863 = vmatprep.subr.bf16.mxu0 0
      %3864 = vmatpush1.bf16.msra.mxu0 %v3844
      %3865 = vmatprep.subr.bf16.mxu0 0
      %3866 = vmatpush1.bf16.msra.mxu0 %v3845
      %3867 = vmatprep.subr.bf16.mxu0 0
      %3868 = vmatpush1.bf16.msra.mxu0 %v3846
      %3869 = vmatprep.subr.bf16.mxu0 0
      %3870 = vmatpush1.bf16.msra.mxu0 %v3847
      %3871 = vmatprep.subr.bf16.mxu0 0
      %3872 = vmatpush1.bf16.msra.mxu0 %v3848
      %3873 = vmatprep.subr.bf16.mxu0 0
      %3874 = vmatpush1.bf16.msra.mxu0 0
      %3875 = vmatprep.subr.bf16.mxu0 0
      %3876 = vmatpush1.bf16.msra.mxu0 0
      %3877 = vmatprep.subr.bf16.mxu0 0
      %3878 = vmatpush1.bf16.msra.mxu0 0
      %3879 = vmatprep.subr.bf16.mxu0 0
      %3880 = vmatpush1.bf16.msra.mxu0 0
      %3881 = vmatprep.subr.bf16.mxu0 0
      %3882 = vmatpush1.bf16.msra.mxu0 0
      %3883 = vmatprep.subr.bf16.mxu0 0
      %3884 = vmatpush1.bf16.msra.mxu0 0
      %3885 = vmatprep.subr.bf16.mxu0 0
      %3886 = vmatpush1.bf16.msra.mxu0 0
      %3887 = vmatprep.subr.bf16.mxu0 0
      %3888 = vmatpush1.bf16.msra.mxu0 0
      %3889 = vmatprep.mubr.bf16.mxu0 0
      %3890 = vmatmul.mubr.bf16.gmra.mrb[0].mxu0 %v3770
      %v3891 = vpop.f32.mrb[0].mxu0
      %v3892 = vadd.f32 %v3807, %v3891
      %v3893 = vpop.f32.mrb[0].mxu0
      %v3894 = vpop.f32.mrb[0].mxu0
      %v3895 = vadd.f32 %v3807, %v3894
      %v3896 = vpop.f32.mrb[0].mxu0
      %3897 = vmatprep.mubr.bf16.mxu0 0
      %3898 = vmatmul.mubr.bf16.gmra.mrb[0].mxu0 %v3771
      %v3899 = vpop.f32.mrb[0].mxu0
      %v3900 = vadd.f32 %v3807, %v3899
      %v3901 = vpop.f32.mrb[0].mxu0
      %v3902 = vpop.f32.mrb[0].mxu0
      %v3903 = vadd.f32 %v3807, %v3902
      %v3904 = vpop.f32.mrb[0].mxu0
      %3905 = vmatprep.mubr.bf16.mxu0 0
      %3906 = vmatmul.mubr.bf16.gmra.mrb[0].mxu0 %v3772
      %v3907 = vpop.f32.mrb[0].mxu0
      %v3908 = vadd.f32 %v3807, %v3907
      %v3909 = vpop.f32.mrb[0].mxu0
      %v3910 = vpop.f32.mrb[0].mxu0
      %v3911 = vadd.f32 %v3807, %v3910
      %v3912 = vpop.f32.mrb[0].mxu0
      %3913 = vmatprep.mubr.bf16.mxu0 0
      %3914 = vmatmul.mubr.bf16.gmra.mrb[0].mxu0 %v3773
      %v3915 = vpop.f32.mrb[0].mxu0
      %v3916 = vadd.f32 %v3807, %v3915
      %v3917 = vpop.f32.mrb[0].mxu0
      %v3918 = vpop.f32.mrb[0].mxu0
      %v3919 = vadd.f32 %v3807, %v3918
      %v3920 = vpop.f32.mrb[0].mxu0
      %3921 = vmatprep.mubr.bf16.mxu0 0
      %3922 = vmatmul.mubr.bf16.gmra.mrb[0].mxu0 %v3774
      %v3923 = vpop.f32.mrb[0].mxu0
      %v3924 = vadd.f32 %v3807, %v3923
      %v3925 = vpop.f32.mrb[0].mxu0
      %v3926 = vpop.f32.mrb[0].mxu0
      %v3927 = vadd.f32 %v3807, %v3926
      %v3928 = vpop.f32.mrb[0].mxu0
      %3929 = vmatprep.mubr.bf16.mxu0 0
      %3930 = vmatmul.mubr.bf16.gmra.mrb[0].mxu0 %v3775
      %v3931 = vpop.f32.mrb[0].mxu0
      %v3932 = vadd.f32 %v3807, %v3931
      %v3933 = vpop.f32.mrb[0].mxu0
      %v3934 = vpop.f32.mrb[0].mxu0
      %v3935 = vadd.f32 %v3807, %v3934
      %v3936 = vpop.f32.mrb[0].mxu0
      %3937 = vmatprep.mubr.bf16.mxu0 0
      %3938 = vmatmul.mubr.bf16.gmra.mrb[0].mxu0 %v3776
      %v3939 = vpop.f32.mrb[0].mxu0
      %v3940 = vadd.f32 %v3807, %v3939
      %v3941 = vpop.f32.mrb[0].mxu0
      %v3942 = vpop.f32.mrb[0].mxu0
      %v3943 = vadd.f32 %v3807, %v3942
      %v3944 = vpop.f32.mrb[0].mxu0
      %3945 = vmatprep.mubr.bf16.mxu0 0
      %3946 = vmatmul.mubr.bf16.gmra.mrb[0].mxu0 %v3777
      %v3947 = vpop.f32.mrb[0].mxu0
      %v3948 = vadd.f32 %v3807, %v3947
      %v3949 = vpop.f32.mrb[0].mxu0
      %v3950 = vpop.f32.mrb[0].mxu0
      %v3951 = vadd.f32 %v3807, %v3950
      %v3952 = vpop.f32.mrb[0].mxu0
      %3953 = vmatprep.mubr.bf16.mxu0 0
      %3954 = vmatmul.mubr.bf16.gmra.mrb[0].mxu0 %v3778
      %v3955 = vpop.f32.mrb[0].mxu0
      %v3956 = vadd.f32 %v3807, %v3955
      %v3957 = vpop.f32.mrb[0].mxu0
      %v3958 = vpop.f32.mrb[0].mxu0
      %v3959 = vadd.f32 %v3807, %v3958
      %v3960 = vpop.f32.mrb[0].mxu0
      %3961 = vmatprep.mubr.bf16.mxu0 0
      %3962 = vmatmul.mubr.bf16.gmra.mrb[0].mxu0 %v3779
      %v3963 = vpop.f32.mrb[0].mxu0
      %v3964 = vadd.f32 %v3807, %v3963
      %v3965 = vpop.f32.mrb[0].mxu0
      %v3966 = vpop.f32.mrb[0].mxu0
      %v3967 = vadd.f32 %v3807, %v3966
      %v3968 = vpop.f32.mrb[0].mxu0
      %3969 = vmatprep.mubr.bf16.mxu0 0
      %3970 = vmatmul.mubr.bf16.gmra.mrb[0].mxu0 %v3780
      %v3971 = vpop.f32.mrb[0].mxu0
      %v3972 = vadd.f32 %v3807, %v3971
      %v3973 = vpop.f32.mrb[0].mxu0
      %v3974 = vpop.f32.mrb[0].mxu0
      %v3975 = vadd.f32 %v3807, %v3974
      %v3976 = vpop.f32.mrb[0].mxu0
      %3977 = vmatprep.mubr.bf16.mxu0 0
      %3978 = vmatmul.mubr.bf16.gmra.mrb[0].mxu0 %v3781
      %v3979 = vpop.f32.mrb[0].mxu0
      %v3980 = vadd.f32 %v3807, %v3979
      %v3981 = vpop.f32.mrb[0].mxu0
      %v3982 = vpop.f32.mrb[0].mxu0
      %v3983 = vadd.f32 %v3807, %v3982
      %v3984 = vpop.f32.mrb[0].mxu0
      %3985 = vmatprep.mubr.bf16.mxu0 0
      %3986 = vmatmul.mubr.bf16.gmra.mrb[0].mxu0 %v3782
      %v3987 = vpop.f32.mrb[0].mxu0
      %v3988 = vadd.f32 %v3807, %v3987
      %v3989 = vpop.f32.mrb[0].mxu0
      %v3990 = vpop.f32.mrb[0].mxu0
      %v3991 = vadd.f32 %v3807, %v3990
      %v3992 = vpop.f32.mrb[0].mxu0
      %3993 = vmatprep.mubr.bf16.mxu0 0
      %3994 = vmatmul.mubr.bf16.gmra.mrb[0].mxu0 %v3783
      %v3995 = vpop.f32.mrb[0].mxu0
      %v3996 = vadd.f32 %v3807, %v3995
      %v3997 = vpop.f32.mrb[0].mxu0
      %v3998 = vpop.f32.mrb[0].mxu0
      %v3999 = vadd.f32 %v3807, %v3998
      %v4000 = vpop.f32.mrb[0].mxu0
      %4001 = vmatprep.mubr.bf16.mxu0 0
      %4002 = vmatmul.mubr.bf16.gmra.mrb[0].mxu0 %v3784
      %v4003 = vpop.f32.mrb[0].mxu0
      %v4004 = vadd.f32 %v3807, %v4003
      %v4005 = vpop.f32.mrb[0].mxu0
      %v4006 = vpop.f32.mrb[0].mxu0
      %v4007 = vadd.f32 %v3807, %v4006
      %v4008 = vpop.f32.mrb[0].mxu0
      %4009 = vmatprep.mubr.bf16.mxu0 0
      %4010 = vmatmul.mubr.bf16.gmra.mrb[0].mxu0 %v3785
      %v4011 = vpop.f32.mrb[0].mxu0
      %v4012 = vadd.f32 %v3807, %v4011
      %v4013 = vpop.f32.mrb[0].mxu0
      %v4014 = vpop.f32.mrb[0].mxu0
      %v4015 = vadd.f32 %v3807, %v4014
      %v4016 = vpop.f32.mrb[0].mxu0
      %4017 = vdwg.mxu0
      %v4018 = vadd.f32 %v3892, %v568
      %v4019 = vadd.f32 %v3895, %v571
      %v4020 = vadd.f32 %v3900, %v576
      %v4021 = vadd.f32 %v3903, %v579
      %v4022 = vadd.f32 %v3908, %v584
      %v4023 = vadd.f32 %v3911, %v587
      %v4024 = vadd.f32 %v3916, %v592
      %v4025 = vadd.f32 %v3919, %v595
      %v4026 = vadd.f32 %v3924, %v600
      %v4027 = vadd.f32 %v3927, %v603
      %v4028 = vadd.f32 %v3932, %v608
      %v4029 = vadd.f32 %v3935, %v611
      %v4030 = vadd.f32 %v3940, %v616
      %v4031 = vadd.f32 %v3943, %v619
      %v4032 = vadd.f32 %v3948, %v624
      %v4033 = vadd.f32 %v3951, %v627
      %v4034 = vadd.f32 %v3956, %v632
      %v4035 = vadd.f32 %v3959, %v635
      %v4036 = vadd.f32 %v3964, %v640
      %v4037 = vadd.f32 %v3967, %v643
      %v4038 = vadd.f32 %v3972, %v648
      %v4039 = vadd.f32 %v3975, %v651
      %v4040 = vadd.f32 %v3980, %v656
      %v4041 = vadd.f32 %v3983, %v659
      %v4042 = vadd.f32 %v3988, %v664
      %v4043 = vadd.f32 %v3991, %v667
      %v4044 = vadd.f32 %v3996, %v672
      %v4045 = vadd.f32 %v3999, %v675
      %v4046 = vadd.f32 %v4004, %v680
      %v4047 = vadd.f32 %v4007, %v683
      %v4048 = vadd.f32 %v4012, %v688
      %v4049 = vadd.f32 %v4015, %v691
      %v4050 = vmax.f32 %v4018, 0.0
      %v4051 = vmax.f32 %v4019, 0.0
      %v4052 = vmax.f32 %v4020, 0.0
      %v4053 = vmax.f32 %v4021, 0.0
      %v4054 = vmax.f32 %v4022, 0.0
      %v4055 = vmax.f32 %v4023, 0.0
      %v4056 = vmax.f32 %v4024, 0.0
      %v4057 = vmax.f32 %v4025, 0.0
      %v4058 = vmax.f32 %v4026, 0.0
      %v4059 = vmax.f32 %v4027, 0.0
      %v4060 = vmax.f32 %v4028, 0.0
      %v4061 = vmax.f32 %v4029, 0.0
      %v4062 = vmax.f32 %v4030, 0.0
      %v4063 = vmax.f32 %v4031, 0.0
      %v4064 = vmax.f32 %v4032, 0.0
      %v4065 = vmax.f32 %v4033, 0.0
      %v4066 = vmax.f32 %v4034, 0.0
      %v4067 = vmax.f32 %v4035, 0.0
      %v4068 = vmax.f32 %v4036, 0.0
      %v4069 = vmax.f32 %v4037, 0.0
      %v4070 = vmax.f32 %v4038, 0.0
      %v4071 = vmax.f32 %v4039, 0.0
      %v4072 = vmax.f32 %v4040, 0.0
      %v4073 = vmax.f32 %v4041, 0.0
      %v4074 = vmax.f32 %v4042, 0.0
      %v4075 = vmax.f32 %v4043, 0.0
      %v4076 = vmax.f32 %v4044, 0.0
      %v4077 = vmax.f32 %v4045, 0.0
      %v4078 = vmax.f32 %v4046, 0.0
      %v4079 = vmax.f32 %v4047, 0.0
      %v4080 = vmax.f32 %v4048, 0.0
      %v4081 = vmax.f32 %v4049, 0.0
      %v4082 = vpack.c.bf16 %v4051, %v4050
      %v4083 = vpack.c.bf16 %v4053, %v4052
      %v4084 = vpack.c.bf16 %v4055, %v4054
      %v4085 = vpack.c.bf16 %v4057, %v4056
      %v4086 = vpack.c.bf16 %v4059, %v4058
      %v4087 = vpack.c.bf16 %v4061, %v4060
      %v4088 = vpack.c.bf16 %v4063, %v4062
      %v4089 = vpack.c.bf16 %v4065, %v4064
      %v4090 = vpack.c.bf16 %v4067, %v4066
      %v4091 = vpack.c.bf16 %v4069, %v4068
      %v4092 = vpack.c.bf16 %v4071, %v4070
      %v4093 = vpack.c.bf16 %v4073, %v4072
      %v4094 = vpack.c.bf16 %v4075, %v4074
      %v4095 = vpack.c.bf16 %v4077, %v4076
      %v4096 = vpack.c.bf16 %v4079, %v4078
      %v4097 = vpack.c.bf16 %v4081, %v4080
      %v4114 = vunpack.c.l.b16 %v4082
      %v4115 = vunpack.c.h.b16 %v4082
      %v4116 = vunpack.c.l.b16 %v4083
      %v4117 = vunpack.c.h.b16 %v4083
      %v4118 = vunpack.c.l.b16 %v4084
      %v4119 = vunpack.c.h.b16 %v4084
      %v4120 = vunpack.c.l.b16 %v4085
      %v4121 = vunpack.c.h.b16 %v4085
      %v4122 = vunpack.c.l.b16 %v4086
      %v4123 = vunpack.c.h.b16 %v4086
      %v4124 = vunpack.c.l.b16 %v4087
      %v4125 = vunpack.c.h.b16 %v4087
      %v4126 = vunpack.c.l.b16 %v4088
      %v4127 = vunpack.c.h.b16 %v4088
      %v4128 = vunpack.c.l.b16 %v4089
      %v4129 = vunpack.c.h.b16 %v4089
      %v4130 = vunpack.c.l.b16 %v4090
      %v4131 = vunpack.c.h.b16 %v4090
      %v4132 = vunpack.c.l.b16 %v4091
      %v4133 = vunpack.c.h.b16 %v4091
      %v4134 = vunpack.c.l.b16 %v4092
      %v4135 = vunpack.c.h.b16 %v4092
      %v4136 = vunpack.c.l.b16 %v4093
      %v4137 = vunpack.c.h.b16 %v4093
      %v4138 = vunpack.c.l.b16 %v4094
      %v4139 = vunpack.c.h.b16 %v4094
      %v4140 = vunpack.c.l.b16 %v4095
      %v4141 = vunpack.c.h.b16 %v4095
      %v4142 = vunpack.c.l.b16 %v4096
      %v4143 = vunpack.c.h.b16 %v4096
      %v4144 = vunpack.c.l.b16 %v4097
      %v4145 = vunpack.c.h.b16 %v4097
      %v4146 = vpack.c.b16 %v4114, %v4114
      %v4147 = vpack.c.b16 %v4115, %v4115
      %v4148 = vpack.c.b16 %v4116, %v4116
      %v4149 = vpack.c.b16 %v4117, %v4117
      %v4150 = vpack.c.b16 %v4118, %v4118
      %v4151 = vpack.c.b16 %v4119, %v4119
      %v4152 = vpack.c.b16 %v4120, %v4120
      %v4153 = vpack.c.b16 %v4121, %v4121
      %v4154 = vpack.c.b16 %v4122, %v4122
      %v4155 = vpack.c.b16 %v4123, %v4123
      %v4156 = vpack.c.b16 %v4124, %v4124
      %v4157 = vpack.c.b16 %v4125, %v4125
      %v4158 = vpack.c.b16 %v4126, %v4126
      %v4159 = vpack.c.b16 %v4127, %v4127
      %v4160 = vpack.c.b16 %v4128, %v4128
      %v4161 = vpack.c.b16 %v4129, %v4129
      %v4162 = vpack.c.b16 %v4130, %v4130
      %v4163 = vpack.c.b16 %v4131, %v4131
      %v4164 = vpack.c.b16 %v4132, %v4132
      %v4165 = vpack.c.b16 %v4133, %v4133
      %v4166 = vpack.c.b16 %v4134, %v4134
      %v4167 = vpack.c.b16 %v4135, %v4135
      %v4168 = vpack.c.b16 %v4136, %v4136
      %v4169 = vpack.c.b16 %v4137, %v4137
      %v4170 = vpack.c.b16 %v4138, %v4138
      %v4171 = vpack.c.b16 %v4139, %v4139
      %v4172 = vpack.c.b16 %v4140, %v4140
      %v4173 = vpack.c.b16 %v4141, %v4141
      %v4174 = vpack.c.b16 %v4142, %v4142
      %v4175 = vpack.c.b16 %v4143, %v4143
      %v4176 = vpack.c.b16 %v4144, %v4144
      %v4177 = vpack.c.b16 %v4145, %v4145
      %4210 = vst [vmem:[%s332] sm:$0xf] %v4146
      %4211 = vst [vmem:[%s332 + $0x4] sm:$0xf] %v4147
      %4212 = vst [vmem:[%s332 + $0x8] sm:$0xf] %v4148
      %4213 = vst [vmem:[%s332 + $0xc] sm:$0xf] %v4149
      %4214 = vst [vmem:[%s332 + $0x10] sm:$0xf] %v4150
      %4215 = vst [vmem:[%s332 + $0x14] sm:$0xf] %v4151
      %4216 = vst [vmem:[%s332 + $0x18] sm:$0xf] %v4152
      %4217 = vst [vmem:[%s332 + $0x1c] sm:$0xf] %v4153
      %4218 = vst [vmem:[%s332 + $0x20] sm:$0xf] %v4154
      %4219 = vst [vmem:[%s332 + $0x24] sm:$0xf] %v4155
      %4220 = vst [vmem:[%s332 + $0x28] sm:$0xf] %v4156
      %4221 = vst [vmem:[%s332 + $0x2c] sm:$0xf] %v4157
      %4222 = vst [vmem:[%s332 + $0x30] sm:$0xf] %v4158
      %4223 = vst [vmem:[%s332 + $0x34] sm:$0xf] %v4159
      %4224 = vst [vmem:[%s332 + $0x38] sm:$0xf] %v4160
      %4225 = vst [vmem:[%s332 + $0x3c] sm:$0xf] %v4161
      %4226 = vst [vmem:[%s332 + $0x40] sm:$0xf] %v4162
      %4227 = vst [vmem:[%s332 + $0x44] sm:$0xf] %v4163
      %4228 = vst [vmem:[%s332 + $0x48] sm:$0xf] %v4164
      %4229 = vst [vmem:[%s332 + $0x4c] sm:$0xf] %v4165
      %4230 = vst [vmem:[%s332 + $0x50] sm:$0xf] %v4166
      %4231 = vst [vmem:[%s332 + $0x54] sm:$0xf] %v4167
      %4232 = vst [vmem:[%s332 + $0x58] sm:$0xf] %v4168
      %4233 = vst [vmem:[%s332 + $0x5c] sm:$0xf] %v4169
      %4234 = vst [vmem:[%s332 + $0x60] sm:$0xf] %v4170
      %4235 = vst [vmem:[%s332 + $0x64] sm:$0xf] %v4171
      %4236 = vst [vmem:[%s332 + $0x68] sm:$0xf] %v4172
      %4237 = vst [vmem:[%s332 + $0x6c] sm:$0xf] %v4173
      %4238 = vst [vmem:[%s332 + $0x70] sm:$0xf] %v4174
      %4239 = vst [vmem:[%s332 + $0x74] sm:$0xf] %v4175
      %4240 = vst [vmem:[%s332 + $0x78] sm:$0xf] %v4176
      %4241 = vst [vmem:[%s332 + $0x7c] sm:$0xf] %v4177
      %p4242 = scmp.lt.s32.totalorder %s20, 1
      %s4243 = scalar_select %p4242, %s20, 1
      %s4244 = smul.addr %s4243, 32
      %s4245 = smul.addr %s4244, 4
      %s4246 = scalar_lea.vmem %s9, %s4245
      // Predicated region
      $region57: #{bottleneck_forward.1} parent=55 // pred_check
        %p4247 = pneg %p232
      $region58: #{bottleneck_forward.1} parent=55 // pred_check_branch
        %4249 = sbr.rel (%p4247) target = $region60
      $region59: #{bottleneck_forward.1} parent=55 // pred_region
        _
      $region60: #{bottleneck_forward.1} parent=55 // pred_fallthru
        _
    $region56: #{bottleneck_forward.1} parent=5 // pred_fallthru
      _
    %p4250 = scmp.le.s32.totalorder 2, %s15
    // Predicated region
    $region61: #{bottleneck_forward.1} parent=5 // pred_check
      %p4251 = pneg %p4250
    $region62: #{bottleneck_forward.1} parent=5 // pred_check_branch
      %4253 = sbr.rel (%p4251) target = $region64
    $region63: #{bottleneck_forward.1} parent=5 // pred_region
      %s4254 = ssub.s32 %s15, 2
      // Predicated region
      $region65: #{bottleneck_forward.1} parent=63 // pred_check
        %p4255 = pneg %p238
      $region66: #{bottleneck_forward.1} parent=63 // pred_check_branch
        %4257 = sbr.rel (%p4255) target = $region68
      $region67: #{bottleneck_forward.1} parent=63 // pred_region
        %p4258 = scmp.lt.s32.totalorder %s21, 1
        %s4259 = scalar_select %p4258, %s21, 1
        %s4260 = smul.addr %s4259, 32
        %s4261 = smul.addr %s4260, 4
        %s4262 = scalar_lea.vmem %s9, %s4261
      $region68: #{bottleneck_forward.1} parent=63 // pred_fallthru
        _
    $region64: #{bottleneck_forward.1} parent=5 // pred_fallthru
      _
  $region6: #{bottleneck_forward.1} parent=0 // loop_footer
    %s19 = sadd.s32 1, %s15
  $region7: #{bottleneck_forward.1} parent=0 // loop_footer_branch
    %14 = sbr.rel target = $region3
  $region8: #{bottleneck_forward.1} parent=0 // loop_exit
    _

</llo_original>
